<compile_context>
chip_gen: v6e
topology: v6e:2x2x1
jax: 0.10.0
libtpu: 0.0.40
codegen_flags: <defaults>
</compile_context>

<pallas_src>
import jax
import jax.numpy as jnp
from jax.experimental import pallas as pl
from jax.experimental.pallas import tpu as pltpu

# ---------------------------------------------------------------------------
# Model hyper-parameters (small, consistent with a tiny GPT-2 block stack).
# ---------------------------------------------------------------------------
NUM_LAYERS = 2
BATCH = 2
SEQ = 8
HIDDEN = 32
NUM_HEADS = 4
FFN = 4 * HIDDEN
EPS = 1e-5


# ---------------------------------------------------------------------------
# Small math helpers (used both in-kernel and in the pure-JAX reference).
# ---------------------------------------------------------------------------
def _gelu(x):
    # GPT-2 "new" tanh-approximate GELU (f32, EUP tanh).
    return 0.5 * x * (1.0 + jnp.tanh(0.7978845608028654 * (x + 0.044715 * x * x * x)))


def _layernorm(h, g, b):
    mu = jnp.mean(h, axis=-1, keepdims=True)
    var = jnp.mean((h - mu) ** 2, axis=-1, keepdims=True)
    return (h - mu) * jax.lax.rsqrt(var + EPS) * g + b


# ---------------------------------------------------------------------------
# Pallas kernel: one grid step == one batch element; all layers run inside.
# ---------------------------------------------------------------------------
def block_seq_kernel(x_ref, mask_ref,
                     ln1g_ref, ln1b_ref,
                     wqkv_ref, bqkv_ref,
                     wo_ref, bo_ref,
                     ln2g_ref, ln2b_ref,
                     wfc_ref, bfc_ref, wpr_ref, bpr_ref,
                     out_ref):
    L = wqkv_ref.shape[0]
    H3 = wqkv_ref.shape[1]          # 3 * num_heads (Q, K, V stacked head-major)
    H = H3 // 3
    S, D = x_ref.shape
    bf16 = jnp.bfloat16
    f32 = jnp.float32

    x = x_ref[...].astype(f32)      # (S, D) residual stream, f32
    mask = mask_ref[...]            # (S, S) additive causal bias (0 / -1e30)

    for l in range(L):              # L is tiny & static -> unrolled
        # ---- attention sublayer: x = x + Wo(MHA(LN1(x))) ----
        h = _layernorm(x, ln1g_ref[l], ln1b_ref[l])              # (S, D) f32
        hb = jnp.broadcast_to(h.astype(bf16), (H3, S, D))        # (3H, S, D) bf16

        # Single fused QKV projection (attention scale pre-folded into Q part).
        qkv = jnp.einsum('hnd,hdk->hnk', hb, wqkv_ref[l],
                         preferred_element_type=f32) + bqkv_ref[l]   # (3H, S, hd)
        q = qkv[0:H]                 # (H, S, hd)  -- static leading-axis slices
        k = qkv[H:2 * H]
        v = qkv[2 * H:3 * H]

        s = jnp.einsum('hqd,hkd->hqk', q.astype(bf16), k.astype(bf16),
                       preferred_element_type=f32) + mask            # (H, S, S)
        s = s - jnp.max(s, axis=-1, keepdims=True)
        p = jnp.exp(s)
        p = p * pl.reciprocal(jnp.sum(p, axis=-1, keepdims=True), approx=True)

        a = jnp.einsum('hqk,hkd->hqd', p.astype(bf16), v.astype(bf16),
                       preferred_element_type=f32)                   # (H, S, hd)
        o = jnp.einsum('hnd,hdk->hnk', a.astype(bf16), wo_ref[l],
                       preferred_element_type=f32)                   # (H, S, D)
        x = x + jnp.sum(o, axis=0) + bo_ref[l]                       # (S, D)

        # ---- MLP sublayer: x = x + W2(gelu(W1(LN2(x)))) ----
        h2 = _layernorm(x, ln2g_ref[l], ln2b_ref[l])
        m = jnp.dot(h2.astype(bf16), wfc_ref[l],
                    preferred_element_type=f32) + bfc_ref[l]         # (S, FFN)
        m = _gelu(m)
        x = x + jnp.dot(m.astype(bf16), wpr_ref[l],
                        preferred_element_type=f32) + bpr_ref[l]

    out_ref[...] = x.astype(out_ref.dtype)


# ---------------------------------------------------------------------------
# Wrapper: weight re-layout (head-major, fused QKV, bf16) + pallas_call setup.
# ---------------------------------------------------------------------------
def hf_block_sequence(x, params, num_heads=NUM_HEADS):
    B, S, D = x.shape
    H = num_heads
    hd = D // H
    L = params["w_q"].shape[0]
    f32, bf16 = jnp.float32, jnp.bfloat16
    scale = 1.0 / float(hd) ** 0.5

    # Head-major MXU operand layouts; fold the attention scale into Q weights
    # and bias so the kernel never multiplies the (H,S,S) score tensor.
    wq = params["w_q"].reshape(L, D, H, hd).transpose(0, 2, 1, 3) * scale  # (L,H,D,hd)
    wk = params["w_k"].reshape(L, D, H, hd).transpose(0, 2, 1, 3)
    wv = params["w_v"].reshape(L, D, H, hd).transpose(0, 2, 1, 3)
    wqkv = jnp.concatenate([wq, wk, wv], axis=1).astype(bf16)              # (L,3H,D,hd)

    bq = params["b_q"].reshape(L, H, hd)[:, :, None, :] * scale            # (L,H,1,hd)
    bk = params["b_k"].reshape(L, H, hd)[:, :, None, :]
    bv = params["b_v"].reshape(L, H, hd)[:, :, None, :]
    bqkv = jnp.concatenate([bq, bk, bv], axis=1).astype(f32)               # (L,3H,1,hd)

    wo = params["w_o"].reshape(L, H, hd, D).astype(bf16)                   # (L,H,hd,D)
    wfc = params["w_fc"].astype(bf16)                                      # (L,D,FFN)
    wpr = params["w_pr"].astype(bf16)                                      # (L,FFN,D)

    # Additive causal mask, built once outside the kernel.
    mask_bias = jnp.where(jnp.tril(jnp.ones((S, S), dtype=bool)),
                          0.0, -1e30).astype(f32)

    args = [mask_bias,
            params["ln1_g"], params["ln1_b"],
            wqkv, bqkv,
            wo, params["b_o"],
            params["ln2_g"], params["ln2_b"],
            wfc, params["b_fc"], wpr, params["b_pr"]]

    in_specs = [pl.BlockSpec((None, S, D), lambda b: (b, 0, 0))]   # per-batch x
    for a in args:   # whole-array, VMEM-resident, constant block index
        in_specs.append(pl.BlockSpec(a.shape, lambda b, _nd=a.ndim: (0,) * _nd))

    return pl.pallas_call(
        block_seq_kernel,
        out_shape=jax.ShapeDtypeStruct((B, S, D), x.dtype),
        grid=(B,),
        in_specs=in_specs,
        out_specs=pl.BlockSpec((None, S, D), lambda b: (b, 0, 0)),
        compiler_params=pltpu.CompilerParams(dimension_semantics=("parallel",)),
    )(x, *args)


# ---------------------------------------------------------------------------
# Deterministic parameter initialization (synthetic; no checkpoint loading).
# ---------------------------------------------------------------------------
def init_params(key, L=NUM_LAYERS, D=HIDDEN, FF=FFN):
    ks = jax.random.split(key, 16)

    def nrm(k, shape, scale=0.02):
        return (scale * jax.random.normal(k, shape)).astype(jnp.float32)

    return {
        "ln1_g": 1.0 + nrm(ks[0], (L, 1, D)),
        "ln1_b": nrm(ks[1], (L, 1, D)),
        "w_q": nrm(ks[2], (L, D, D)),
        "b_q": nrm(ks[3], (L, 1, D)),
        "w_k": nrm(ks[4], (L, D, D)),
        "b_k": nrm(ks[5], (L, 1, D)),
        "w_v": nrm(ks[6], (L, D, D)),
        "b_v": nrm(ks[7], (L, 1, D)),
        "w_o": nrm(ks[8], (L, D, D)),
        "b_o": nrm(ks[9], (L, 1, D)),
        "ln2_g": 1.0 + nrm(ks[10], (L, 1, D)),
        "ln2_b": nrm(ks[11], (L, 1, D)),
        "w_fc": nrm(ks[12], (L, D, FF)),
        "b_fc": nrm(ks[13], (L, 1, FF)),
        "w_pr": nrm(ks[14], (L, FF, D)),
        "b_pr": nrm(ks[15], (L, 1, D)),
    }


# ---------------------------------------------------------------------------
# Pure-JAX reference of the same stack (x = layer(x)[0] for each block).
# ---------------------------------------------------------------------------
def ref_forward(x, params, num_heads=NUM_HEADS):
    L = params["w_q"].shape[0]
    B, S, D = x.shape
    hd = D // num_heads
    x = x.astype(jnp.float32)
    mask = jnp.tril(jnp.ones((S, S), dtype=bool))
    for l in range(L):
        h = _layernorm(x, params["ln1_g"][l, 0], params["ln1_b"][l, 0])
        q = h @ params["w_q"][l] + params["b_q"][l, 0]
        k = h @ params["w_k"][l] + params["b_k"][l, 0]
        v = h @ params["w_v"][l] + params["b_v"][l, 0]
        q = q.reshape(B, S, num_heads, hd).transpose(0, 2, 1, 3)
        k = k.reshape(B, S, num_heads, hd).transpose(0, 2, 1, 3)
        v = v.reshape(B, S, num_heads, hd).transpose(0, 2, 1, 3)
        s = jnp.einsum("bhqd,bhkd->bhqk", q, k) * (1.0 / hd ** 0.5)
        s = jnp.where(mask, s, -1e30)
        s = s - jnp.max(s, axis=-1, keepdims=True)
        p = jnp.exp(s)
        p = p / jnp.sum(p, axis=-1, keepdims=True)
        a = jnp.einsum("bhqk,bhkd->bhqd", p, v).transpose(0, 2, 1, 3).reshape(B, S, D)
        x = x + a @ params["w_o"][l] + params["b_o"][l, 0]
        h2 = _layernorm(x, params["ln2_g"][l, 0], params["ln2_b"][l, 0])
        m = _gelu(h2 @ params["w_fc"][l] + params["b_fc"][l, 0])
        x = x + m @ params["w_pr"][l] + params["b_pr"][l, 0]
    return x


if __name__ == "__main__":
    key = jax.random.PRNGKey(0)
    kx, kp = jax.random.split(key)
    x = jax.random.normal(kx, (BATCH, SEQ, HIDDEN), dtype=jnp.float32)
    params = init_params(kp)

    out = jax.block_until_ready(hf_block_sequence(x, params))

    ref = ref_forward(x, params)
    assert out.shape == ref.shape and out.dtype == ref.dtype
    assert jnp.allclose(out, ref, atol=2e-2, rtol=2e-2), "kernel/reference mismatch"

    print("KERNEL_OK")
</pallas_src>

<mosaic_0001>
module attributes {stable_mosaic.version = 11 : i64} {
  func.func @block_seq_kernel(%arg0: i32, %arg1: memref<1x8x32xf32, #tpu.memory_space<vmem>>, %arg2: memref<8x8xf32, #tpu.memory_space<vmem>>, %arg3: memref<2x1x32xf32, #tpu.memory_space<vmem>>, %arg4: memref<2x1x32xf32, #tpu.memory_space<vmem>>, %arg5: memref<2x12x32x8xbf16, #tpu.memory_space<vmem>>, %arg6: memref<2x12x1x8xf32, #tpu.memory_space<vmem>>, %arg7: memref<2x4x8x32xbf16, #tpu.memory_space<vmem>>, %arg8: memref<2x1x32xf32, #tpu.memory_space<vmem>>, %arg9: memref<2x1x32xf32, #tpu.memory_space<vmem>>, %arg10: memref<2x1x32xf32, #tpu.memory_space<vmem>>, %arg11: memref<2x32x128xbf16, #tpu.memory_space<vmem>>, %arg12: memref<2x1x128xf32, #tpu.memory_space<vmem>>, %arg13: memref<2x128x32xbf16, #tpu.memory_space<vmem>>, %arg14: memref<2x1x32xf32, #tpu.memory_space<vmem>>, %arg15: memref<1x8x32xf32, #tpu.memory_space<vmem>>) attributes {dimension_semantics = [#tpu.dimension_semantics<parallel>], iteration_bounds = array<i64: 2>, scalar_prefetch = 0 : i64, scratch_operands = 0 : i64, tpu.core_type = #tpu.core_type<tc>, window_params = [{transform_indices = @transform_0, window_bounds = array<i64: 1, 8, 32>}, {pipeline_mode = #tpu.pipeline_mode<synchronous>, transform_indices = @transform_1, window_bounds = array<i64: 8, 8>}, {pipeline_mode = #tpu.pipeline_mode<synchronous>, transform_indices = @transform_2, window_bounds = array<i64: 2, 1, 32>}, {pipeline_mode = #tpu.pipeline_mode<synchronous>, transform_indices = @transform_3, window_bounds = array<i64: 2, 1, 32>}, {pipeline_mode = #tpu.pipeline_mode<synchronous>, transform_indices = @transform_4, window_bounds = array<i64: 2, 12, 32, 8>}, {pipeline_mode = #tpu.pipeline_mode<synchronous>, transform_indices = @transform_5, window_bounds = array<i64: 2, 12, 1, 8>}, {pipeline_mode = #tpu.pipeline_mode<synchronous>, transform_indices = @transform_6, window_bounds = array<i64: 2, 4, 8, 32>}, {pipeline_mode = #tpu.pipeline_mode<synchronous>, transform_indices = @transform_7, window_bounds = array<i64: 2, 1, 32>}, {pipeline_mode = #tpu.pipeline_mode<synchronous>, transform_indices = @transform_8, window_bounds = array<i64: 2, 1, 32>}, {pipeline_mode = #tpu.pipeline_mode<synchronous>, transform_indices = @transform_9, window_bounds = array<i64: 2, 1, 32>}, {pipeline_mode = #tpu.pipeline_mode<synchronous>, transform_indices = @transform_10, window_bounds = array<i64: 2, 32, 128>}, {pipeline_mode = #tpu.pipeline_mode<synchronous>, transform_indices = @transform_11, window_bounds = array<i64: 2, 1, 128>}, {pipeline_mode = #tpu.pipeline_mode<synchronous>, transform_indices = @transform_12, window_bounds = array<i64: 2, 128, 32>}, {pipeline_mode = #tpu.pipeline_mode<synchronous>, transform_indices = @transform_13, window_bounds = array<i64: 2, 1, 32>}, {transform_indices = @transform_14, window_bounds = array<i64: 1, 8, 32>}]} {
    %c0 = arith.constant 0 : index
    %c0_0 = arith.constant 0 : index
    %c0_1 = arith.constant 0 : index
    %0 = vector.load %arg1[%c0, %c0_0, %c0_1] : memref<1x8x32xf32, #tpu.memory_space<vmem>>, vector<1x8x32xf32>
    %1 = vector.shape_cast %0 : vector<1x8x32xf32> to vector<8x32xf32>
    %c0_2 = arith.constant 0 : index
    %c0_3 = arith.constant 0 : index
    %2 = vector.load %arg2[%c0_2, %c0_3] : memref<8x8xf32, #tpu.memory_space<vmem>>, vector<8x8xf32>
    %c0_4 = arith.constant 0 : index
    %c0_5 = arith.constant 0 : index
    %c0_6 = arith.constant 0 : index
    %3 = vector.load %arg3[%c0_4, %c0_5, %c0_6] : memref<2x1x32xf32, #tpu.memory_space<vmem>>, vector<1x1x32xf32>
    %4 = vector.shape_cast %3 : vector<1x1x32xf32> to vector<1x32xf32>
    %c0_7 = arith.constant 0 : index
    %c0_8 = arith.constant 0 : index
    %c0_9 = arith.constant 0 : index
    %5 = vector.load %arg4[%c0_7, %c0_8, %c0_9] : memref<2x1x32xf32, #tpu.memory_space<vmem>>, vector<1x1x32xf32>
    %6 = vector.shape_cast %5 : vector<1x1x32xf32> to vector<1x32xf32>
    %cst = arith.constant dense<0.000000e+00> : vector<8xf32>
    %7 = vector.multi_reduction <add>, %1, %cst [1] : vector<8x32xf32> to vector<8xf32>
    %8 = vector.shape_cast %7 : vector<8xf32> to vector<8x1xf32>
    %cst_10 = arith.constant 3.200000e+01 : f32
    %9 = vector.broadcast %cst_10 : f32 to vector<8x1xf32>
    %10 = arith.divf %8, %9 : vector<8x1xf32>
    %11 = vector.broadcast %10 : vector<8x1xf32> to vector<8x32xf32>
    %12 = arith.subf %1, %11 : vector<8x32xf32>
    %13 = arith.mulf %12, %12 : vector<8x32xf32>
    %cst_11 = arith.constant dense<0.000000e+00> : vector<8xf32>
    %14 = vector.multi_reduction <add>, %13, %cst_11 [1] : vector<8x32xf32> to vector<8xf32>
    %15 = vector.shape_cast %14 : vector<8xf32> to vector<8x1xf32>
    %cst_12 = arith.constant 3.200000e+01 : f32
    %16 = vector.broadcast %cst_12 : f32 to vector<8x1xf32>
    %17 = arith.divf %15, %16 : vector<8x1xf32>
    %18 = vector.broadcast %10 : vector<8x1xf32> to vector<8x32xf32>
    %19 = arith.subf %1, %18 : vector<8x32xf32>
    %cst_13 = arith.constant 9.99999974E-6 : f32
    %20 = vector.broadcast %cst_13 : f32 to vector<8x1xf32>
    %21 = arith.addf %17, %20 : vector<8x1xf32>
    %22 = math.rsqrt %21 : vector<8x1xf32>
    %23 = vector.broadcast %22 : vector<8x1xf32> to vector<8x32xf32>
    %24 = arith.mulf %19, %23 : vector<8x32xf32>
    %25 = vector.broadcast %4 : vector<1x32xf32> to vector<8x32xf32>
    %26 = arith.mulf %24, %25 : vector<8x32xf32>
    %27 = vector.broadcast %6 : vector<1x32xf32> to vector<8x32xf32>
    %28 = arith.addf %26, %27 : vector<8x32xf32>
    %29 = arith.truncf %28 : vector<8x32xf32> to vector<8x32xbf16>
    %30 = vector.shape_cast %29 : vector<8x32xbf16> to vector<1x8x32xbf16>
    %31 = vector.broadcast %30 : vector<1x8x32xbf16> to vector<12x8x32xbf16>
    %c0_14 = arith.constant 0 : index
    %c0_15 = arith.constant 0 : index
    %c0_16 = arith.constant 0 : index
    %c0_17 = arith.constant 0 : index
    %32 = vector.load %arg5[%c0_14, %c0_15, %c0_16, %c0_17] : memref<2x12x32x8xbf16, #tpu.memory_space<vmem>>, vector<1x12x32x8xbf16>
    %33 = vector.shape_cast %32 : vector<1x12x32x8xbf16> to vector<12x32x8xbf16>
    "tpu.trace_start"() <{level = 10 : i32, message = "hnd,hdk->hnk"}> : () -> ()
    %cst_18 = arith.constant dense<0.000000e+00> : vector<12x8x8xf32>
    %34 = tpu.matmul %31, %33, %cst_18 {dimension_numbers = #tpu.dot_dimension_numbers<[2], [1], [1], [2], [0, 0, 0, 1, 1, 2], [0], [0]>} : vector<12x8x32xbf16>, vector<12x32x8xbf16>, vector<12x8x8xf32> -> vector<12x8x8xf32>
    "tpu.trace_stop"() : () -> ()
    %c0_19 = arith.constant 0 : index
    %c0_20 = arith.constant 0 : index
    %c0_21 = arith.constant 0 : index
    %c0_22 = arith.constant 0 : index
    %35 = vector.load %arg6[%c0_19, %c0_20, %c0_21, %c0_22] : memref<2x12x1x8xf32, #tpu.memory_space<vmem>>, vector<1x12x1x8xf32>
    %36 = vector.shape_cast %35 : vector<1x12x1x8xf32> to vector<12x1x8xf32>
    %37 = vector.broadcast %36 : vector<12x1x8xf32> to vector<12x8x8xf32>
    %38 = arith.addf %34, %37 : vector<12x8x8xf32>
    %39 = vector.extract_strided_slice %38 {offsets = [0, 0, 0], sizes = [4, 8, 8], strides = [1, 1, 1]} : vector<12x8x8xf32> to vector<4x8x8xf32>
    %40 = vector.extract_strided_slice %38 {offsets = [4, 0, 0], sizes = [4, 8, 8], strides = [1, 1, 1]} : vector<12x8x8xf32> to vector<4x8x8xf32>
    %41 = vector.extract_strided_slice %38 {offsets = [8, 0, 0], sizes = [4, 8, 8], strides = [1, 1, 1]} : vector<12x8x8xf32> to vector<4x8x8xf32>
    %42 = arith.truncf %39 : vector<4x8x8xf32> to vector<4x8x8xbf16>
    %43 = arith.truncf %40 : vector<4x8x8xf32> to vector<4x8x8xbf16>
    "tpu.trace_start"() <{level = 10 : i32, message = "hqd,hkd->hqk"}> : () -> ()
    %cst_23 = arith.constant dense<0.000000e+00> : vector<4x8x8xf32>
    %44 = tpu.matmul %42, %43, %cst_23 {dimension_numbers = #tpu.dot_dimension_numbers<[2], [2], [1], [1], [0, 0, 0, 1, 1, 1], [0], [0]>} : vector<4x8x8xbf16>, vector<4x8x8xbf16>, vector<4x8x8xf32> -> vector<4x8x8xf32>
    "tpu.trace_stop"() : () -> ()
    %45 = vector.shape_cast %2 : vector<8x8xf32> to vector<1x8x8xf32>
    %46 = vector.broadcast %45 : vector<1x8x8xf32> to vector<4x8x8xf32>
    %47 = arith.addf %44, %46 : vector<4x8x8xf32>
    %cst_24 = arith.constant dense<0xFF800000> : vector<4x8xf32>
    %48 = vector.multi_reduction <maximumf>, %47, %cst_24 [2] : vector<4x8x8xf32> to vector<4x8xf32>
    %49 = vector.shape_cast %48 : vector<4x8xf32> to vector<4x8x1xf32>
    %50 = vector.broadcast %49 : vector<4x8x1xf32> to vector<4x8x8xf32>
    %51 = arith.subf %47, %50 : vector<4x8x8xf32>
    %52 = math.exp %51 : vector<4x8x8xf32>
    %cst_25 = arith.constant dense<0.000000e+00> : vector<4x8xf32>
    %53 = vector.multi_reduction <add>, %52, %cst_25 [2] : vector<4x8x8xf32> to vector<4x8xf32>
    %54 = vector.shape_cast %53 : vector<4x8xf32> to vector<4x8x1xf32>
    %55 = tpu.reciprocal %54 {approx = true} : vector<4x8x1xf32> -> vector<4x8x1xf32>
    %56 = vector.broadcast %55 : vector<4x8x1xf32> to vector<4x8x8xf32>
    %57 = arith.mulf %52, %56 : vector<4x8x8xf32>
    %58 = arith.truncf %57 : vector<4x8x8xf32> to vector<4x8x8xbf16>
    %59 = arith.truncf %41 : vector<4x8x8xf32> to vector<4x8x8xbf16>
    "tpu.trace_start"() <{level = 10 : i32, message = "hqk,hkd->hqd"}> : () -> ()
    %cst_26 = arith.constant dense<0.000000e+00> : vector<4x8x8xf32>
    %60 = tpu.matmul %58, %59, %cst_26 {dimension_numbers = #tpu.dot_dimension_numbers<[2], [1], [1], [2], [0, 0, 0, 1, 1, 2], [0], [0]>} : vector<4x8x8xbf16>, vector<4x8x8xbf16>, vector<4x8x8xf32> -> vector<4x8x8xf32>
    "tpu.trace_stop"() : () -> ()
    %61 = arith.truncf %60 : vector<4x8x8xf32> to vector<4x8x8xbf16>
    %c0_27 = arith.constant 0 : index
    %c0_28 = arith.constant 0 : index
    %c0_29 = arith.constant 0 : index
    %c0_30 = arith.constant 0 : index
    %62 = vector.load %arg7[%c0_27, %c0_28, %c0_29, %c0_30] : memref<2x4x8x32xbf16, #tpu.memory_space<vmem>>, vector<1x4x8x32xbf16>
    %63 = vector.shape_cast %62 : vector<1x4x8x32xbf16> to vector<4x8x32xbf16>
    "tpu.trace_start"() <{level = 10 : i32, message = "hnd,hdk->hnk"}> : () -> ()
    %cst_31 = arith.constant dense<0.000000e+00> : vector<4x8x32xf32>
    %64 = tpu.matmul %61, %63, %cst_31 {dimension_numbers = #tpu.dot_dimension_numbers<[2], [1], [1], [2], [0, 0, 0, 1, 1, 2], [0], [0]>} : vector<4x8x8xbf16>, vector<4x8x32xbf16>, vector<4x8x32xf32> -> vector<4x8x32xf32>
    "tpu.trace_stop"() : () -> ()
    %cst_32 = arith.constant dense<0.000000e+00> : vector<8x32xf32>
    %65 = vector.multi_reduction <add>, %64, %cst_32 [0] : vector<4x8x32xf32> to vector<8x32xf32>
    %66 = arith.addf %1, %65 : vector<8x32xf32>
    %c0_33 = arith.constant 0 : index
    %c0_34 = arith.constant 0 : index
    %c0_35 = arith.constant 0 : index
    %67 = vector.load %arg8[%c0_33, %c0_34, %c0_35] : memref<2x1x32xf32, #tpu.memory_space<vmem>>, vector<1x1x32xf32>
    %68 = vector.shape_cast %67 : vector<1x1x32xf32> to vector<1x32xf32>
    %69 = vector.broadcast %68 : vector<1x32xf32> to vector<8x32xf32>
    %70 = arith.addf %66, %69 : vector<8x32xf32>
    %c0_36 = arith.constant 0 : index
    %c0_37 = arith.constant 0 : index
    %c0_38 = arith.constant 0 : index
    %71 = vector.load %arg9[%c0_36, %c0_37, %c0_38] : memref<2x1x32xf32, #tpu.memory_space<vmem>>, vector<1x1x32xf32>
    %72 = vector.shape_cast %71 : vector<1x1x32xf32> to vector<1x32xf32>
    %c0_39 = arith.constant 0 : index
    %c0_40 = arith.constant 0 : index
    %c0_41 = arith.constant 0 : index
    %73 = vector.load %arg10[%c0_39, %c0_40, %c0_41] : memref<2x1x32xf32, #tpu.memory_space<vmem>>, vector<1x1x32xf32>
    %74 = vector.shape_cast %73 : vector<1x1x32xf32> to vector<1x32xf32>
    %cst_42 = arith.constant dense<0.000000e+00> : vector<8xf32>
    %75 = vector.multi_reduction <add>, %70, %cst_42 [1] : vector<8x32xf32> to vector<8xf32>
    %76 = vector.shape_cast %75 : vector<8xf32> to vector<8x1xf32>
    %cst_43 = arith.constant 3.200000e+01 : f32
    %77 = vector.broadcast %cst_43 : f32 to vector<8x1xf32>
    %78 = arith.divf %76, %77 : vector<8x1xf32>
    %79 = vector.broadcast %78 : vector<8x1xf32> to vector<8x32xf32>
    %80 = arith.subf %70, %79 : vector<8x32xf32>
    %81 = arith.mulf %80, %80 : vector<8x32xf32>
    %cst_44 = arith.constant dense<0.000000e+00> : vector<8xf32>
    %82 = vector.multi_reduction <add>, %81, %cst_44 [1] : vector<8x32xf32> to vector<8xf32>
    %83 = vector.shape_cast %82 : vector<8xf32> to vector<8x1xf32>
    %cst_45 = arith.constant 3.200000e+01 : f32
    %84 = vector.broadcast %cst_45 : f32 to vector<8x1xf32>
    %85 = arith.divf %83, %84 : vector<8x1xf32>
    %86 = vector.broadcast %78 : vector<8x1xf32> to vector<8x32xf32>
    %87 = arith.subf %70, %86 : vector<8x32xf32>
    %cst_46 = arith.constant 9.99999974E-6 : f32
    %88 = vector.broadcast %cst_46 : f32 to vector<8x1xf32>
    %89 = arith.addf %85, %88 : vector<8x1xf32>
    %90 = math.rsqrt %89 : vector<8x1xf32>
    %91 = vector.broadcast %90 : vector<8x1xf32> to vector<8x32xf32>
    %92 = arith.mulf %87, %91 : vector<8x32xf32>
    %93 = vector.broadcast %72 : vector<1x32xf32> to vector<8x32xf32>
    %94 = arith.mulf %92, %93 : vector<8x32xf32>
    %95 = vector.broadcast %74 : vector<1x32xf32> to vector<8x32xf32>
    %96 = arith.addf %94, %95 : vector<8x32xf32>
    %97 = arith.truncf %96 : vector<8x32xf32> to vector<8x32xbf16>
    %c0_47 = arith.constant 0 : index
    %c0_48 = arith.constant 0 : index
    %c0_49 = arith.constant 0 : index
    %98 = vector.load %arg11[%c0_47, %c0_48, %c0_49] : memref<2x32x128xbf16, #tpu.memory_space<vmem>>, vector<1x32x128xbf16>
    %99 = vector.shape_cast %98 : vector<1x32x128xbf16> to vector<32x128xbf16>
    %cst_50 = arith.constant dense<0.000000e+00> : vector<8x128xf32>
    %100 = tpu.matmul %97, %99, %cst_50 {dimension_numbers = #tpu.dot_dimension_numbers<[1], [0], [0], [1], [0, 0, 1, 1], [], []>} : vector<8x32xbf16>, vector<32x128xbf16>, vector<8x128xf32> -> vector<8x128xf32>
    %c0_51 = arith.constant 0 : index
    %c0_52 = arith.constant 0 : index
    %c0_53 = arith.constant 0 : index
    %101 = vector.load %arg12[%c0_51, %c0_52, %c0_53] : memref<2x1x128xf32, #tpu.memory_space<vmem>>, vector<1x1x128xf32>
    %102 = vector.shape_cast %101 : vector<1x1x128xf32> to vector<1x128xf32>
    %103 = vector.broadcast %102 : vector<1x128xf32> to vector<8x128xf32>
    %104 = arith.addf %100, %103 : vector<8x128xf32>
    %cst_54 = arith.constant 5.000000e-01 : f32
    %105 = vector.broadcast %cst_54 : f32 to vector<8x128xf32>
    %106 = arith.mulf %105, %104 : vector<8x128xf32>
    %cst_55 = arith.constant 4.471500e-02 : f32
    %107 = vector.broadcast %cst_55 : f32 to vector<8x128xf32>
    %108 = arith.mulf %107, %104 : vector<8x128xf32>
    %109 = arith.mulf %108, %104 : vector<8x128xf32>
    %110 = arith.mulf %109, %104 : vector<8x128xf32>
    %111 = arith.addf %104, %110 : vector<8x128xf32>
    %cst_56 = arith.constant 0.797884583 : f32
    %112 = vector.broadcast %cst_56 : f32 to vector<8x128xf32>
    %113 = arith.mulf %112, %111 : vector<8x128xf32>
    %114 = math.tanh %113 : vector<8x128xf32>
    %cst_57 = arith.constant 1.000000e+00 : f32
    %115 = vector.broadcast %cst_57 : f32 to vector<8x128xf32>
    %116 = arith.addf %115, %114 : vector<8x128xf32>
    %117 = arith.mulf %106, %116 : vector<8x128xf32>
    %118 = arith.truncf %117 : vector<8x128xf32> to vector<8x128xbf16>
    %c0_58 = arith.constant 0 : index
    %c0_59 = arith.constant 0 : index
    %c0_60 = arith.constant 0 : index
    %119 = vector.load %arg13[%c0_58, %c0_59, %c0_60] : memref<2x128x32xbf16, #tpu.memory_space<vmem>>, vector<1x128x32xbf16>
    %120 = vector.shape_cast %119 : vector<1x128x32xbf16> to vector<128x32xbf16>
    %cst_61 = arith.constant dense<0.000000e+00> : vector<8x32xf32>
    %121 = tpu.matmul %118, %120, %cst_61 {dimension_numbers = #tpu.dot_dimension_numbers<[1], [0], [0], [1], [0, 0, 1, 1], [], []>} : vector<8x128xbf16>, vector<128x32xbf16>, vector<8x32xf32> -> vector<8x32xf32>
    %122 = arith.addf %70, %121 : vector<8x32xf32>
    %c0_62 = arith.constant 0 : index
    %c0_63 = arith.constant 0 : index
    %c0_64 = arith.constant 0 : index
    %123 = vector.load %arg14[%c0_62, %c0_63, %c0_64] : memref<2x1x32xf32, #tpu.memory_space<vmem>>, vector<1x1x32xf32>
    %124 = vector.shape_cast %123 : vector<1x1x32xf32> to vector<1x32xf32>
    %125 = vector.broadcast %124 : vector<1x32xf32> to vector<8x32xf32>
    %126 = arith.addf %122, %125 : vector<8x32xf32>
    %c1 = arith.constant 1 : index
    %c0_65 = arith.constant 0 : index
    %c0_66 = arith.constant 0 : index
    %127 = vector.load %arg3[%c1, %c0_65, %c0_66] : memref<2x1x32xf32, #tpu.memory_space<vmem>>, vector<1x1x32xf32>
    %128 = vector.shape_cast %127 : vector<1x1x32xf32> to vector<1x32xf32>
    %c1_67 = arith.constant 1 : index
    %c0_68 = arith.constant 0 : index
    %c0_69 = arith.constant 0 : index
    %129 = vector.load %arg4[%c1_67, %c0_68, %c0_69] : memref<2x1x32xf32, #tpu.memory_space<vmem>>, vector<1x1x32xf32>
    %130 = vector.shape_cast %129 : vector<1x1x32xf32> to vector<1x32xf32>
    %cst_70 = arith.constant dense<0.000000e+00> : vector<8xf32>
    %131 = vector.multi_reduction <add>, %126, %cst_70 [1] : vector<8x32xf32> to vector<8xf32>
    %132 = vector.shape_cast %131 : vector<8xf32> to vector<8x1xf32>
    %cst_71 = arith.constant 3.200000e+01 : f32
    %133 = vector.broadcast %cst_71 : f32 to vector<8x1xf32>
    %134 = arith.divf %132, %133 : vector<8x1xf32>
    %135 = vector.broadcast %134 : vector<8x1xf32> to vector<8x32xf32>
    %136 = arith.subf %126, %135 : vector<8x32xf32>
    %137 = arith.mulf %136, %136 : vector<8x32xf32>
    %cst_72 = arith.constant dense<0.000000e+00> : vector<8xf32>
    %138 = vector.multi_reduction <add>, %137, %cst_72 [1] : vector<8x32xf32> to vector<8xf32>
    %139 = vector.shape_cast %138 : vector<8xf32> to vector<8x1xf32>
    %cst_73 = arith.constant 3.200000e+01 : f32
    %140 = vector.broadcast %cst_73 : f32 to vector<8x1xf32>
    %141 = arith.divf %139, %140 : vector<8x1xf32>
    %142 = vector.broadcast %134 : vector<8x1xf32> to vector<8x32xf32>
    %143 = arith.subf %126, %142 : vector<8x32xf32>
    %cst_74 = arith.constant 9.99999974E-6 : f32
    %144 = vector.broadcast %cst_74 : f32 to vector<8x1xf32>
    %145 = arith.addf %141, %144 : vector<8x1xf32>
    %146 = math.rsqrt %145 : vector<8x1xf32>
    %147 = vector.broadcast %146 : vector<8x1xf32> to vector<8x32xf32>
    %148 = arith.mulf %143, %147 : vector<8x32xf32>
    %149 = vector.broadcast %128 : vector<1x32xf32> to vector<8x32xf32>
    %150 = arith.mulf %148, %149 : vector<8x32xf32>
    %151 = vector.broadcast %130 : vector<1x32xf32> to vector<8x32xf32>
    %152 = arith.addf %150, %151 : vector<8x32xf32>
    %153 = arith.truncf %152 : vector<8x32xf32> to vector<8x32xbf16>
    %154 = vector.shape_cast %153 : vector<8x32xbf16> to vector<1x8x32xbf16>
    %155 = vector.broadcast %154 : vector<1x8x32xbf16> to vector<12x8x32xbf16>
    %c1_75 = arith.constant 1 : index
    %c0_76 = arith.constant 0 : index
    %c0_77 = arith.constant 0 : index
    %c0_78 = arith.constant 0 : index
    %156 = vector.load %arg5[%c1_75, %c0_76, %c0_77, %c0_78] : memref<2x12x32x8xbf16, #tpu.memory_space<vmem>>, vector<1x12x32x8xbf16>
    %157 = vector.shape_cast %156 : vector<1x12x32x8xbf16> to vector<12x32x8xbf16>
    "tpu.trace_start"() <{level = 10 : i32, message = "hnd,hdk->hnk"}> : () -> ()
    %cst_79 = arith.constant dense<0.000000e+00> : vector<12x8x8xf32>
    %158 = tpu.matmul %155, %157, %cst_79 {dimension_numbers = #tpu.dot_dimension_numbers<[2], [1], [1], [2], [0, 0, 0, 1, 1, 2], [0], [0]>} : vector<12x8x32xbf16>, vector<12x32x8xbf16>, vector<12x8x8xf32> -> vector<12x8x8xf32>
    "tpu.trace_stop"() : () -> ()
    %c1_80 = arith.constant 1 : index
    %c0_81 = arith.constant 0 : index
    %c0_82 = arith.constant 0 : index
    %c0_83 = arith.constant 0 : index
    %159 = vector.load %arg6[%c1_80, %c0_81, %c0_82, %c0_83] : memref<2x12x1x8xf32, #tpu.memory_space<vmem>>, vector<1x12x1x8xf32>
    %160 = vector.shape_cast %159 : vector<1x12x1x8xf32> to vector<12x1x8xf32>
    %161 = vector.broadcast %160 : vector<12x1x8xf32> to vector<12x8x8xf32>
    %162 = arith.addf %158, %161 : vector<12x8x8xf32>
    %163 = vector.extract_strided_slice %162 {offsets = [0, 0, 0], sizes = [4, 8, 8], strides = [1, 1, 1]} : vector<12x8x8xf32> to vector<4x8x8xf32>
    %164 = vector.extract_strided_slice %162 {offsets = [4, 0, 0], sizes = [4, 8, 8], strides = [1, 1, 1]} : vector<12x8x8xf32> to vector<4x8x8xf32>
    %165 = vector.extract_strided_slice %162 {offsets = [8, 0, 0], sizes = [4, 8, 8], strides = [1, 1, 1]} : vector<12x8x8xf32> to vector<4x8x8xf32>
    %166 = arith.truncf %163 : vector<4x8x8xf32> to vector<4x8x8xbf16>
    %167 = arith.truncf %164 : vector<4x8x8xf32> to vector<4x8x8xbf16>
    "tpu.trace_start"() <{level = 10 : i32, message = "hqd,hkd->hqk"}> : () -> ()
    %cst_84 = arith.constant dense<0.000000e+00> : vector<4x8x8xf32>
    %168 = tpu.matmul %166, %167, %cst_84 {dimension_numbers = #tpu.dot_dimension_numbers<[2], [2], [1], [1], [0, 0, 0, 1, 1, 1], [0], [0]>} : vector<4x8x8xbf16>, vector<4x8x8xbf16>, vector<4x8x8xf32> -> vector<4x8x8xf32>
    "tpu.trace_stop"() : () -> ()
    %169 = vector.shape_cast %2 : vector<8x8xf32> to vector<1x8x8xf32>
    %170 = vector.broadcast %169 : vector<1x8x8xf32> to vector<4x8x8xf32>
    %171 = arith.addf %168, %170 : vector<4x8x8xf32>
    %cst_85 = arith.constant dense<0xFF800000> : vector<4x8xf32>
    %172 = vector.multi_reduction <maximumf>, %171, %cst_85 [2] : vector<4x8x8xf32> to vector<4x8xf32>
    %173 = vector.shape_cast %172 : vector<4x8xf32> to vector<4x8x1xf32>
    %174 = vector.broadcast %173 : vector<4x8x1xf32> to vector<4x8x8xf32>
    %175 = arith.subf %171, %174 : vector<4x8x8xf32>
    %176 = math.exp %175 : vector<4x8x8xf32>
    %cst_86 = arith.constant dense<0.000000e+00> : vector<4x8xf32>
    %177 = vector.multi_reduction <add>, %176, %cst_86 [2] : vector<4x8x8xf32> to vector<4x8xf32>
    %178 = vector.shape_cast %177 : vector<4x8xf32> to vector<4x8x1xf32>
    %179 = tpu.reciprocal %178 {approx = true} : vector<4x8x1xf32> -> vector<4x8x1xf32>
    %180 = vector.broadcast %179 : vector<4x8x1xf32> to vector<4x8x8xf32>
    %181 = arith.mulf %176, %180 : vector<4x8x8xf32>
    %182 = arith.truncf %181 : vector<4x8x8xf32> to vector<4x8x8xbf16>
    %183 = arith.truncf %165 : vector<4x8x8xf32> to vector<4x8x8xbf16>
    "tpu.trace_start"() <{level = 10 : i32, message = "hqk,hkd->hqd"}> : () -> ()
    %cst_87 = arith.constant dense<0.000000e+00> : vector<4x8x8xf32>
    %184 = tpu.matmul %182, %183, %cst_87 {dimension_numbers = #tpu.dot_dimension_numbers<[2], [1], [1], [2], [0, 0, 0, 1, 1, 2], [0], [0]>} : vector<4x8x8xbf16>, vector<4x8x8xbf16>, vector<4x8x8xf32> -> vector<4x8x8xf32>
    "tpu.trace_stop"() : () -> ()
    %185 = arith.truncf %184 : vector<4x8x8xf32> to vector<4x8x8xbf16>
    %c1_88 = arith.constant 1 : index
    %c0_89 = arith.constant 0 : index
    %c0_90 = arith.constant 0 : index
    %c0_91 = arith.constant 0 : index
    %186 = vector.load %arg7[%c1_88, %c0_89, %c0_90, %c0_91] : memref<2x4x8x32xbf16, #tpu.memory_space<vmem>>, vector<1x4x8x32xbf16>
    %187 = vector.shape_cast %186 : vector<1x4x8x32xbf16> to vector<4x8x32xbf16>
    "tpu.trace_start"() <{level = 10 : i32, message = "hnd,hdk->hnk"}> : () -> ()
    %cst_92 = arith.constant dense<0.000000e+00> : vector<4x8x32xf32>
    %188 = tpu.matmul %185, %187, %cst_92 {dimension_numbers = #tpu.dot_dimension_numbers<[2], [1], [1], [2], [0, 0, 0, 1, 1, 2], [0], [0]>} : vector<4x8x8xbf16>, vector<4x8x32xbf16>, vector<4x8x32xf32> -> vector<4x8x32xf32>
    "tpu.trace_stop"() : () -> ()
    %cst_93 = arith.constant dense<0.000000e+00> : vector<8x32xf32>
    %189 = vector.multi_reduction <add>, %188, %cst_93 [0] : vector<4x8x32xf32> to vector<8x32xf32>
    %190 = arith.addf %126, %189 : vector<8x32xf32>
    %c1_94 = arith.constant 1 : index
    %c0_95 = arith.constant 0 : index
    %c0_96 = arith.constant 0 : index
    %191 = vector.load %arg8[%c1_94, %c0_95, %c0_96] : memref<2x1x32xf32, #tpu.memory_space<vmem>>, vector<1x1x32xf32>
    %192 = vector.shape_cast %191 : vector<1x1x32xf32> to vector<1x32xf32>
    %193 = vector.broadcast %192 : vector<1x32xf32> to vector<8x32xf32>
    %194 = arith.addf %190, %193 : vector<8x32xf32>
    %c1_97 = arith.constant 1 : index
    %c0_98 = arith.constant 0 : index
    %c0_99 = arith.constant 0 : index
    %195 = vector.load %arg9[%c1_97, %c0_98, %c0_99] : memref<2x1x32xf32, #tpu.memory_space<vmem>>, vector<1x1x32xf32>
    %196 = vector.shape_cast %195 : vector<1x1x32xf32> to vector<1x32xf32>
    %c1_100 = arith.constant 1 : index
    %c0_101 = arith.constant 0 : index
    %c0_102 = arith.constant 0 : index
    %197 = vector.load %arg10[%c1_100, %c0_101, %c0_102] : memref<2x1x32xf32, #tpu.memory_space<vmem>>, vector<1x1x32xf32>
    %198 = vector.shape_cast %197 : vector<1x1x32xf32> to vector<1x32xf32>
    %cst_103 = arith.constant dense<0.000000e+00> : vector<8xf32>
    %199 = vector.multi_reduction <add>, %194, %cst_103 [1] : vector<8x32xf32> to vector<8xf32>
    %200 = vector.shape_cast %199 : vector<8xf32> to vector<8x1xf32>
    %cst_104 = arith.constant 3.200000e+01 : f32
    %201 = vector.broadcast %cst_104 : f32 to vector<8x1xf32>
    %202 = arith.divf %200, %201 : vector<8x1xf32>
    %203 = vector.broadcast %202 : vector<8x1xf32> to vector<8x32xf32>
    %204 = arith.subf %194, %203 : vector<8x32xf32>
    %205 = arith.mulf %204, %204 : vector<8x32xf32>
    %cst_105 = arith.constant dense<0.000000e+00> : vector<8xf32>
    %206 = vector.multi_reduction <add>, %205, %cst_105 [1] : vector<8x32xf32> to vector<8xf32>
    %207 = vector.shape_cast %206 : vector<8xf32> to vector<8x1xf32>
    %cst_106 = arith.constant 3.200000e+01 : f32
    %208 = vector.broadcast %cst_106 : f32 to vector<8x1xf32>
    %209 = arith.divf %207, %208 : vector<8x1xf32>
    %210 = vector.broadcast %202 : vector<8x1xf32> to vector<8x32xf32>
    %211 = arith.subf %194, %210 : vector<8x32xf32>
    %cst_107 = arith.constant 9.99999974E-6 : f32
    %212 = vector.broadcast %cst_107 : f32 to vector<8x1xf32>
    %213 = arith.addf %209, %212 : vector<8x1xf32>
    %214 = math.rsqrt %213 : vector<8x1xf32>
    %215 = vector.broadcast %214 : vector<8x1xf32> to vector<8x32xf32>
    %216 = arith.mulf %211, %215 : vector<8x32xf32>
    %217 = vector.broadcast %196 : vector<1x32xf32> to vector<8x32xf32>
    %218 = arith.mulf %216, %217 : vector<8x32xf32>
    %219 = vector.broadcast %198 : vector<1x32xf32> to vector<8x32xf32>
    %220 = arith.addf %218, %219 : vector<8x32xf32>
    %221 = arith.truncf %220 : vector<8x32xf32> to vector<8x32xbf16>
    %c1_108 = arith.constant 1 : index
    %c0_109 = arith.constant 0 : index
    %c0_110 = arith.constant 0 : index
    %222 = vector.load %arg11[%c1_108, %c0_109, %c0_110] : memref<2x32x128xbf16, #tpu.memory_space<vmem>>, vector<1x32x128xbf16>
    %223 = vector.shape_cast %222 : vector<1x32x128xbf16> to vector<32x128xbf16>
    %cst_111 = arith.constant dense<0.000000e+00> : vector<8x128xf32>
    %224 = tpu.matmul %221, %223, %cst_111 {dimension_numbers = #tpu.dot_dimension_numbers<[1], [0], [0], [1], [0, 0, 1, 1], [], []>} : vector<8x32xbf16>, vector<32x128xbf16>, vector<8x128xf32> -> vector<8x128xf32>
    %c1_112 = arith.constant 1 : index
    %c0_113 = arith.constant 0 : index
    %c0_114 = arith.constant 0 : index
    %225 = vector.load %arg12[%c1_112, %c0_113, %c0_114] : memref<2x1x128xf32, #tpu.memory_space<vmem>>, vector<1x1x128xf32>
    %226 = vector.shape_cast %225 : vector<1x1x128xf32> to vector<1x128xf32>
    %227 = vector.broadcast %226 : vector<1x128xf32> to vector<8x128xf32>
    %228 = arith.addf %224, %227 : vector<8x128xf32>
    %cst_115 = arith.constant 5.000000e-01 : f32
    %229 = vector.broadcast %cst_115 : f32 to vector<8x128xf32>
    %230 = arith.mulf %229, %228 : vector<8x128xf32>
    %cst_116 = arith.constant 4.471500e-02 : f32
    %231 = vector.broadcast %cst_116 : f32 to vector<8x128xf32>
    %232 = arith.mulf %231, %228 : vector<8x128xf32>
    %233 = arith.mulf %232, %228 : vector<8x128xf32>
    %234 = arith.mulf %233, %228 : vector<8x128xf32>
    %235 = arith.addf %228, %234 : vector<8x128xf32>
    %cst_117 = arith.constant 0.797884583 : f32
    %236 = vector.broadcast %cst_117 : f32 to vector<8x128xf32>
    %237 = arith.mulf %236, %235 : vector<8x128xf32>
    %238 = math.tanh %237 : vector<8x128xf32>
    %cst_118 = arith.constant 1.000000e+00 : f32
    %239 = vector.broadcast %cst_118 : f32 to vector<8x128xf32>
    %240 = arith.addf %239, %238 : vector<8x128xf32>
    %241 = arith.mulf %230, %240 : vector<8x128xf32>
    %242 = arith.truncf %241 : vector<8x128xf32> to vector<8x128xbf16>
    %c1_119 = arith.constant 1 : index
    %c0_120 = arith.constant 0 : index
    %c0_121 = arith.constant 0 : index
    %243 = vector.load %arg13[%c1_119, %c0_120, %c0_121] : memref<2x128x32xbf16, #tpu.memory_space<vmem>>, vector<1x128x32xbf16>
    %244 = vector.shape_cast %243 : vector<1x128x32xbf16> to vector<128x32xbf16>
    %cst_122 = arith.constant dense<0.000000e+00> : vector<8x32xf32>
    %245 = tpu.matmul %242, %244, %cst_122 {dimension_numbers = #tpu.dot_dimension_numbers<[1], [0], [0], [1], [0, 0, 1, 1], [], []>} : vector<8x128xbf16>, vector<128x32xbf16>, vector<8x32xf32> -> vector<8x32xf32>
    %246 = arith.addf %194, %245 : vector<8x32xf32>
    %c1_123 = arith.constant 1 : index
    %c0_124 = arith.constant 0 : index
    %c0_125 = arith.constant 0 : index
    %247 = vector.load %arg14[%c1_123, %c0_124, %c0_125] : memref<2x1x32xf32, #tpu.memory_space<vmem>>, vector<1x1x32xf32>
    %248 = vector.shape_cast %247 : vector<1x1x32xf32> to vector<1x32xf32>
    %249 = vector.broadcast %248 : vector<1x32xf32> to vector<8x32xf32>
    %250 = arith.addf %246, %249 : vector<8x32xf32>
    %c0_126 = arith.constant 0 : index
    %c0_127 = arith.constant 0 : index
    %c0_128 = arith.constant 0 : index
    %251 = vector.load %arg15[%c0_126, %c0_127, %c0_128] : memref<1x8x32xf32, #tpu.memory_space<vmem>>, vector<1x8x32xf32>
    %252 = vector.shape_cast %251 : vector<1x8x32xf32> to vector<8x32xf32>
    %253 = vector.shape_cast %250 : vector<8x32xf32> to vector<1x8x32xf32>
    tpu.vector_store %arg15[%c0_126, %c0_127, %c0_128], %253 {strides = array<i32>} : memref<1x8x32xf32, #tpu.memory_space<vmem>>, vector<1x8x32xf32>,
    return
  }
  func.func @transform_0(%arg0: i32) -> (i32, i32, i32) {
    %c0_i32 = arith.constant 0 : i32
    %c0_i32_0 = arith.constant 0 : i32
    %c0_i32_1 = arith.constant 0 : i32
    return %arg0, %c0_i32, %c0_i32_0 : i32, i32, i32
  }
  func.func @transform_1(%arg0: i32) -> (i32, i32) {
    %c0_i32 = arith.constant 0 : i32
    %c0_i32_0 = arith.constant 0 : i32
    %c0_i32_1 = arith.constant 0 : i32
    return %c0_i32, %c0_i32_0 : i32, i32
  }
  func.func @transform_2(%arg0: i32) -> (i32, i32, i32) {
    %c0_i32 = arith.constant 0 : i32
    %c0_i32_0 = arith.constant 0 : i32
    %c0_i32_1 = arith.constant 0 : i32
    %c0_i32_2 = arith.constant 0 : i32
    return %c0_i32, %c0_i32_0, %c0_i32_1 : i32, i32, i32
  }
  func.func @transform_3(%arg0: i32) -> (i32, i32, i32) {
    %c0_i32 = arith.constant 0 : i32
    %c0_i32_0 = arith.constant 0 : i32
    %c0_i32_1 = arith.constant 0 : i32
    %c0_i32_2 = arith.constant 0 : i32
    return %c0_i32, %c0_i32_0, %c0_i32_1 : i32, i32, i32
  }
  func.func @transform_4(%arg0: i32) -> (i32, i32, i32, i32) {
    %c0_i32 = arith.constant 0 : i32
    %c0_i32_0 = arith.constant 0 : i32
    %c0_i32_1 = arith.constant 0 : i32
    %c0_i32_2 = arith.constant 0 : i32
    %c0_i32_3 = arith.constant 0 : i32
    return %c0_i32, %c0_i32_0, %c0_i32_1, %c0_i32_2 : i32, i32, i32, i32
  }
  func.func @transform_5(%arg0: i32) -> (i32, i32, i32, i32) {
    %c0_i32 = arith.constant 0 : i32
    %c0_i32_0 = arith.constant 0 : i32
    %c0_i32_1 = arith.constant 0 : i32
    %c0_i32_2 = arith.constant 0 : i32
    %c0_i32_3 = arith.constant 0 : i32
    return %c0_i32, %c0_i32_0, %c0_i32_1, %c0_i32_2 : i32, i32, i32, i32
  }
  func.func @transform_6(%arg0: i32) -> (i32, i32, i32, i32) {
    %c0_i32 = arith.constant 0 : i32
    %c0_i32_0 = arith.constant 0 : i32
    %c0_i32_1 = arith.constant 0 : i32
    %c0_i32_2 = arith.constant 0 : i32
    %c0_i32_3 = arith.constant 0 : i32
    return %c0_i32, %c0_i32_0, %c0_i32_1, %c0_i32_2 : i32, i32, i32, i32
  }
  func.func @transform_7(%arg0: i32) -> (i32, i32, i32) {
    %c0_i32 = arith.constant 0 : i32
    %c0_i32_0 = arith.constant 0 : i32
    %c0_i32_1 = arith.constant 0 : i32
    %c0_i32_2 = arith.constant 0 : i32
    return %c0_i32, %c0_i32_0, %c0_i32_1 : i32, i32, i32
  }
  func.func @transform_8(%arg0: i32) -> (i32, i32, i32) {
    %c0_i32 = arith.constant 0 : i32
    %c0_i32_0 = arith.constant 0 : i32
    %c0_i32_1 = arith.constant 0 : i32
    %c0_i32_2 = arith.constant 0 : i32
    return %c0_i32, %c0_i32_0, %c0_i32_1 : i32, i32, i32
  }
  func.func @transform_9(%arg0: i32) -> (i32, i32, i32) {
    %c0_i32 = arith.constant 0 : i32
    %c0_i32_0 = arith.constant 0 : i32
    %c0_i32_1 = arith.constant 0 : i32
    %c0_i32_2 = arith.constant 0 : i32
    return %c0_i32, %c0_i32_0, %c0_i32_1 : i32, i32, i32
  }
  func.func @transform_10(%arg0: i32) -> (i32, i32, i32) {
    %c0_i32 = arith.constant 0 : i32
    %c0_i32_0 = arith.constant 0 : i32
    %c0_i32_1 = arith.constant 0 : i32
    %c0_i32_2 = arith.constant 0 : i32
    return %c0_i32, %c0_i32_0, %c0_i32_1 : i32, i32, i32
  }
  func.func @transform_11(%arg0: i32) -> (i32, i32, i32) {
    %c0_i32 = arith.constant 0 : i32
    %c0_i32_0 = arith.constant 0 : i32
    %c0_i32_1 = arith.constant 0 : i32
    %c0_i32_2 = arith.constant 0 : i32
    return %c0_i32, %c0_i32_0, %c0_i32_1 : i32, i32, i32
  }
  func.func @transform_12(%arg0: i32) -> (i32, i32, i32) {
    %c0_i32 = arith.constant 0 : i32
    %c0_i32_0 = arith.constant 0 : i32
    %c0_i32_1 = arith.constant 0 : i32
    %c0_i32_2 = arith.constant 0 : i32
    return %c0_i32, %c0_i32_0, %c0_i32_1 : i32, i32, i32
  }
  func.func @transform_13(%arg0: i32) -> (i32, i32, i32) {
    %c0_i32 = arith.constant 0 : i32
    %c0_i32_0 = arith.constant 0 : i32
    %c0_i32_1 = arith.constant 0 : i32
    %c0_i32_2 = arith.constant 0 : i32
    return %c0_i32, %c0_i32_0, %c0_i32_1 : i32, i32, i32
  }
  func.func @transform_14(%arg0: i32) -> (i32, i32, i32) {
    %c0_i32 = arith.constant 0 : i32
    %c0_i32_0 = arith.constant 0 : i32
    %c0_i32_1 = arith.constant 0 : i32
    return %arg0, %c0_i32, %c0_i32_0 : i32, i32, i32
  }
}

</mosaic_0001>

<llo_original>
// kernel: tpu_custom_call.1
$region0: #{tpu_custom_call.1}
  #allocation0 [shape = 'u32[]', space=smem, size = 0x4, offset = 0x4, fixed_abs, tag = 'smem constant byte address 0x4 - core index']
  #allocation1 [shape = 'u32[144,128]{1,0:T(1,128)}', space=vmem, size = 0x12000, scoped, tag = 'internal scratch']
  %s0 = inlined_call_operand.vmem [shape: f32[2,8,32], index: 0, kind: input, shape index: {}]
  %s1 = inlined_call_operand.vmem [shape: f32[8,8], index: 1, kind: input, shape index: {}]
  %s2 = inlined_call_operand.vmem [shape: f32[2,1,32], index: 2, kind: input, shape index: {}]
  %s3 = inlined_call_operand.vmem [shape: f32[2,1,32], index: 3, kind: input, shape index: {}]
  %s4 = inlined_call_operand.vmem [shape: bf16[2,12,32,8], index: 4, kind: input, shape index: {}]
  %s5 = inlined_call_operand.vmem [shape: f32[2,12,1,8], index: 5, kind: input, shape index: {}]
  %s6 = inlined_call_operand.vmem [shape: bf16[2,4,8,32], index: 6, kind: input, shape index: {}]
  %s7 = inlined_call_operand.vmem [shape: f32[2,1,32], index: 7, kind: input, shape index: {}]
  %s8 = inlined_call_operand.vmem [shape: f32[2,1,32], index: 8, kind: input, shape index: {}]
  %s9 = inlined_call_operand.vmem [shape: f32[2,1,32], index: 9, kind: input, shape index: {}]
  %s10 = inlined_call_operand.vmem [shape: bf16[2,32,128], index: 10, kind: input, shape index: {}]
  %s11 = inlined_call_operand.vmem [shape: f32[2,1,128], index: 11, kind: input, shape index: {}]
  %s12 = inlined_call_operand.vmem [shape: bf16[2,128,32], index: 12, kind: input, shape index: {}]
  %s13 = inlined_call_operand.vmem [shape: f32[2,1,32], index: 13, kind: input, shape index: {}]
  %s14 = inlined_call_operand.hbm [shape: f32[2,8,32], index: 14, kind: output, shape index: {}]
  %s15 = sld [smem:[#allocation0]]
  $region89: #{tpu_custom_call.1} parent=0
    _
  %s17 = ssub.s32 1, %s15
  %s18 = scalar_select 0, %s17, %s15
  $region1: #{tpu_custom_call.1} parent=0
    #allocation2 [shape = 'u8[8192]{0}', space=vmem, size = 0x2000, scoped, tag = 'output window, operand 0']
    #allocation3 [shape = 's32[2]{0}', space=sflag, size = 0x8, scoped, tag = 'scoped memory for tpu_custom_call.1']
    %19 = vsyncpa [#allocation3], 0
    %s20 = scalar_lea.sflag [#allocation3], 1
    %21 = vsyncpa %s20, 0
    loop: start=0, step=1, limit=4
    $region2: #{tpu_custom_call.1} parent=1 // loop_pre_header
      _
    $region3: #{tpu_custom_call.1} parent=1 // loop_header
      %s23 = sphi 0, %s27
      %p24 = scmp.ge.s32.totalorder %s23, 4
      %s33 = sphi 0, %s35
      %s36 = sphi 0, %s33
      %s37 = sphi 0, %s36
      %s53 = sphi 0, %s37
      %s57 = sphi 0, %s57
      %s59 = sphi 0, %s57
      %s60 = sphi 0, %s59
      %s74 = sphi 0, %s60
      %s78 = sphi 0, %s78
      %s80 = sphi 0, %s78
      %s81 = sphi 0, %s80
      %s95 = sphi 0, %s81
      %s99 = sphi 0, %s99
      %s101 = sphi 0, %s99
      %s102 = sphi 0, %s101
      %s116 = sphi 0, %s102
      %s120 = sphi 0, %s120
      %s122 = sphi 0, %s120
      %s123 = sphi 0, %s122
      %s137 = sphi 0, %s123
      %s141 = sphi 0, %s141
      %s143 = sphi 0, %s141
      %s144 = sphi 0, %s143
      %s158 = sphi 0, %s144
      %s162 = sphi 0, %s162
      %s164 = sphi 0, %s162
      %s165 = sphi 0, %s164
      %s179 = sphi 0, %s165
      %s183 = sphi 0, %s183
      %s185 = sphi 0, %s183
      %s186 = sphi 0, %s185
      %s200 = sphi 0, %s186
      %s204 = sphi 0, %s204
      %s206 = sphi 0, %s204
      %s207 = sphi 0, %s206
      %s221 = sphi 0, %s207
      %s225 = sphi 0, %s225
      %s227 = sphi 0, %s225
      %s228 = sphi 0, %s227
      %s242 = sphi 0, %s228
      %s246 = sphi 0, %s246
      %s248 = sphi 0, %s246
      %s249 = sphi 0, %s248
      %s263 = sphi 0, %s249
      %s267 = sphi 0, %s267
      %s269 = sphi 0, %s267
      %s270 = sphi 0, %s269
      %s284 = sphi 0, %s270
      %s288 = sphi 0, %s288
      %s290 = sphi 0, %s288
      %s291 = sphi 0, %s290
      %s305 = sphi 0, %s291
      %s309 = sphi 0, %s309
      %s311 = sphi 0, %s309
      %s312 = sphi 0, %s311
      %s326 = sphi 0, %s312
      %s332 = sphi 0, %s334
      %s335 = sphi 0, %s332
      %s336 = sphi 0, %s335
      %s352 = sphi 0, %s336
    $region4: #{tpu_custom_call.1} parent=1 // loop_header_branch
      %26 = sbr.rel (%p24) target = $region8
    $region5: #{tpu_custom_call.1} parent=1 // loop_body
      %s28 = ssub.s32 %s23, 1
      %s29 = ssub.s32 %s23, 2
      %s30 = sadd.s32 %s23, 1
      %s31 = ssub.s32 %s23, %s30
      %p32 = scmp.eq.s32.totalorder %s31, 0
      %s34 = sadd.s32 %s33, 1
      %s35 = scalar_select %p32, %s33, %s34
      %p38 = pneg %p32
      %p39 = scmp.eq.s32.totalorder %s23, 1
      %p40 = por %p38, %p39
      %p41 = scmp.ne.s32.totalorder %s33, %s36
      %p42 = scmp.eq.s32.totalorder %s23, 0
      %p43 = por %p41, %p42
      %p44 = scmp.ne.s32.totalorder %s33, %s36
      %p45 = scmp.eq.s32.totalorder %s28, 1
      %p46 = por %p44, %p45
      %p47 = scmp.ne.s32.totalorder %s36, %s37
      %p48 = scmp.eq.s32.totalorder %s28, 0
      %p49 = por %p47, %p48
      %p50 = scmp.ne.s32.totalorder %s36, %s37
      %p51 = scmp.eq.s32.totalorder %s29, 1
      %p52 = por %p50, %p51
      %p54 = scmp.ne.s32.totalorder %s37, %s53
      %p55 = scmp.eq.s32.totalorder %s29, 0
      %p56 = por %p54, %p55
      %s58 = sadd.s32 %s57, 1
      %p61 = scmp.eq.s32.totalorder %s23, 1
      %p62 = scmp.ne.s32.totalorder %s57, %s59
      %p63 = scmp.eq.s32.totalorder %s23, 0
      %p64 = por %p62, %p63
      %p65 = scmp.ne.s32.totalorder %s57, %s59
      %p66 = scmp.eq.s32.totalorder %s28, 1
      %p67 = por %p65, %p66
      %p68 = scmp.ne.s32.totalorder %s59, %s60
      %p69 = scmp.eq.s32.totalorder %s28, 0
      %p70 = por %p68, %p69
      %p71 = scmp.ne.s32.totalorder %s59, %s60
      %p72 = scmp.eq.s32.totalorder %s29, 1
      %p73 = por %p71, %p72
      %p75 = scmp.ne.s32.totalorder %s60, %s74
      %p76 = scmp.eq.s32.totalorder %s29, 0
      %p77 = por %p75, %p76
      %s79 = sadd.s32 %s78, 1
      %p82 = scmp.eq.s32.totalorder %s23, 1
      %p83 = scmp.ne.s32.totalorder %s78, %s80
      %p84 = scmp.eq.s32.totalorder %s23, 0
      %p85 = por %p83, %p84
      %p86 = scmp.ne.s32.totalorder %s78, %s80
      %p87 = scmp.eq.s32.totalorder %s28, 1
      %p88 = por %p86, %p87
      %p89 = scmp.ne.s32.totalorder %s80, %s81
      %p90 = scmp.eq.s32.totalorder %s28, 0
      %p91 = por %p89, %p90
      %p92 = scmp.ne.s32.totalorder %s80, %s81
      %p93 = scmp.eq.s32.totalorder %s29, 1
      %p94 = por %p92, %p93
      %p96 = scmp.ne.s32.totalorder %s81, %s95
      %p97 = scmp.eq.s32.totalorder %s29, 0
      %p98 = por %p96, %p97
      %s100 = sadd.s32 %s99, 1
      %p103 = scmp.eq.s32.totalorder %s23, 1
      %p104 = scmp.ne.s32.totalorder %s99, %s101
      %p105 = scmp.eq.s32.totalorder %s23, 0
      %p106 = por %p104, %p105
      %p107 = scmp.ne.s32.totalorder %s99, %s101
      %p108 = scmp.eq.s32.totalorder %s28, 1
      %p109 = por %p107, %p108
      %p110 = scmp.ne.s32.totalorder %s101, %s102
      %p111 = scmp.eq.s32.totalorder %s28, 0
      %p112 = por %p110, %p111
      %p113 = scmp.ne.s32.totalorder %s101, %s102
      %p114 = scmp.eq.s32.totalorder %s29, 1
      %p115 = por %p113, %p114
      %p117 = scmp.ne.s32.totalorder %s102, %s116
      %p118 = scmp.eq.s32.totalorder %s29, 0
      %p119 = por %p117, %p118
      %s121 = sadd.s32 %s120, 1
      %p124 = scmp.eq.s32.totalorder %s23, 1
      %p125 = scmp.ne.s32.totalorder %s120, %s122
      %p126 = scmp.eq.s32.totalorder %s23, 0
      %p127 = por %p125, %p126
      %p128 = scmp.ne.s32.totalorder %s120, %s122
      %p129 = scmp.eq.s32.totalorder %s28, 1
      %p130 = por %p128, %p129
      %p131 = scmp.ne.s32.totalorder %s122, %s123
      %p132 = scmp.eq.s32.totalorder %s28, 0
      %p133 = por %p131, %p132
      %p134 = scmp.ne.s32.totalorder %s122, %s123
      %p135 = scmp.eq.s32.totalorder %s29, 1
      %p136 = por %p134, %p135
      %p138 = scmp.ne.s32.totalorder %s123, %s137
      %p139 = scmp.eq.s32.totalorder %s29, 0
      %p140 = por %p138, %p139
      %s142 = sadd.s32 %s141, 1
      %p145 = scmp.eq.s32.totalorder %s23, 1
      %p146 = scmp.ne.s32.totalorder %s141, %s143
      %p147 = scmp.eq.s32.totalorder %s23, 0
      %p148 = por %p146, %p147
      %p149 = scmp.ne.s32.totalorder %s141, %s143
      %p150 = scmp.eq.s32.totalorder %s28, 1
      %p151 = por %p149, %p150
      %p152 = scmp.ne.s32.totalorder %s143, %s144
      %p153 = scmp.eq.s32.totalorder %s28, 0
      %p154 = por %p152, %p153
      %p155 = scmp.ne.s32.totalorder %s143, %s144
      %p156 = scmp.eq.s32.totalorder %s29, 1
      %p157 = por %p155, %p156
      %p159 = scmp.ne.s32.totalorder %s144, %s158
      %p160 = scmp.eq.s32.totalorder %s29, 0
      %p161 = por %p159, %p160
      %s163 = sadd.s32 %s162, 1
      %p166 = scmp.eq.s32.totalorder %s23, 1
      %p167 = scmp.ne.s32.totalorder %s162, %s164
      %p168 = scmp.eq.s32.totalorder %s23, 0
      %p169 = por %p167, %p168
      %p170 = scmp.ne.s32.totalorder %s162, %s164
      %p171 = scmp.eq.s32.totalorder %s28, 1
      %p172 = por %p170, %p171
      %p173 = scmp.ne.s32.totalorder %s164, %s165
      %p174 = scmp.eq.s32.totalorder %s28, 0
      %p175 = por %p173, %p174
      %p176 = scmp.ne.s32.totalorder %s164, %s165
      %p177 = scmp.eq.s32.totalorder %s29, 1
      %p178 = por %p176, %p177
      %p180 = scmp.ne.s32.totalorder %s165, %s179
      %p181 = scmp.eq.s32.totalorder %s29, 0
      %p182 = por %p180, %p181
      %s184 = sadd.s32 %s183, 1
      %p187 = scmp.eq.s32.totalorder %s23, 1
      %p188 = scmp.ne.s32.totalorder %s183, %s185
      %p189 = scmp.eq.s32.totalorder %s23, 0
      %p190 = por %p188, %p189
      %p191 = scmp.ne.s32.totalorder %s183, %s185
      %p192 = scmp.eq.s32.totalorder %s28, 1
      %p193 = por %p191, %p192
      %p194 = scmp.ne.s32.totalorder %s185, %s186
      %p195 = scmp.eq.s32.totalorder %s28, 0
      %p196 = por %p194, %p195
      %p197 = scmp.ne.s32.totalorder %s185, %s186
      %p198 = scmp.eq.s32.totalorder %s29, 1
      %p199 = por %p197, %p198
      %p201 = scmp.ne.s32.totalorder %s186, %s200
      %p202 = scmp.eq.s32.totalorder %s29, 0
      %p203 = por %p201, %p202
      %s205 = sadd.s32 %s204, 1
      %p208 = scmp.eq.s32.totalorder %s23, 1
      %p209 = scmp.ne.s32.totalorder %s204, %s206
      %p210 = scmp.eq.s32.totalorder %s23, 0
      %p211 = por %p209, %p210
      %p212 = scmp.ne.s32.totalorder %s204, %s206
      %p213 = scmp.eq.s32.totalorder %s28, 1
      %p214 = por %p212, %p213
      %p215 = scmp.ne.s32.totalorder %s206, %s207
      %p216 = scmp.eq.s32.totalorder %s28, 0
      %p217 = por %p215, %p216
      %p218 = scmp.ne.s32.totalorder %s206, %s207
      %p219 = scmp.eq.s32.totalorder %s29, 1
      %p220 = por %p218, %p219
      %p222 = scmp.ne.s32.totalorder %s207, %s221
      %p223 = scmp.eq.s32.totalorder %s29, 0
      %p224 = por %p222, %p223
      %s226 = sadd.s32 %s225, 1
      %p229 = scmp.eq.s32.totalorder %s23, 1
      %p230 = scmp.ne.s32.totalorder %s225, %s227
      %p231 = scmp.eq.s32.totalorder %s23, 0
      %p232 = por %p230, %p231
      %p233 = scmp.ne.s32.totalorder %s225, %s227
      %p234 = scmp.eq.s32.totalorder %s28, 1
      %p235 = por %p233, %p234
      %p236 = scmp.ne.s32.totalorder %s227, %s228
      %p237 = scmp.eq.s32.totalorder %s28, 0
      %p238 = por %p236, %p237
      %p239 = scmp.ne.s32.totalorder %s227, %s228
      %p240 = scmp.eq.s32.totalorder %s29, 1
      %p241 = por %p239, %p240
      %p243 = scmp.ne.s32.totalorder %s228, %s242
      %p244 = scmp.eq.s32.totalorder %s29, 0
      %p245 = por %p243, %p244
      %s247 = sadd.s32 %s246, 1
      %p250 = scmp.eq.s32.totalorder %s23, 1
      %p251 = scmp.ne.s32.totalorder %s246, %s248
      %p252 = scmp.eq.s32.totalorder %s23, 0
      %p253 = por %p251, %p252
      %p254 = scmp.ne.s32.totalorder %s246, %s248
      %p255 = scmp.eq.s32.totalorder %s28, 1
      %p256 = por %p254, %p255
      %p257 = scmp.ne.s32.totalorder %s248, %s249
      %p258 = scmp.eq.s32.totalorder %s28, 0
      %p259 = por %p257, %p258
      %p260 = scmp.ne.s32.totalorder %s248, %s249
      %p261 = scmp.eq.s32.totalorder %s29, 1
      %p262 = por %p260, %p261
      %p264 = scmp.ne.s32.totalorder %s249, %s263
      %p265 = scmp.eq.s32.totalorder %s29, 0
      %p266 = por %p264, %p265
      %s268 = sadd.s32 %s267, 1
      %p271 = scmp.eq.s32.totalorder %s23, 1
      %p272 = scmp.ne.s32.totalorder %s267, %s269
      %p273 = scmp.eq.s32.totalorder %s23, 0
      %p274 = por %p272, %p273
      %p275 = scmp.ne.s32.totalorder %s267, %s269
      %p276 = scmp.eq.s32.totalorder %s28, 1
      %p277 = por %p275, %p276
      %p278 = scmp.ne.s32.totalorder %s269, %s270
      %p279 = scmp.eq.s32.totalorder %s28, 0
      %p280 = por %p278, %p279
      %p281 = scmp.ne.s32.totalorder %s269, %s270
      %p282 = scmp.eq.s32.totalorder %s29, 1
      %p283 = por %p281, %p282
      %p285 = scmp.ne.s32.totalorder %s270, %s284
      %p286 = scmp.eq.s32.totalorder %s29, 0
      %p287 = por %p285, %p286
      %s289 = sadd.s32 %s288, 1
      %p292 = scmp.eq.s32.totalorder %s23, 1
      %p293 = scmp.ne.s32.totalorder %s288, %s290
      %p294 = scmp.eq.s32.totalorder %s23, 0
      %p295 = por %p293, %p294
      %p296 = scmp.ne.s32.totalorder %s288, %s290
      %p297 = scmp.eq.s32.totalorder %s28, 1
      %p298 = por %p296, %p297
      %p299 = scmp.ne.s32.totalorder %s290, %s291
      %p300 = scmp.eq.s32.totalorder %s28, 0
      %p301 = por %p299, %p300
      %p302 = scmp.ne.s32.totalorder %s290, %s291
      %p303 = scmp.eq.s32.totalorder %s29, 1
      %p304 = por %p302, %p303
      %p306 = scmp.ne.s32.totalorder %s291, %s305
      %p307 = scmp.eq.s32.totalorder %s29, 0
      %p308 = por %p306, %p307
      %s310 = sadd.s32 %s309, 1
      %p313 = scmp.eq.s32.totalorder %s23, 1
      %p314 = scmp.ne.s32.totalorder %s309, %s311
      %p315 = scmp.eq.s32.totalorder %s23, 0
      %p316 = por %p314, %p315
      %p317 = scmp.ne.s32.totalorder %s309, %s311
      %p318 = scmp.eq.s32.totalorder %s28, 1
      %p319 = por %p317, %p318
      %p320 = scmp.ne.s32.totalorder %s311, %s312
      %p321 = scmp.eq.s32.totalorder %s28, 0
      %p322 = por %p320, %p321
      %p323 = scmp.ne.s32.totalorder %s311, %s312
      %p324 = scmp.eq.s32.totalorder %s29, 1
      %p325 = por %p323, %p324
      %p327 = scmp.ne.s32.totalorder %s312, %s326
      %p328 = scmp.eq.s32.totalorder %s29, 0
      %p329 = por %p327, %p328
      %s330 = ssub.s32 %s23, %s30
      %p331 = scmp.eq.s32.totalorder %s330, 0
      %s333 = sadd.s32 %s332, 1
      %s334 = scalar_select %p331, %s332, %s333
      %p337 = pneg %p331
      %p338 = scmp.eq.s32.totalorder %s23, 1
      %p339 = por %p337, %p338
      %p340 = scmp.ne.s32.totalorder %s332, %s335
      %p341 = scmp.eq.s32.totalorder %s23, 0
      %p342 = por %p340, %p341
      %p343 = scmp.ne.s32.totalorder %s332, %s335
      %p344 = scmp.eq.s32.totalorder %s28, 1
      %p345 = por %p343, %p344
      %p346 = scmp.ne.s32.totalorder %s335, %s336
      %p347 = scmp.eq.s32.totalorder %s28, 0
      %p348 = por %p346, %p347
      %p349 = scmp.ne.s32.totalorder %s335, %s336
      %p350 = scmp.eq.s32.totalorder %s29, 1
      %p351 = por %p349, %p350
      %p353 = scmp.ne.s32.totalorder %s336, %s352
      %p354 = scmp.eq.s32.totalorder %s29, 0
      %p355 = por %p353, %p354
      %p356 = scmp.le.s32.totalorder 1, %s23
      %p357 = scmp.lt.s32.totalorder %s23, 3
      %p358 = pnand %p356, %p357
      %p359 = pneg %p358
      // Predicated region
      $region9: #{tpu_custom_call.1} parent=5 // pred_check
        _
      $region10: #{tpu_custom_call.1} parent=5 // pred_check_branch
        %361 = sbr.rel (%p358) target = $region12
      $region11: #{tpu_custom_call.1} parent=5 // pred_region
        %s362 = ssub.s32 %s23, 1
        // Predicated region
        $region13: #{tpu_custom_call.1} parent=11 // pred_check
          %p363 = pneg %p70
        $region14: #{tpu_custom_call.1} parent=11 // pred_check_branch
          %365 = sbr.rel (%p363) target = $region16
        $region15: #{tpu_custom_call.1} parent=11 // pred_region
          _
        $region16: #{tpu_custom_call.1} parent=11 // pred_fallthru
          _
        // Predicated region
        $region17: #{tpu_custom_call.1} parent=11 // pred_check
          %p366 = pneg %p91
        $region18: #{tpu_custom_call.1} parent=11 // pred_check_branch
          %368 = sbr.rel (%p366) target = $region20
        $region19: #{tpu_custom_call.1} parent=11 // pred_region
          _
        $region20: #{tpu_custom_call.1} parent=11 // pred_fallthru
          _
        // Predicated region
        $region21: #{tpu_custom_call.1} parent=11 // pred_check
          %p369 = pneg %p112
        $region22: #{tpu_custom_call.1} parent=11 // pred_check_branch
          %371 = sbr.rel (%p369) target = $region24
        $region23: #{tpu_custom_call.1} parent=11 // pred_region
          _
        $region24: #{tpu_custom_call.1} parent=11 // pred_fallthru
          _
        // Predicated region
        $region25: #{tpu_custom_call.1} parent=11 // pred_check
          %p372 = pneg %p133
        $region26: #{tpu_custom_call.1} parent=11 // pred_check_branch
          %374 = sbr.rel (%p372) target = $region28
        $region27: #{tpu_custom_call.1} parent=11 // pred_region
          _
        $region28: #{tpu_custom_call.1} parent=11 // pred_fallthru
          _
        // Predicated region
        $region29: #{tpu_custom_call.1} parent=11 // pred_check
          %p375 = pneg %p154
        $region30: #{tpu_custom_call.1} parent=11 // pred_check_branch
          %377 = sbr.rel (%p375) target = $region32
        $region31: #{tpu_custom_call.1} parent=11 // pred_region
          _
        $region32: #{tpu_custom_call.1} parent=11 // pred_fallthru
          _
        // Predicated region
        $region33: #{tpu_custom_call.1} parent=11 // pred_check
          %p378 = pneg %p175
        $region34: #{tpu_custom_call.1} parent=11 // pred_check_branch
          %380 = sbr.rel (%p378) target = $region36
        $region35: #{tpu_custom_call.1} parent=11 // pred_region
          _
        $region36: #{tpu_custom_call.1} parent=11 // pred_fallthru
          _
        // Predicated region
        $region37: #{tpu_custom_call.1} parent=11 // pred_check
          %p381 = pneg %p196
        $region38: #{tpu_custom_call.1} parent=11 // pred_check_branch
          %383 = sbr.rel (%p381) target = $region40
        $region39: #{tpu_custom_call.1} parent=11 // pred_region
          _
        $region40: #{tpu_custom_call.1} parent=11 // pred_fallthru
          _
        // Predicated region
        $region41: #{tpu_custom_call.1} parent=11 // pred_check
          %p384 = pneg %p217
        $region42: #{tpu_custom_call.1} parent=11 // pred_check_branch
          %386 = sbr.rel (%p384) target = $region44
        $region43: #{tpu_custom_call.1} parent=11 // pred_region
          _
        $region44: #{tpu_custom_call.1} parent=11 // pred_fallthru
          _
        // Predicated region
        $region45: #{tpu_custom_call.1} parent=11 // pred_check
          %p387 = pneg %p238
        $region46: #{tpu_custom_call.1} parent=11 // pred_check_branch
          %389 = sbr.rel (%p387) target = $region48
        $region47: #{tpu_custom_call.1} parent=11 // pred_region
          _
        $region48: #{tpu_custom_call.1} parent=11 // pred_fallthru
          _
        // Predicated region
        $region49: #{tpu_custom_call.1} parent=11 // pred_check
          %p390 = pneg %p259
        $region50: #{tpu_custom_call.1} parent=11 // pred_check_branch
          %392 = sbr.rel (%p390) target = $region52
        $region51: #{tpu_custom_call.1} parent=11 // pred_region
          _
        $region52: #{tpu_custom_call.1} parent=11 // pred_fallthru
          _
        // Predicated region
        $region53: #{tpu_custom_call.1} parent=11 // pred_check
          %p393 = pneg %p280
        $region54: #{tpu_custom_call.1} parent=11 // pred_check_branch
          %395 = sbr.rel (%p393) target = $region56
        $region55: #{tpu_custom_call.1} parent=11 // pred_region
          _
        $region56: #{tpu_custom_call.1} parent=11 // pred_fallthru
          _
        // Predicated region
        $region57: #{tpu_custom_call.1} parent=11 // pred_check
          %p396 = pneg %p301
        $region58: #{tpu_custom_call.1} parent=11 // pred_check_branch
          %398 = sbr.rel (%p396) target = $region60
        $region59: #{tpu_custom_call.1} parent=11 // pred_region
          _
        $region60: #{tpu_custom_call.1} parent=11 // pred_fallthru
          _
        // Predicated region
        $region61: #{tpu_custom_call.1} parent=11 // pred_check
          %p399 = pneg %p322
        $region62: #{tpu_custom_call.1} parent=11 // pred_check_branch
          %401 = sbr.rel (%p399) target = $region64
        $region63: #{tpu_custom_call.1} parent=11 // pred_region
          _
        $region64: #{tpu_custom_call.1} parent=11 // pred_fallthru
          _
      $region12: #{tpu_custom_call.1} parent=5 // pred_fallthru
        _
      %p402 = scmp.lt.s32.totalorder %s23, 2
      // Predicated region
      $region65: #{tpu_custom_call.1} parent=5 // pred_check
        %p403 = pneg %p402
      $region66: #{tpu_custom_call.1} parent=5 // pred_check_branch
        %405 = sbr.rel (%p403) target = $region68
      $region67: #{tpu_custom_call.1} parent=5 // pred_region
        // Predicated region
        $region69: #{tpu_custom_call.1} parent=67 // pred_check
          %p406 = pneg %p43
        $region70: #{tpu_custom_call.1} parent=67 // pred_check_branch
          %408 = sbr.rel (%p406) target = $region72
        $region71: #{tpu_custom_call.1} parent=67 // pred_region
          %p409 = scmp.lt.s32.totalorder %s23, 1
          %s410 = scalar_select %p409, %s23, 1
          %s411 = smul.addr %s410, 8
          %s412 = scalar_lea.vmem %s0, %s411
        $region72: #{tpu_custom_call.1} parent=67 // pred_fallthru
          _
      $region68: #{tpu_custom_call.1} parent=5 // pred_fallthru
        _
      %p413 = scmp.le.s32.totalorder 1, %s23
      %p414 = scmp.lt.s32.totalorder %s23, 3
      %p415 = pnand %p413, %p414
      %p416 = pneg %p415
      // Predicated region
      $region73: #{tpu_custom_call.1} parent=5 // pred_check
        _
      $region74: #{tpu_custom_call.1} parent=5 // pred_check_branch
        %418 = sbr.rel (%p415) target = $region76
      $region75: #{tpu_custom_call.1} parent=5 // pred_region
        %s419 = ssub.s32 %s23, 1
        %p420 = scmp.lt.s32.totalorder %s28, 1
        %s421 = scalar_select %p420, %s28, 1
        %s422 = smul.addr %s421, 8
        %s423 = scalar_lea.vmem %s0, %s422
        %p424 = pneg %p49
        %p425 = pneg %p46
        %p426 = pneg %p70
        %p427 = pneg %p67
        %p428 = pneg %p91
        %p429 = pneg %p88
        %p430 = pneg %p112
        %p431 = pneg %p109
        %p432 = pneg %p133
        %p433 = pneg %p130
        %p434 = pneg %p154
        %p435 = pneg %p151
        %p436 = pneg %p175
        %p437 = pneg %p172
        %p438 = pneg %p196
        %p439 = pneg %p193
        %p440 = pneg %p217
        %p441 = pneg %p214
        %p442 = pneg %p238
        %p443 = pneg %p235
        %p444 = pneg %p259
        %p445 = pneg %p256
        %p446 = pneg %p280
        %p447 = pneg %p277
        %p448 = pneg %p301
        %p449 = pneg %p298
        %p450 = pneg %p322
        %p451 = pneg %p319
        %p452 = pneg %p348
        %p453 = pneg %p345
        %s454 = sand.u32 %s335, 1
        %s455 = scalar_lea.sflag [#allocation3], %s454
        %s456 = sand.u32 %s335, 1
        %s457 = smul.addr %s456, 8
        %s458 = scalar_lea.vmem [#allocation2], %s457
        %p459 = scmp.lt.s32.totalorder %s28, 1
        %s460 = scalar_select %p459, %s28, 1
        %s461 = smul.addr %s460, 8
        %s462 = scalar_lea.vmem %s0, %s461
        %v464 = vld [vmem:[%s462] sm:$0xff]
        %v465 = vld [vmem:[%s1] sm:$0xff]
        %v466 = vld [vmem:[%s2] sm:$0x1]
        %v467 = vld [vmem:[%s3] sm:$0x1]
        %vm468 = vcmask 261120
        %v469 = vsel %vm468, %v464, 0.0
        %470 = vadd.xlane.f32.xlu0 %v469
        %v471 = vpop.xlane.xlu0 %470
        %v472 = vrcp.pop 32.0
        %v473 = vmul.f32 %v471, %v472
        %v474 = vsub.f32 %v464, %v473
        %v475 = vmul.f32 %v474, %v474
        %v476 = vsel %vm468, %v475, 0.0
        %477 = vadd.xlane.f32.xlu0 %v476
        %v478 = vpop.xlane.xlu0 %477
        %v479 = vmul.f32 %v478, %v472
        %v480 = vadd.f32 %v479, 1e-05
        %v481 = vrsqrt.pop %v480
        %v482 = vmul.f32 %v474, %v481
        %v484 = vlaneseq
        %v485 = vshrl.u32 %v484, 7
        %v486 = vsub.s32 0, %v485
        %v487 = vrot.slane %v466, %v486
        %v489 = vmul.f32 %v482, %v487
        %v491 = vlaneseq
        %v492 = vshrl.u32 %v491, 7
        %v493 = vsub.s32 0, %v492
        %v494 = vrot.slane %v467, %v493
        %v496 = vadd.f32 %v489, %v494
        %v497 = vpack.c.bf16 %v496, %v496
        %v498 = vld [vmem:[%s4] sm:$0xf]
        %v499 = vld [vmem:[%s4 + $0x4] sm:$0xf]
        %v500 = vld [vmem:[%s4 + $0x8] sm:$0xf]
        %v501 = vld [vmem:[%s4 + $0xc] sm:$0xf]
        %v502 = vld [vmem:[%s4 + $0x10] sm:$0xf]
        %v503 = vld [vmem:[%s4 + $0x14] sm:$0xf]
        %v504 = vld [vmem:[%s4 + $0x18] sm:$0xf]
        %v505 = vld [vmem:[%s4 + $0x1c] sm:$0xf]
        %v506 = vld [vmem:[%s4 + $0x20] sm:$0xf]
        %v507 = vld [vmem:[%s4 + $0x24] sm:$0xf]
        %v508 = vld [vmem:[%s4 + $0x28] sm:$0xf]
        %v509 = vld [vmem:[%s4 + $0x2c] sm:$0xf]
        %v510 = vld [vmem:[%s4 + $0x30] sm:$0xf]
        %v511 = vld [vmem:[%s4 + $0x34] sm:$0xf]
        %v512 = vld [vmem:[%s4 + $0x38] sm:$0xf]
        %v513 = vld [vmem:[%s4 + $0x3c] sm:$0xf]
        %v514 = vld [vmem:[%s4 + $0x40] sm:$0xf]
        %v515 = vld [vmem:[%s4 + $0x44] sm:$0xf]
        %v516 = vld [vmem:[%s4 + $0x48] sm:$0xf]
        %v517 = vld [vmem:[%s4 + $0x4c] sm:$0xf]
        %v518 = vld [vmem:[%s4 + $0x50] sm:$0xf]
        %v519 = vld [vmem:[%s4 + $0x54] sm:$0xf]
        %v520 = vld [vmem:[%s4 + $0x58] sm:$0xf]
        %v521 = vld [vmem:[%s4 + $0x5c] sm:$0xf]
        %v522 = vld [vmem:[%s4 + $0x60] sm:$0xf]
        %v523 = vld [vmem:[%s4 + $0x64] sm:$0xf]
        %v524 = vld [vmem:[%s4 + $0x68] sm:$0xf]
        %v525 = vld [vmem:[%s4 + $0x6c] sm:$0xf]
        %v526 = vld [vmem:[%s4 + $0x70] sm:$0xf]
        %v527 = vld [vmem:[%s4 + $0x74] sm:$0xf]
        %v528 = vld [vmem:[%s4 + $0x78] sm:$0xf]
        %v529 = vld [vmem:[%s4 + $0x7c] sm:$0xf]
        %v530 = vld [vmem:[%s4 + $0x80] sm:$0xf]
        %v531 = vld [vmem:[%s4 + $0x84] sm:$0xf]
        %v532 = vld [vmem:[%s4 + $0x88] sm:$0xf]
        %v533 = vld [vmem:[%s4 + $0x8c] sm:$0xf]
        %v534 = vld [vmem:[%s4 + $0x90] sm:$0xf]
        %v535 = vld [vmem:[%s4 + $0x94] sm:$0xf]
        %v536 = vld [vmem:[%s4 + $0x98] sm:$0xf]
        %v537 = vld [vmem:[%s4 + $0x9c] sm:$0xf]
        %v538 = vld [vmem:[%s4 + $0xa0] sm:$0xf]
        %v539 = vld [vmem:[%s4 + $0xa4] sm:$0xf]
        %v540 = vld [vmem:[%s4 + $0xa8] sm:$0xf]
        %v541 = vld [vmem:[%s4 + $0xac] sm:$0xf]
        %v542 = vld [vmem:[%s4 + $0xb0] sm:$0xf]
        %v543 = vld [vmem:[%s4 + $0xb4] sm:$0xf]
        %v544 = vld [vmem:[%s4 + $0xb8] sm:$0xf]
        %v545 = vld [vmem:[%s4 + $0xbc] sm:$0xf]
        %v546 = vld [vmem:[%s5] sm:$0x1]
        %v547 = vld [vmem:[%s5 + $0x1] sm:$0x1]
        %v548 = vld [vmem:[%s5 + $0x2] sm:$0x1]
        %v549 = vld [vmem:[%s5 + $0x3] sm:$0x1]
        %v550 = vld [vmem:[%s5 + $0x4] sm:$0x1]
        %v551 = vld [vmem:[%s5 + $0x5] sm:$0x1]
        %v552 = vld [vmem:[%s5 + $0x6] sm:$0x1]
        %v553 = vld [vmem:[%s5 + $0x7] sm:$0x1]
        %v554 = vld [vmem:[%s5 + $0x8] sm:$0x1]
        %v555 = vld [vmem:[%s5 + $0x9] sm:$0x1]
        %v556 = vld [vmem:[%s5 + $0xa] sm:$0x1]
        %v557 = vld [vmem:[%s5 + $0xb] sm:$0x1]
        %v570 = vlaneseq
        %v571 = vshrl.u32 %v570, 7
        %v572 = vsub.s32 0, %v571
        %v573 = vrot.slane %v546, %v572
        %v574 = vlaneseq
        %v575 = vshrl.u32 %v574, 7
        %v576 = vsub.s32 0, %v575
        %v577 = vrot.slane %v547, %v576
        %v578 = vlaneseq
        %v579 = vshrl.u32 %v578, 7
        %v580 = vsub.s32 0, %v579
        %v581 = vrot.slane %v548, %v580
        %v582 = vlaneseq
        %v583 = vshrl.u32 %v582, 7
        %v584 = vsub.s32 0, %v583
        %v585 = vrot.slane %v549, %v584
        %v586 = vlaneseq
        %v587 = vshrl.u32 %v586, 7
        %v588 = vsub.s32 0, %v587
        %v589 = vrot.slane %v550, %v588
        %v590 = vlaneseq
        %v591 = vshrl.u32 %v590, 7
        %v592 = vsub.s32 0, %v591
        %v593 = vrot.slane %v551, %v592
        %v594 = vlaneseq
        %v595 = vshrl.u32 %v594, 7
        %v596 = vsub.s32 0, %v595
        %v597 = vrot.slane %v552, %v596
        %v598 = vlaneseq
        %v599 = vshrl.u32 %v598, 7
        %v600 = vsub.s32 0, %v599
        %v601 = vrot.slane %v553, %v600
        %v602 = vlaneseq
        %v603 = vshrl.u32 %v602, 7
        %v604 = vsub.s32 0, %v603
        %v605 = vrot.slane %v554, %v604
        %v606 = vlaneseq
        %v607 = vshrl.u32 %v606, 7
        %v608 = vsub.s32 0, %v607
        %v609 = vrot.slane %v555, %v608
        %v610 = vlaneseq
        %v611 = vshrl.u32 %v610, 7
        %v612 = vsub.s32 0, %v611
        %v613 = vrot.slane %v556, %v612
        %v614 = vlaneseq
        %v615 = vshrl.u32 %v614, 7
        %v616 = vsub.s32 0, %v615
        %v617 = vrot.slane %v557, %v616
        %v634 = vunpack.c.l.b16 %v498
        %v635 = vunpack.c.l.b16 %v499
        %v636 = vunpack.c.l.b16 %v500
        %v637 = vunpack.c.l.b16 %v501
        %v638 = vpack.c.b16 %v635, %v634
        %v639 = vpack.c.b16 %v637, %v636
        %v643 = vsel %vm468, %v497, 0
        %645 = vmatprep.subr.bf16.mxu0 0
        %646 = vmatpush1.bf16.msra.mxu0 0
        %647 = vmatprep.subr.bf16.mxu0 0
        %648 = vmatpush1.bf16.msra.mxu0 0
        %649 = vmatprep.subr.bf16.mxu0 0
        %650 = vmatpush1.bf16.msra.mxu0 0
        %651 = vmatprep.subr.bf16.mxu0 0
        %652 = vmatpush1.bf16.msra.mxu0 0
        %653 = vmatprep.subr.bf16.mxu0 0
        %654 = vmatpush1.bf16.msra.mxu0 0
        %655 = vmatprep.subr.bf16.mxu0 0
        %656 = vmatpush1.bf16.msra.mxu0 0
        %657 = vmatprep.subr.bf16.mxu0 0
        %658 = vmatpush1.bf16.msra.mxu0 %v639
        %659 = vmatprep.subr.bf16.mxu0 0
        %660 = vmatpush1.bf16.msra.mxu0 %v638
        %661 = vmatprep.subr.bf16.mxu0 0
        %662 = vmatpush2.bf16.msra.mxu0 0
        %663 = vmatprep.subr.bf16.mxu0 0
        %664 = vmatpush2.bf16.msra.mxu0 0
        %665 = vmatprep.subr.bf16.mxu0 0
        %666 = vmatpush2.bf16.msra.mxu0 0
        %667 = vmatprep.subr.bf16.mxu0 0
        %668 = vmatpush2.bf16.msra.mxu0 0
        %669 = vmatprep.subr.bf16.mxu0 0
        %670 = vmatpush2.bf16.msra.mxu0 0
        %671 = vmatprep.subr.bf16.mxu0 0
        %672 = vmatpush2.bf16.msra.mxu0 0
        %673 = vmatprep.subr.bf16.mxu0 0
        %674 = vmatpush2.bf16.msra.mxu0 0
        %675 = vmatprep.subr.bf16.mxu0 0
        %676 = vmatpush2.bf16.msra.mxu0 0
        %677 = vmatprep.mubr.bf16.mxu0 0
        %678 = vmatmul.mubr.bf16.gmra.mxu0 %v643
        %v679 = vpop.f32.mrf.mxu0
        %v680 = vadd.f32 %v573, %v679
        %v681 = vpop.f32.mrf.mxu0
        %v682 = vpop.f32.mrf.mxu0
        %v683 = vpop.f32.mrf.mxu0
        %684 = vdwg.mxu0
        %v689 = vunpack.c.l.b16 %v502
        %v690 = vunpack.c.l.b16 %v503
        %v691 = vunpack.c.l.b16 %v504
        %v692 = vunpack.c.l.b16 %v505
        %v693 = vpack.c.b16 %v690, %v689
        %v694 = vpack.c.b16 %v692, %v691
        %697 = vmatprep.subr.bf16.mxu0 0
        %698 = vmatpush1.bf16.msra.mxu0 0
        %699 = vmatprep.subr.bf16.mxu0 0
        %700 = vmatpush1.bf16.msra.mxu0 0
        %701 = vmatprep.subr.bf16.mxu0 0
        %702 = vmatpush1.bf16.msra.mxu0 0
        %703 = vmatprep.subr.bf16.mxu0 0
        %704 = vmatpush1.bf16.msra.mxu0 0
        %705 = vmatprep.subr.bf16.mxu0 0
        %706 = vmatpush1.bf16.msra.mxu0 0
        %707 = vmatprep.subr.bf16.mxu0 0
        %708 = vmatpush1.bf16.msra.mxu0 0
        %709 = vmatprep.subr.bf16.mxu0 0
        %710 = vmatpush1.bf16.msra.mxu0 %v694
        %711 = vmatprep.subr.bf16.mxu0 0
        %712 = vmatpush1.bf16.msra.mxu0 %v693
        %713 = vmatprep.subr.bf16.mxu0 0
        %714 = vmatpush2.bf16.msra.mxu0 0
        %715 = vmatprep.subr.bf16.mxu0 0
        %716 = vmatpush2.bf16.msra.mxu0 0
        %717 = vmatprep.subr.bf16.mxu0 0
        %718 = vmatpush2.bf16.msra.mxu0 0
        %719 = vmatprep.subr.bf16.mxu0 0
        %720 = vmatpush2.bf16.msra.mxu0 0
        %721 = vmatprep.subr.bf16.mxu0 0
        %722 = vmatpush2.bf16.msra.mxu0 0
        %723 = vmatprep.subr.bf16.mxu0 0
        %724 = vmatpush2.bf16.msra.mxu0 0
        %725 = vmatprep.subr.bf16.mxu0 0
        %726 = vmatpush2.bf16.msra.mxu0 0
        %727 = vmatprep.subr.bf16.mxu0 0
        %728 = vmatpush2.bf16.msra.mxu0 0
        %729 = vmatprep.mubr.bf16.mxu0 0
        %730 = vmatmul.mubr.bf16.gmra.mxu0 %v643
        %v731 = vpop.f32.mrf.mxu0
        %v732 = vadd.f32 %v577, %v731
        %v733 = vpop.f32.mrf.mxu0
        %v734 = vpop.f32.mrf.mxu0
        %v735 = vpop.f32.mrf.mxu0
        %736 = vdwg.mxu0
        %v741 = vunpack.c.l.b16 %v506
        %v742 = vunpack.c.l.b16 %v507
        %v743 = vunpack.c.l.b16 %v508
        %v744 = vunpack.c.l.b16 %v509
        %v745 = vpack.c.b16 %v742, %v741
        %v746 = vpack.c.b16 %v744, %v743
        %749 = vmatprep.subr.bf16.mxu0 0
        %750 = vmatpush1.bf16.msra.mxu0 0
        %751 = vmatprep.subr.bf16.mxu0 0
        %752 = vmatpush1.bf16.msra.mxu0 0
        %753 = vmatprep.subr.bf16.mxu0 0
        %754 = vmatpush1.bf16.msra.mxu0 0
        %755 = vmatprep.subr.bf16.mxu0 0
        %756 = vmatpush1.bf16.msra.mxu0 0
        %757 = vmatprep.subr.bf16.mxu0 0
        %758 = vmatpush1.bf16.msra.mxu0 0
        %759 = vmatprep.subr.bf16.mxu0 0
        %760 = vmatpush1.bf16.msra.mxu0 0
        %761 = vmatprep.subr.bf16.mxu0 0
        %762 = vmatpush1.bf16.msra.mxu0 %v746
        %763 = vmatprep.subr.bf16.mxu0 0
        %764 = vmatpush1.bf16.msra.mxu0 %v745
        %765 = vmatprep.subr.bf16.mxu0 0
        %766 = vmatpush2.bf16.msra.mxu0 0
        %767 = vmatprep.subr.bf16.mxu0 0
        %768 = vmatpush2.bf16.msra.mxu0 0
        %769 = vmatprep.subr.bf16.mxu0 0
        %770 = vmatpush2.bf16.msra.mxu0 0
        %771 = vmatprep.subr.bf16.mxu0 0
        %772 = vmatpush2.bf16.msra.mxu0 0
        %773 = vmatprep.subr.bf16.mxu0 0
        %774 = vmatpush2.bf16.msra.mxu0 0
        %775 = vmatprep.subr.bf16.mxu0 0
        %776 = vmatpush2.bf16.msra.mxu0 0
        %777 = vmatprep.subr.bf16.mxu0 0
        %778 = vmatpush2.bf16.msra.mxu0 0
        %779 = vmatprep.subr.bf16.mxu0 0
        %780 = vmatpush2.bf16.msra.mxu0 0
        %781 = vmatprep.mubr.bf16.mxu0 0
        %782 = vmatmul.mubr.bf16.gmra.mxu0 %v643
        %v783 = vpop.f32.mrf.mxu0
        %v784 = vadd.f32 %v581, %v783
        %v785 = vpop.f32.mrf.mxu0
        %v786 = vpop.f32.mrf.mxu0
        %v787 = vpop.f32.mrf.mxu0
        %788 = vdwg.mxu0
        %v793 = vunpack.c.l.b16 %v510
        %v794 = vunpack.c.l.b16 %v511
        %v795 = vunpack.c.l.b16 %v512
        %v796 = vunpack.c.l.b16 %v513
        %v797 = vpack.c.b16 %v794, %v793
        %v798 = vpack.c.b16 %v796, %v795
        %801 = vmatprep.subr.bf16.mxu0 0
        %802 = vmatpush1.bf16.msra.mxu0 0
        %803 = vmatprep.subr.bf16.mxu0 0
        %804 = vmatpush1.bf16.msra.mxu0 0
        %805 = vmatprep.subr.bf16.mxu0 0
        %806 = vmatpush1.bf16.msra.mxu0 0
        %807 = vmatprep.subr.bf16.mxu0 0
        %808 = vmatpush1.bf16.msra.mxu0 0
        %809 = vmatprep.subr.bf16.mxu0 0
        %810 = vmatpush1.bf16.msra.mxu0 0
        %811 = vmatprep.subr.bf16.mxu0 0
        %812 = vmatpush1.bf16.msra.mxu0 0
        %813 = vmatprep.subr.bf16.mxu0 0
        %814 = vmatpush1.bf16.msra.mxu0 %v798
        %815 = vmatprep.subr.bf16.mxu0 0
        %816 = vmatpush1.bf16.msra.mxu0 %v797
        %817 = vmatprep.subr.bf16.mxu0 0
        %818 = vmatpush2.bf16.msra.mxu0 0
        %819 = vmatprep.subr.bf16.mxu0 0
        %820 = vmatpush2.bf16.msra.mxu0 0
        %821 = vmatprep.subr.bf16.mxu0 0
        %822 = vmatpush2.bf16.msra.mxu0 0
        %823 = vmatprep.subr.bf16.mxu0 0
        %824 = vmatpush2.bf16.msra.mxu0 0
        %825 = vmatprep.subr.bf16.mxu0 0
        %826 = vmatpush2.bf16.msra.mxu0 0
        %827 = vmatprep.subr.bf16.mxu0 0
        %828 = vmatpush2.bf16.msra.mxu0 0
        %829 = vmatprep.subr.bf16.mxu0 0
        %830 = vmatpush2.bf16.msra.mxu0 0
        %831 = vmatprep.subr.bf16.mxu0 0
        %832 = vmatpush2.bf16.msra.mxu0 0
        %833 = vmatprep.mubr.bf16.mxu0 0
        %834 = vmatmul.mubr.bf16.gmra.mxu0 %v643
        %v835 = vpop.f32.mrf.mxu0
        %v836 = vadd.f32 %v585, %v835
        %v837 = vpop.f32.mrf.mxu0
        %v838 = vpop.f32.mrf.mxu0
        %v839 = vpop.f32.mrf.mxu0
        %840 = vdwg.mxu0
        %v845 = vunpack.c.l.b16 %v514
        %v846 = vunpack.c.l.b16 %v515
        %v847 = vunpack.c.l.b16 %v516
        %v848 = vunpack.c.l.b16 %v517
        %v849 = vpack.c.b16 %v846, %v845
        %v850 = vpack.c.b16 %v848, %v847
        %853 = vmatprep.subr.bf16.mxu0 0
        %854 = vmatpush1.bf16.msra.mxu0 0
        %855 = vmatprep.subr.bf16.mxu0 0
        %856 = vmatpush1.bf16.msra.mxu0 0
        %857 = vmatprep.subr.bf16.mxu0 0
        %858 = vmatpush1.bf16.msra.mxu0 0
        %859 = vmatprep.subr.bf16.mxu0 0
        %860 = vmatpush1.bf16.msra.mxu0 0
        %861 = vmatprep.subr.bf16.mxu0 0
        %862 = vmatpush1.bf16.msra.mxu0 0
        %863 = vmatprep.subr.bf16.mxu0 0
        %864 = vmatpush1.bf16.msra.mxu0 0
        %865 = vmatprep.subr.bf16.mxu0 0
        %866 = vmatpush1.bf16.msra.mxu0 %v850
        %867 = vmatprep.subr.bf16.mxu0 0
        %868 = vmatpush1.bf16.msra.mxu0 %v849
        %869 = vmatprep.subr.bf16.mxu0 0
        %870 = vmatpush2.bf16.msra.mxu0 0
        %871 = vmatprep.subr.bf16.mxu0 0
        %872 = vmatpush2.bf16.msra.mxu0 0
        %873 = vmatprep.subr.bf16.mxu0 0
        %874 = vmatpush2.bf16.msra.mxu0 0
        %875 = vmatprep.subr.bf16.mxu0 0
        %876 = vmatpush2.bf16.msra.mxu0 0
        %877 = vmatprep.subr.bf16.mxu0 0
        %878 = vmatpush2.bf16.msra.mxu0 0
        %879 = vmatprep.subr.bf16.mxu0 0
        %880 = vmatpush2.bf16.msra.mxu0 0
        %881 = vmatprep.subr.bf16.mxu0 0
        %882 = vmatpush2.bf16.msra.mxu0 0
        %883 = vmatprep.subr.bf16.mxu0 0
        %884 = vmatpush2.bf16.msra.mxu0 0
        %885 = vmatprep.mubr.bf16.mxu0 0
        %886 = vmatmul.mubr.bf16.gmra.mxu0 %v643
        %v887 = vpop.f32.mrf.mxu0
        %v888 = vadd.f32 %v589, %v887
        %v889 = vpop.f32.mrf.mxu0
        %v890 = vpop.f32.mrf.mxu0
        %v891 = vpop.f32.mrf.mxu0
        %892 = vdwg.mxu0
        %v897 = vunpack.c.l.b16 %v518
        %v898 = vunpack.c.l.b16 %v519
        %v899 = vunpack.c.l.b16 %v520
        %v900 = vunpack.c.l.b16 %v521
        %v901 = vpack.c.b16 %v898, %v897
        %v902 = vpack.c.b16 %v900, %v899
        %905 = vmatprep.subr.bf16.mxu0 0
        %906 = vmatpush1.bf16.msra.mxu0 0
        %907 = vmatprep.subr.bf16.mxu0 0
        %908 = vmatpush1.bf16.msra.mxu0 0
        %909 = vmatprep.subr.bf16.mxu0 0
        %910 = vmatpush1.bf16.msra.mxu0 0
        %911 = vmatprep.subr.bf16.mxu0 0
        %912 = vmatpush1.bf16.msra.mxu0 0
        %913 = vmatprep.subr.bf16.mxu0 0
        %914 = vmatpush1.bf16.msra.mxu0 0
        %915 = vmatprep.subr.bf16.mxu0 0
        %916 = vmatpush1.bf16.msra.mxu0 0
        %917 = vmatprep.subr.bf16.mxu0 0
        %918 = vmatpush1.bf16.msra.mxu0 %v902
        %919 = vmatprep.subr.bf16.mxu0 0
        %920 = vmatpush1.bf16.msra.mxu0 %v901
        %921 = vmatprep.subr.bf16.mxu0 0
        %922 = vmatpush2.bf16.msra.mxu0 0
        %923 = vmatprep.subr.bf16.mxu0 0
        %924 = vmatpush2.bf16.msra.mxu0 0
        %925 = vmatprep.subr.bf16.mxu0 0
        %926 = vmatpush2.bf16.msra.mxu0 0
        %927 = vmatprep.subr.bf16.mxu0 0
        %928 = vmatpush2.bf16.msra.mxu0 0
        %929 = vmatprep.subr.bf16.mxu0 0
        %930 = vmatpush2.bf16.msra.mxu0 0
        %931 = vmatprep.subr.bf16.mxu0 0
        %932 = vmatpush2.bf16.msra.mxu0 0
        %933 = vmatprep.subr.bf16.mxu0 0
        %934 = vmatpush2.bf16.msra.mxu0 0
        %935 = vmatprep.subr.bf16.mxu0 0
        %936 = vmatpush2.bf16.msra.mxu0 0
        %937 = vmatprep.mubr.bf16.mxu0 0
        %938 = vmatmul.mubr.bf16.gmra.mxu0 %v643
        %v939 = vpop.f32.mrf.mxu0
        %v940 = vadd.f32 %v593, %v939
        %v941 = vpop.f32.mrf.mxu0
        %v942 = vpop.f32.mrf.mxu0
        %v943 = vpop.f32.mrf.mxu0
        %944 = vdwg.mxu0
        %v949 = vunpack.c.l.b16 %v522
        %v950 = vunpack.c.l.b16 %v523
        %v951 = vunpack.c.l.b16 %v524
        %v952 = vunpack.c.l.b16 %v525
        %v953 = vpack.c.b16 %v950, %v949
        %v954 = vpack.c.b16 %v952, %v951
        %957 = vmatprep.subr.bf16.mxu0 0
        %958 = vmatpush1.bf16.msra.mxu0 0
        %959 = vmatprep.subr.bf16.mxu0 0
        %960 = vmatpush1.bf16.msra.mxu0 0
        %961 = vmatprep.subr.bf16.mxu0 0
        %962 = vmatpush1.bf16.msra.mxu0 0
        %963 = vmatprep.subr.bf16.mxu0 0
        %964 = vmatpush1.bf16.msra.mxu0 0
        %965 = vmatprep.subr.bf16.mxu0 0
        %966 = vmatpush1.bf16.msra.mxu0 0
        %967 = vmatprep.subr.bf16.mxu0 0
        %968 = vmatpush1.bf16.msra.mxu0 0
        %969 = vmatprep.subr.bf16.mxu0 0
        %970 = vmatpush1.bf16.msra.mxu0 %v954
        %971 = vmatprep.subr.bf16.mxu0 0
        %972 = vmatpush1.bf16.msra.mxu0 %v953
        %973 = vmatprep.subr.bf16.mxu0 0
        %974 = vmatpush2.bf16.msra.mxu0 0
        %975 = vmatprep.subr.bf16.mxu0 0
        %976 = vmatpush2.bf16.msra.mxu0 0
        %977 = vmatprep.subr.bf16.mxu0 0
        %978 = vmatpush2.bf16.msra.mxu0 0
        %979 = vmatprep.subr.bf16.mxu0 0
        %980 = vmatpush2.bf16.msra.mxu0 0
        %981 = vmatprep.subr.bf16.mxu0 0
        %982 = vmatpush2.bf16.msra.mxu0 0
        %983 = vmatprep.subr.bf16.mxu0 0
        %984 = vmatpush2.bf16.msra.mxu0 0
        %985 = vmatprep.subr.bf16.mxu0 0
        %986 = vmatpush2.bf16.msra.mxu0 0
        %987 = vmatprep.subr.bf16.mxu0 0
        %988 = vmatpush2.bf16.msra.mxu0 0
        %989 = vmatprep.mubr.bf16.mxu0 0
        %990 = vmatmul.mubr.bf16.gmra.mxu0 %v643
        %v991 = vpop.f32.mrf.mxu0
        %v992 = vadd.f32 %v597, %v991
        %v993 = vpop.f32.mrf.mxu0
        %v994 = vpop.f32.mrf.mxu0
        %v995 = vpop.f32.mrf.mxu0
        %996 = vdwg.mxu0
        %v1001 = vunpack.c.l.b16 %v526
        %v1002 = vunpack.c.l.b16 %v527
        %v1003 = vunpack.c.l.b16 %v528
        %v1004 = vunpack.c.l.b16 %v529
        %v1005 = vpack.c.b16 %v1002, %v1001
        %v1006 = vpack.c.b16 %v1004, %v1003
        %1009 = vmatprep.subr.bf16.mxu0 0
        %1010 = vmatpush1.bf16.msra.mxu0 0
        %1011 = vmatprep.subr.bf16.mxu0 0
        %1012 = vmatpush1.bf16.msra.mxu0 0
        %1013 = vmatprep.subr.bf16.mxu0 0
        %1014 = vmatpush1.bf16.msra.mxu0 0
        %1015 = vmatprep.subr.bf16.mxu0 0
        %1016 = vmatpush1.bf16.msra.mxu0 0
        %1017 = vmatprep.subr.bf16.mxu0 0
        %1018 = vmatpush1.bf16.msra.mxu0 0
        %1019 = vmatprep.subr.bf16.mxu0 0
        %1020 = vmatpush1.bf16.msra.mxu0 0
        %1021 = vmatprep.subr.bf16.mxu0 0
        %1022 = vmatpush1.bf16.msra.mxu0 %v1006
        %1023 = vmatprep.subr.bf16.mxu0 0
        %1024 = vmatpush1.bf16.msra.mxu0 %v1005
        %1025 = vmatprep.subr.bf16.mxu0 0
        %1026 = vmatpush2.bf16.msra.mxu0 0
        %1027 = vmatprep.subr.bf16.mxu0 0
        %1028 = vmatpush2.bf16.msra.mxu0 0
        %1029 = vmatprep.subr.bf16.mxu0 0
        %1030 = vmatpush2.bf16.msra.mxu0 0
        %1031 = vmatprep.subr.bf16.mxu0 0
        %1032 = vmatpush2.bf16.msra.mxu0 0
        %1033 = vmatprep.subr.bf16.mxu0 0
        %1034 = vmatpush2.bf16.msra.mxu0 0
        %1035 = vmatprep.subr.bf16.mxu0 0
        %1036 = vmatpush2.bf16.msra.mxu0 0
        %1037 = vmatprep.subr.bf16.mxu0 0
        %1038 = vmatpush2.bf16.msra.mxu0 0
        %1039 = vmatprep.subr.bf16.mxu0 0
        %1040 = vmatpush2.bf16.msra.mxu0 0
        %1041 = vmatprep.mubr.bf16.mxu0 0
        %1042 = vmatmul.mubr.bf16.gmra.mxu0 %v643
        %v1043 = vpop.f32.mrf.mxu0
        %v1044 = vadd.f32 %v601, %v1043
        %v1045 = vpop.f32.mrf.mxu0
        %v1046 = vpop.f32.mrf.mxu0
        %v1047 = vpop.f32.mrf.mxu0
        %1048 = vdwg.mxu0
        %v1053 = vunpack.c.l.b16 %v530
        %v1054 = vunpack.c.l.b16 %v531
        %v1055 = vunpack.c.l.b16 %v532
        %v1056 = vunpack.c.l.b16 %v533
        %v1057 = vpack.c.b16 %v1054, %v1053
        %v1058 = vpack.c.b16 %v1056, %v1055
        %1061 = vmatprep.subr.bf16.mxu0 0
        %1062 = vmatpush1.bf16.msra.mxu0 0
        %1063 = vmatprep.subr.bf16.mxu0 0
        %1064 = vmatpush1.bf16.msra.mxu0 0
        %1065 = vmatprep.subr.bf16.mxu0 0
        %1066 = vmatpush1.bf16.msra.mxu0 0
        %1067 = vmatprep.subr.bf16.mxu0 0
        %1068 = vmatpush1.bf16.msra.mxu0 0
        %1069 = vmatprep.subr.bf16.mxu0 0
        %1070 = vmatpush1.bf16.msra.mxu0 0
        %1071 = vmatprep.subr.bf16.mxu0 0
        %1072 = vmatpush1.bf16.msra.mxu0 0
        %1073 = vmatprep.subr.bf16.mxu0 0
        %1074 = vmatpush1.bf16.msra.mxu0 %v1058
        %1075 = vmatprep.subr.bf16.mxu0 0
        %1076 = vmatpush1.bf16.msra.mxu0 %v1057
        %1077 = vmatprep.subr.bf16.mxu0 0
        %1078 = vmatpush2.bf16.msra.mxu0 0
        %1079 = vmatprep.subr.bf16.mxu0 0
        %1080 = vmatpush2.bf16.msra.mxu0 0
        %1081 = vmatprep.subr.bf16.mxu0 0
        %1082 = vmatpush2.bf16.msra.mxu0 0
        %1083 = vmatprep.subr.bf16.mxu0 0
        %1084 = vmatpush2.bf16.msra.mxu0 0
        %1085 = vmatprep.subr.bf16.mxu0 0
        %1086 = vmatpush2.bf16.msra.mxu0 0
        %1087 = vmatprep.subr.bf16.mxu0 0
        %1088 = vmatpush2.bf16.msra.mxu0 0
        %1089 = vmatprep.subr.bf16.mxu0 0
        %1090 = vmatpush2.bf16.msra.mxu0 0
        %1091 = vmatprep.subr.bf16.mxu0 0
        %1092 = vmatpush2.bf16.msra.mxu0 0
        %1093 = vmatprep.mubr.bf16.mxu0 0
        %1094 = vmatmul.mubr.bf16.gmra.mxu0 %v643
        %v1095 = vpop.f32.mrf.mxu0
        %v1096 = vadd.f32 %v605, %v1095
        %v1097 = vpop.f32.mrf.mxu0
        %v1098 = vpop.f32.mrf.mxu0
        %v1099 = vpop.f32.mrf.mxu0
        %1100 = vdwg.mxu0
        %v1105 = vunpack.c.l.b16 %v534
        %v1106 = vunpack.c.l.b16 %v535
        %v1107 = vunpack.c.l.b16 %v536
        %v1108 = vunpack.c.l.b16 %v537
        %v1109 = vpack.c.b16 %v1106, %v1105
        %v1110 = vpack.c.b16 %v1108, %v1107
        %1113 = vmatprep.subr.bf16.mxu0 0
        %1114 = vmatpush1.bf16.msra.mxu0 0
        %1115 = vmatprep.subr.bf16.mxu0 0
        %1116 = vmatpush1.bf16.msra.mxu0 0
        %1117 = vmatprep.subr.bf16.mxu0 0
        %1118 = vmatpush1.bf16.msra.mxu0 0
        %1119 = vmatprep.subr.bf16.mxu0 0
        %1120 = vmatpush1.bf16.msra.mxu0 0
        %1121 = vmatprep.subr.bf16.mxu0 0
        %1122 = vmatpush1.bf16.msra.mxu0 0
        %1123 = vmatprep.subr.bf16.mxu0 0
        %1124 = vmatpush1.bf16.msra.mxu0 0
        %1125 = vmatprep.subr.bf16.mxu0 0
        %1126 = vmatpush1.bf16.msra.mxu0 %v1110
        %1127 = vmatprep.subr.bf16.mxu0 0
        %1128 = vmatpush1.bf16.msra.mxu0 %v1109
        %1129 = vmatprep.subr.bf16.mxu0 0
        %1130 = vmatpush2.bf16.msra.mxu0 0
        %1131 = vmatprep.subr.bf16.mxu0 0
        %1132 = vmatpush2.bf16.msra.mxu0 0
        %1133 = vmatprep.subr.bf16.mxu0 0
        %1134 = vmatpush2.bf16.msra.mxu0 0
        %1135 = vmatprep.subr.bf16.mxu0 0
        %1136 = vmatpush2.bf16.msra.mxu0 0
        %1137 = vmatprep.subr.bf16.mxu0 0
        %1138 = vmatpush2.bf16.msra.mxu0 0
        %1139 = vmatprep.subr.bf16.mxu0 0
        %1140 = vmatpush2.bf16.msra.mxu0 0
        %1141 = vmatprep.subr.bf16.mxu0 0
        %1142 = vmatpush2.bf16.msra.mxu0 0
        %1143 = vmatprep.subr.bf16.mxu0 0
        %1144 = vmatpush2.bf16.msra.mxu0 0
        %1145 = vmatprep.mubr.bf16.mxu0 0
        %1146 = vmatmul.mubr.bf16.gmra.mxu0 %v643
        %v1147 = vpop.f32.mrf.mxu0
        %v1148 = vadd.f32 %v609, %v1147
        %v1149 = vpop.f32.mrf.mxu0
        %v1150 = vpop.f32.mrf.mxu0
        %v1151 = vpop.f32.mrf.mxu0
        %1152 = vdwg.mxu0
        %v1157 = vunpack.c.l.b16 %v538
        %v1158 = vunpack.c.l.b16 %v539
        %v1159 = vunpack.c.l.b16 %v540
        %v1160 = vunpack.c.l.b16 %v541
        %v1161 = vpack.c.b16 %v1158, %v1157
        %v1162 = vpack.c.b16 %v1160, %v1159
        %1165 = vmatprep.subr.bf16.mxu0 0
        %1166 = vmatpush1.bf16.msra.mxu0 0
        %1167 = vmatprep.subr.bf16.mxu0 0
        %1168 = vmatpush1.bf16.msra.mxu0 0
        %1169 = vmatprep.subr.bf16.mxu0 0
        %1170 = vmatpush1.bf16.msra.mxu0 0
        %1171 = vmatprep.subr.bf16.mxu0 0
        %1172 = vmatpush1.bf16.msra.mxu0 0
        %1173 = vmatprep.subr.bf16.mxu0 0
        %1174 = vmatpush1.bf16.msra.mxu0 0
        %1175 = vmatprep.subr.bf16.mxu0 0
        %1176 = vmatpush1.bf16.msra.mxu0 0
        %1177 = vmatprep.subr.bf16.mxu0 0
        %1178 = vmatpush1.bf16.msra.mxu0 %v1162
        %1179 = vmatprep.subr.bf16.mxu0 0
        %1180 = vmatpush1.bf16.msra.mxu0 %v1161
        %1181 = vmatprep.subr.bf16.mxu0 0
        %1182 = vmatpush2.bf16.msra.mxu0 0
        %1183 = vmatprep.subr.bf16.mxu0 0
        %1184 = vmatpush2.bf16.msra.mxu0 0
        %1185 = vmatprep.subr.bf16.mxu0 0
        %1186 = vmatpush2.bf16.msra.mxu0 0
        %1187 = vmatprep.subr.bf16.mxu0 0
        %1188 = vmatpush2.bf16.msra.mxu0 0
        %1189 = vmatprep.subr.bf16.mxu0 0
        %1190 = vmatpush2.bf16.msra.mxu0 0
        %1191 = vmatprep.subr.bf16.mxu0 0
        %1192 = vmatpush2.bf16.msra.mxu0 0
        %1193 = vmatprep.subr.bf16.mxu0 0
        %1194 = vmatpush2.bf16.msra.mxu0 0
        %1195 = vmatprep.subr.bf16.mxu0 0
        %1196 = vmatpush2.bf16.msra.mxu0 0
        %1197 = vmatprep.mubr.bf16.mxu0 0
        %1198 = vmatmul.mubr.bf16.gmra.mxu0 %v643
        %v1199 = vpop.f32.mrf.mxu0
        %v1200 = vadd.f32 %v613, %v1199
        %v1201 = vpop.f32.mrf.mxu0
        %v1202 = vpop.f32.mrf.mxu0
        %v1203 = vpop.f32.mrf.mxu0
        %1204 = vdwg.mxu0
        %v1209 = vunpack.c.l.b16 %v542
        %v1210 = vunpack.c.l.b16 %v543
        %v1211 = vunpack.c.l.b16 %v544
        %v1212 = vunpack.c.l.b16 %v545
        %v1213 = vpack.c.b16 %v1210, %v1209
        %v1214 = vpack.c.b16 %v1212, %v1211
        %1217 = vmatprep.subr.bf16.mxu0 0
        %1218 = vmatpush1.bf16.msra.mxu0 0
        %1219 = vmatprep.subr.bf16.mxu0 0
        %1220 = vmatpush1.bf16.msra.mxu0 0
        %1221 = vmatprep.subr.bf16.mxu0 0
        %1222 = vmatpush1.bf16.msra.mxu0 0
        %1223 = vmatprep.subr.bf16.mxu0 0
        %1224 = vmatpush1.bf16.msra.mxu0 0
        %1225 = vmatprep.subr.bf16.mxu0 0
        %1226 = vmatpush1.bf16.msra.mxu0 0
        %1227 = vmatprep.subr.bf16.mxu0 0
        %1228 = vmatpush1.bf16.msra.mxu0 0
        %1229 = vmatprep.subr.bf16.mxu0 0
        %1230 = vmatpush1.bf16.msra.mxu0 %v1214
        %1231 = vmatprep.subr.bf16.mxu0 0
        %1232 = vmatpush1.bf16.msra.mxu0 %v1213
        %1233 = vmatprep.subr.bf16.mxu0 0
        %1234 = vmatpush2.bf16.msra.mxu0 0
        %1235 = vmatprep.subr.bf16.mxu0 0
        %1236 = vmatpush2.bf16.msra.mxu0 0
        %1237 = vmatprep.subr.bf16.mxu0 0
        %1238 = vmatpush2.bf16.msra.mxu0 0
        %1239 = vmatprep.subr.bf16.mxu0 0
        %1240 = vmatpush2.bf16.msra.mxu0 0
        %1241 = vmatprep.subr.bf16.mxu0 0
        %1242 = vmatpush2.bf16.msra.mxu0 0
        %1243 = vmatprep.subr.bf16.mxu0 0
        %1244 = vmatpush2.bf16.msra.mxu0 0
        %1245 = vmatprep.subr.bf16.mxu0 0
        %1246 = vmatpush2.bf16.msra.mxu0 0
        %1247 = vmatprep.subr.bf16.mxu0 0
        %1248 = vmatpush2.bf16.msra.mxu0 0
        %1249 = vmatprep.mubr.bf16.mxu0 0
        %1250 = vmatmul.mubr.bf16.gmra.mxu0 %v643
        %v1251 = vpop.f32.mrf.mxu0
        %v1252 = vadd.f32 %v617, %v1251
        %v1253 = vpop.f32.mrf.mxu0
        %v1254 = vpop.f32.mrf.mxu0
        %v1255 = vpop.f32.mrf.mxu0
        %1256 = vdwg.mxu0
        %v1257 = vpack.c.bf16 %v680, %v680
        %v1258 = vpack.c.bf16 %v732, %v732
        %v1259 = vpack.c.bf16 %v784, %v784
        %v1260 = vpack.c.bf16 %v836, %v836
        %v1261 = vpack.c.bf16 %v888, %v888
        %v1262 = vpack.c.bf16 %v940, %v940
        %v1263 = vpack.c.bf16 %v992, %v992
        %v1264 = vpack.c.bf16 %v1044, %v1044
        %vm1265 = vcmask 64512
        %v1267 = vsel %vm1265, %v1257, 0
        %v1270 = vsel %vm1265, %v1261, 0
        %1272 = vmatprep.subr.bf16.mxu0 0
        %1273 = vmatpush1.bf16.xpose.msra.mxu0 0
        %1274 = vmatprep.subr.bf16.mxu0 0
        %1275 = vmatpush1.bf16.xpose.msra.mxu0 0
        %1276 = vmatprep.subr.bf16.mxu0 0
        %1277 = vmatpush1.bf16.xpose.msra.mxu0 0
        %1278 = vmatprep.subr.bf16.mxu0 0
        %1279 = vmatpush1.bf16.xpose.msra.mxu0 0
        %1280 = vmatprep.subr.bf16.mxu0 0
        %1281 = vmatpush1.bf16.xpose.msra.mxu0 0
        %1282 = vmatprep.subr.bf16.mxu0 0
        %1283 = vmatpush1.bf16.xpose.msra.mxu0 0
        %1284 = vmatprep.subr.bf16.mxu0 0
        %1285 = vmatpush1.bf16.xpose.msra.mxu0 0
        %1286 = vmatprep.subr.bf16.mxu0 0
        %1287 = vmatpush1.bf16.xpose.msra.mxu0 %v1270
        %1288 = vmatprep.subr.bf16.mxu0 0
        %1289 = vmatpush2.bf16.xpose.msra.mxu0 0
        %1290 = vmatprep.subr.bf16.mxu0 0
        %1291 = vmatpush2.bf16.xpose.msra.mxu0 0
        %1292 = vmatprep.subr.bf16.mxu0 0
        %1293 = vmatpush2.bf16.xpose.msra.mxu0 0
        %1294 = vmatprep.subr.bf16.mxu0 0
        %1295 = vmatpush2.bf16.xpose.msra.mxu0 0
        %1296 = vmatprep.subr.bf16.mxu0 0
        %1297 = vmatpush2.bf16.xpose.msra.mxu0 0
        %1298 = vmatprep.subr.bf16.mxu0 0
        %1299 = vmatpush2.bf16.xpose.msra.mxu0 0
        %1300 = vmatprep.subr.bf16.mxu0 0
        %1301 = vmatpush2.bf16.xpose.msra.mxu0 0
        %1302 = vmatprep.subr.bf16.mxu0 0
        %1303 = vmatpush2.bf16.xpose.msra.mxu0 0
        %1304 = vmatprep.mubr.bf16.mxu0 0
        %1305 = vmatmul.mubr.bf16.gmra.mxu0 %v1267
        %v1306 = vpop.f32.mrf.mxu0
        %v1307 = vadd.f32 %v465, %v1306
        %v1308 = vpop.f32.mrf.mxu0
        %v1309 = vpop.f32.mrf.mxu0
        %v1310 = vpop.f32.mrf.mxu0
        %1311 = vdwg.mxu0
        %v1313 = vsel %vm1265, %v1258, 0
        %v1316 = vsel %vm1265, %v1262, 0
        %1318 = vmatprep.subr.bf16.mxu0 0
        %1319 = vmatpush1.bf16.xpose.msra.mxu0 0
        %1320 = vmatprep.subr.bf16.mxu0 0
        %1321 = vmatpush1.bf16.xpose.msra.mxu0 0
        %1322 = vmatprep.subr.bf16.mxu0 0
        %1323 = vmatpush1.bf16.xpose.msra.mxu0 0
        %1324 = vmatprep.subr.bf16.mxu0 0
        %1325 = vmatpush1.bf16.xpose.msra.mxu0 0
        %1326 = vmatprep.subr.bf16.mxu0 0
        %1327 = vmatpush1.bf16.xpose.msra.mxu0 0
        %1328 = vmatprep.subr.bf16.mxu0 0
        %1329 = vmatpush1.bf16.xpose.msra.mxu0 0
        %1330 = vmatprep.subr.bf16.mxu0 0
        %1331 = vmatpush1.bf16.xpose.msra.mxu0 0
        %1332 = vmatprep.subr.bf16.mxu0 0
        %1333 = vmatpush1.bf16.xpose.msra.mxu0 %v1316
        %1334 = vmatprep.subr.bf16.mxu0 0
        %1335 = vmatpush2.bf16.xpose.msra.mxu0 0
        %1336 = vmatprep.subr.bf16.mxu0 0
        %1337 = vmatpush2.bf16.xpose.msra.mxu0 0
        %1338 = vmatprep.subr.bf16.mxu0 0
        %1339 = vmatpush2.bf16.xpose.msra.mxu0 0
        %1340 = vmatprep.subr.bf16.mxu0 0
        %1341 = vmatpush2.bf16.xpose.msra.mxu0 0
        %1342 = vmatprep.subr.bf16.mxu0 0
        %1343 = vmatpush2.bf16.xpose.msra.mxu0 0
        %1344 = vmatprep.subr.bf16.mxu0 0
        %1345 = vmatpush2.bf16.xpose.msra.mxu0 0
        %1346 = vmatprep.subr.bf16.mxu0 0
        %1347 = vmatpush2.bf16.xpose.msra.mxu0 0
        %1348 = vmatprep.subr.bf16.mxu0 0
        %1349 = vmatpush2.bf16.xpose.msra.mxu0 0
        %1350 = vmatprep.mubr.bf16.mxu0 0
        %1351 = vmatmul.mubr.bf16.gmra.mxu0 %v1313
        %v1352 = vpop.f32.mrf.mxu0
        %v1353 = vadd.f32 %v465, %v1352
        %v1354 = vpop.f32.mrf.mxu0
        %v1355 = vpop.f32.mrf.mxu0
        %v1356 = vpop.f32.mrf.mxu0
        %1357 = vdwg.mxu0
        %v1359 = vsel %vm1265, %v1259, 0
        %v1362 = vsel %vm1265, %v1263, 0
        %1364 = vmatprep.subr.bf16.mxu0 0
        %1365 = vmatpush1.bf16.xpose.msra.mxu0 0
        %1366 = vmatprep.subr.bf16.mxu0 0
        %1367 = vmatpush1.bf16.xpose.msra.mxu0 0
        %1368 = vmatprep.subr.bf16.mxu0 0
        %1369 = vmatpush1.bf16.xpose.msra.mxu0 0
        %1370 = vmatprep.subr.bf16.mxu0 0
        %1371 = vmatpush1.bf16.xpose.msra.mxu0 0
        %1372 = vmatprep.subr.bf16.mxu0 0
        %1373 = vmatpush1.bf16.xpose.msra.mxu0 0
        %1374 = vmatprep.subr.bf16.mxu0 0
        %1375 = vmatpush1.bf16.xpose.msra.mxu0 0
        %1376 = vmatprep.subr.bf16.mxu0 0
        %1377 = vmatpush1.bf16.xpose.msra.mxu0 0
        %1378 = vmatprep.subr.bf16.mxu0 0
        %1379 = vmatpush1.bf16.xpose.msra.mxu0 %v1362
        %1380 = vmatprep.subr.bf16.mxu0 0
        %1381 = vmatpush2.bf16.xpose.msra.mxu0 0
        %1382 = vmatprep.subr.bf16.mxu0 0
        %1383 = vmatpush2.bf16.xpose.msra.mxu0 0
        %1384 = vmatprep.subr.bf16.mxu0 0
        %1385 = vmatpush2.bf16.xpose.msra.mxu0 0
        %1386 = vmatprep.subr.bf16.mxu0 0
        %1387 = vmatpush2.bf16.xpose.msra.mxu0 0
        %1388 = vmatprep.subr.bf16.mxu0 0
        %1389 = vmatpush2.bf16.xpose.msra.mxu0 0
        %1390 = vmatprep.subr.bf16.mxu0 0
        %1391 = vmatpush2.bf16.xpose.msra.mxu0 0
        %1392 = vmatprep.subr.bf16.mxu0 0
        %1393 = vmatpush2.bf16.xpose.msra.mxu0 0
        %1394 = vmatprep.subr.bf16.mxu0 0
        %1395 = vmatpush2.bf16.xpose.msra.mxu0 0
        %1396 = vmatprep.mubr.bf16.mxu0 0
        %1397 = vmatmul.mubr.bf16.gmra.mxu0 %v1359
        %v1398 = vpop.f32.mrf.mxu0
        %v1399 = vadd.f32 %v465, %v1398
        %v1400 = vpop.f32.mrf.mxu0
        %v1401 = vpop.f32.mrf.mxu0
        %v1402 = vpop.f32.mrf.mxu0
        %1403 = vdwg.mxu0
        %v1405 = vsel %vm1265, %v1260, 0
        %v1408 = vsel %vm1265, %v1264, 0
        %1410 = vmatprep.subr.bf16.mxu0 0
        %1411 = vmatpush1.bf16.xpose.msra.mxu0 0
        %1412 = vmatprep.subr.bf16.mxu0 0
        %1413 = vmatpush1.bf16.xpose.msra.mxu0 0
        %1414 = vmatprep.subr.bf16.mxu0 0
        %1415 = vmatpush1.bf16.xpose.msra.mxu0 0
        %1416 = vmatprep.subr.bf16.mxu0 0
        %1417 = vmatpush1.bf16.xpose.msra.mxu0 0
        %1418 = vmatprep.subr.bf16.mxu0 0
        %1419 = vmatpush1.bf16.xpose.msra.mxu0 0
        %1420 = vmatprep.subr.bf16.mxu0 0
        %1421 = vmatpush1.bf16.xpose.msra.mxu0 0
        %1422 = vmatprep.subr.bf16.mxu0 0
        %1423 = vmatpush1.bf16.xpose.msra.mxu0 0
        %1424 = vmatprep.subr.bf16.mxu0 0
        %1425 = vmatpush1.bf16.xpose.msra.mxu0 %v1408
        %1426 = vmatprep.subr.bf16.mxu0 0
        %1427 = vmatpush2.bf16.xpose.msra.mxu0 0
        %1428 = vmatprep.subr.bf16.mxu0 0
        %1429 = vmatpush2.bf16.xpose.msra.mxu0 0
        %1430 = vmatprep.subr.bf16.mxu0 0
        %1431 = vmatpush2.bf16.xpose.msra.mxu0 0
        %1432 = vmatprep.subr.bf16.mxu0 0
        %1433 = vmatpush2.bf16.xpose.msra.mxu0 0
        %1434 = vmatprep.subr.bf16.mxu0 0
        %1435 = vmatpush2.bf16.xpose.msra.mxu0 0
        %1436 = vmatprep.subr.bf16.mxu0 0
        %1437 = vmatpush2.bf16.xpose.msra.mxu0 0
        %1438 = vmatprep.subr.bf16.mxu0 0
        %1439 = vmatpush2.bf16.xpose.msra.mxu0 0
        %1440 = vmatprep.subr.bf16.mxu0 0
        %1441 = vmatpush2.bf16.xpose.msra.mxu0 0
        %1442 = vmatprep.mubr.bf16.mxu0 0
        %1443 = vmatmul.mubr.bf16.gmra.mxu0 %v1405
        %v1444 = vpop.f32.mrf.mxu0
        %v1445 = vadd.f32 %v465, %v1444
        %v1446 = vpop.f32.mrf.mxu0
        %v1447 = vpop.f32.mrf.mxu0
        %v1448 = vpop.f32.mrf.mxu0
        %1449 = vdwg.mxu0
        %v1450 = vsel %vm1265, %v1307, -inf
        %1451 = vmax.xlane.f32.xlu0 %v1450
        %v1452 = vpop.xlane.xlu0 %1451
        %v1453 = vsel %vm1265, %v1353, -inf
        %1454 = vmax.xlane.f32.xlu0 %v1453
        %v1455 = vpop.xlane.xlu0 %1454
        %v1456 = vsel %vm1265, %v1399, -inf
        %1457 = vmax.xlane.f32.xlu0 %v1456
        %v1458 = vpop.xlane.xlu0 %1457
        %v1459 = vsel %vm1265, %v1445, -inf
        %1460 = vmax.xlane.f32.xlu0 %v1459
        %v1461 = vpop.xlane.xlu0 %1460
        %v1462 = vsub.f32 %v1307, %v1452
        %v1463 = vsub.f32 %v1353, %v1455
        %v1464 = vsub.f32 %v1399, %v1458
        %v1465 = vsub.f32 %v1445, %v1461
        %v1466 = vmul.f32 %v1462, 1.442695
        %v1467 = vpow.pop %v1466
        %v1468 = vmul.f32 %v1463, 1.442695
        %v1469 = vpow.pop %v1468
        %v1470 = vmul.f32 %v1464, 1.442695
        %v1471 = vpow.pop %v1470
        %v1472 = vmul.f32 %v1465, 1.442695
        %v1473 = vpow.pop %v1472
        %v1474 = vsel %vm1265, %v1467, 0.0
        %1475 = vadd.xlane.f32.xlu0 %v1474
        %v1476 = vpop.xlane.xlu0 %1475
        %v1477 = vsel %vm1265, %v1469, 0.0
        %1478 = vadd.xlane.f32.xlu0 %v1477
        %v1479 = vpop.xlane.xlu0 %1478
        %v1480 = vsel %vm1265, %v1471, 0.0
        %1481 = vadd.xlane.f32.xlu0 %v1480
        %v1482 = vpop.xlane.xlu0 %1481
        %v1483 = vsel %vm1265, %v1473, 0.0
        %1484 = vadd.xlane.f32.xlu0 %v1483
        %v1485 = vpop.xlane.xlu0 %1484
        %v1486 = vrcp.pop %v1476
        %v1487 = vrcp.pop %v1479
        %v1488 = vrcp.pop %v1482
        %v1489 = vrcp.pop %v1485
        %v1490 = vmul.f32 %v1467, %v1486
        %v1491 = vmul.f32 %v1469, %v1487
        %v1492 = vmul.f32 %v1471, %v1488
        %v1493 = vmul.f32 %v1473, %v1489
        %v1494 = vpack.c.bf16 %v1490, %v1490
        %v1495 = vpack.c.bf16 %v1491, %v1491
        %v1496 = vpack.c.bf16 %v1492, %v1492
        %v1497 = vpack.c.bf16 %v1493, %v1493
        %v1498 = vpack.c.bf16 %v1096, %v1096
        %v1499 = vpack.c.bf16 %v1148, %v1148
        %v1500 = vpack.c.bf16 %v1200, %v1200
        %v1501 = vpack.c.bf16 %v1252, %v1252
        %v1503 = vsel %vm1265, %v1494, 0
        %vm1505 = vcmask 1043456
        %v1507 = vsel %vm1505, %v1498, 0
        %1509 = vmatprep.subr.bf16.mxu0 0
        %1510 = vmatpush1.bf16.msra.mxu0 0
        %1511 = vmatprep.subr.bf16.mxu0 0
        %1512 = vmatpush1.bf16.msra.mxu0 0
        %1513 = vmatprep.subr.bf16.mxu0 0
        %1514 = vmatpush1.bf16.msra.mxu0 0
        %1515 = vmatprep.subr.bf16.mxu0 0
        %1516 = vmatpush1.bf16.msra.mxu0 0
        %1517 = vmatprep.subr.bf16.mxu0 0
        %1518 = vmatpush1.bf16.msra.mxu0 0
        %1519 = vmatprep.subr.bf16.mxu0 0
        %1520 = vmatpush1.bf16.msra.mxu0 0
        %1521 = vmatprep.subr.bf16.mxu0 0
        %1522 = vmatpush1.bf16.msra.mxu0 0
        %1523 = vmatprep.subr.bf16.mxu0 0
        %1524 = vmatpush1.bf16.msra.mxu0 %v1507
        %1525 = vmatprep.subr.bf16.mxu0 0
        %1526 = vmatpush2.bf16.msra.mxu0 0
        %1527 = vmatprep.subr.bf16.mxu0 0
        %1528 = vmatpush2.bf16.msra.mxu0 0
        %1529 = vmatprep.subr.bf16.mxu0 0
        %1530 = vmatpush2.bf16.msra.mxu0 0
        %1531 = vmatprep.subr.bf16.mxu0 0
        %1532 = vmatpush2.bf16.msra.mxu0 0
        %1533 = vmatprep.subr.bf16.mxu0 0
        %1534 = vmatpush2.bf16.msra.mxu0 0
        %1535 = vmatprep.subr.bf16.mxu0 0
        %1536 = vmatpush2.bf16.msra.mxu0 0
        %1537 = vmatprep.subr.bf16.mxu0 0
        %1538 = vmatpush2.bf16.msra.mxu0 0
        %1539 = vmatprep.subr.bf16.mxu0 0
        %1540 = vmatpush2.bf16.msra.mxu0 0
        %1541 = vmatprep.mubr.bf16.mxu0 0
        %1542 = vmatmul.mubr.bf16.gmra.mxu0 %v1503
        %v1543 = vpop.f32.mrf.mxu0
        %v1544 = vadd.f32 0.0, %v1543
        %v1545 = vpop.f32.mrf.mxu0
        %v1546 = vpop.f32.mrf.mxu0
        %v1547 = vpop.f32.mrf.mxu0
        %1548 = vdwg.mxu0
        %v1550 = vsel %vm1265, %v1495, 0
        %v1553 = vsel %vm1505, %v1499, 0
        %1555 = vmatprep.subr.bf16.mxu0 0
        %1556 = vmatpush1.bf16.msra.mxu0 0
        %1557 = vmatprep.subr.bf16.mxu0 0
        %1558 = vmatpush1.bf16.msra.mxu0 0
        %1559 = vmatprep.subr.bf16.mxu0 0
        %1560 = vmatpush1.bf16.msra.mxu0 0
        %1561 = vmatprep.subr.bf16.mxu0 0
        %1562 = vmatpush1.bf16.msra.mxu0 0
        %1563 = vmatprep.subr.bf16.mxu0 0
        %1564 = vmatpush1.bf16.msra.mxu0 0
        %1565 = vmatprep.subr.bf16.mxu0 0
        %1566 = vmatpush1.bf16.msra.mxu0 0
        %1567 = vmatprep.subr.bf16.mxu0 0
        %1568 = vmatpush1.bf16.msra.mxu0 0
        %1569 = vmatprep.subr.bf16.mxu0 0
        %1570 = vmatpush1.bf16.msra.mxu0 %v1553
        %1571 = vmatprep.subr.bf16.mxu0 0
        %1572 = vmatpush2.bf16.msra.mxu0 0
        %1573 = vmatprep.subr.bf16.mxu0 0
        %1574 = vmatpush2.bf16.msra.mxu0 0
        %1575 = vmatprep.subr.bf16.mxu0 0
        %1576 = vmatpush2.bf16.msra.mxu0 0
        %1577 = vmatprep.subr.bf16.mxu0 0
        %1578 = vmatpush2.bf16.msra.mxu0 0
        %1579 = vmatprep.subr.bf16.mxu0 0
        %1580 = vmatpush2.bf16.msra.mxu0 0
        %1581 = vmatprep.subr.bf16.mxu0 0
        %1582 = vmatpush2.bf16.msra.mxu0 0
        %1583 = vmatprep.subr.bf16.mxu0 0
        %1584 = vmatpush2.bf16.msra.mxu0 0
        %1585 = vmatprep.subr.bf16.mxu0 0
        %1586 = vmatpush2.bf16.msra.mxu0 0
        %1587 = vmatprep.mubr.bf16.mxu0 0
        %1588 = vmatmul.mubr.bf16.gmra.mxu0 %v1550
        %v1589 = vpop.f32.mrf.mxu0
        %v1590 = vadd.f32 0.0, %v1589
        %v1591 = vpop.f32.mrf.mxu0
        %v1592 = vpop.f32.mrf.mxu0
        %v1593 = vpop.f32.mrf.mxu0
        %1594 = vdwg.mxu0
        %v1596 = vsel %vm1265, %v1496, 0
        %v1599 = vsel %vm1505, %v1500, 0
        %1601 = vmatprep.subr.bf16.mxu0 0
        %1602 = vmatpush1.bf16.msra.mxu0 0
        %1603 = vmatprep.subr.bf16.mxu0 0
        %1604 = vmatpush1.bf16.msra.mxu0 0
        %1605 = vmatprep.subr.bf16.mxu0 0
        %1606 = vmatpush1.bf16.msra.mxu0 0
        %1607 = vmatprep.subr.bf16.mxu0 0
        %1608 = vmatpush1.bf16.msra.mxu0 0
        %1609 = vmatprep.subr.bf16.mxu0 0
        %1610 = vmatpush1.bf16.msra.mxu0 0
        %1611 = vmatprep.subr.bf16.mxu0 0
        %1612 = vmatpush1.bf16.msra.mxu0 0
        %1613 = vmatprep.subr.bf16.mxu0 0
        %1614 = vmatpush1.bf16.msra.mxu0 0
        %1615 = vmatprep.subr.bf16.mxu0 0
        %1616 = vmatpush1.bf16.msra.mxu0 %v1599
        %1617 = vmatprep.subr.bf16.mxu0 0
        %1618 = vmatpush2.bf16.msra.mxu0 0
        %1619 = vmatprep.subr.bf16.mxu0 0
        %1620 = vmatpush2.bf16.msra.mxu0 0
        %1621 = vmatprep.subr.bf16.mxu0 0
        %1622 = vmatpush2.bf16.msra.mxu0 0
        %1623 = vmatprep.subr.bf16.mxu0 0
        %1624 = vmatpush2.bf16.msra.mxu0 0
        %1625 = vmatprep.subr.bf16.mxu0 0
        %1626 = vmatpush2.bf16.msra.mxu0 0
        %1627 = vmatprep.subr.bf16.mxu0 0
        %1628 = vmatpush2.bf16.msra.mxu0 0
        %1629 = vmatprep.subr.bf16.mxu0 0
        %1630 = vmatpush2.bf16.msra.mxu0 0
        %1631 = vmatprep.subr.bf16.mxu0 0
        %1632 = vmatpush2.bf16.msra.mxu0 0
        %1633 = vmatprep.mubr.bf16.mxu0 0
        %1634 = vmatmul.mubr.bf16.gmra.mxu0 %v1596
        %v1635 = vpop.f32.mrf.mxu0
        %v1636 = vadd.f32 0.0, %v1635
        %v1637 = vpop.f32.mrf.mxu0
        %v1638 = vpop.f32.mrf.mxu0
        %v1639 = vpop.f32.mrf.mxu0
        %1640 = vdwg.mxu0
        %v1642 = vsel %vm1265, %v1497, 0
        %v1645 = vsel %vm1505, %v1501, 0
        %1647 = vmatprep.subr.bf16.mxu0 0
        %1648 = vmatpush1.bf16.msra.mxu0 0
        %1649 = vmatprep.subr.bf16.mxu0 0
        %1650 = vmatpush1.bf16.msra.mxu0 0
        %1651 = vmatprep.subr.bf16.mxu0 0
        %1652 = vmatpush1.bf16.msra.mxu0 0
        %1653 = vmatprep.subr.bf16.mxu0 0
        %1654 = vmatpush1.bf16.msra.mxu0 0
        %1655 = vmatprep.subr.bf16.mxu0 0
        %1656 = vmatpush1.bf16.msra.mxu0 0
        %1657 = vmatprep.subr.bf16.mxu0 0
        %1658 = vmatpush1.bf16.msra.mxu0 0
        %1659 = vmatprep.subr.bf16.mxu0 0
        %1660 = vmatpush1.bf16.msra.mxu0 0
        %1661 = vmatprep.subr.bf16.mxu0 0
        %1662 = vmatpush1.bf16.msra.mxu0 %v1645
        %1663 = vmatprep.subr.bf16.mxu0 0
        %1664 = vmatpush2.bf16.msra.mxu0 0
        %1665 = vmatprep.subr.bf16.mxu0 0
        %1666 = vmatpush2.bf16.msra.mxu0 0
        %1667 = vmatprep.subr.bf16.mxu0 0
        %1668 = vmatpush2.bf16.msra.mxu0 0
        %1669 = vmatprep.subr.bf16.mxu0 0
        %1670 = vmatpush2.bf16.msra.mxu0 0
        %1671 = vmatprep.subr.bf16.mxu0 0
        %1672 = vmatpush2.bf16.msra.mxu0 0
        %1673 = vmatprep.subr.bf16.mxu0 0
        %1674 = vmatpush2.bf16.msra.mxu0 0
        %1675 = vmatprep.subr.bf16.mxu0 0
        %1676 = vmatpush2.bf16.msra.mxu0 0
        %1677 = vmatprep.subr.bf16.mxu0 0
        %1678 = vmatpush2.bf16.msra.mxu0 0
        %1679 = vmatprep.mubr.bf16.mxu0 0
        %1680 = vmatmul.mubr.bf16.gmra.mxu0 %v1642
        %v1681 = vpop.f32.mrf.mxu0
        %v1682 = vadd.f32 0.0, %v1681
        %v1683 = vpop.f32.mrf.mxu0
        %v1684 = vpop.f32.mrf.mxu0
        %v1685 = vpop.f32.mrf.mxu0
        %1686 = vdwg.mxu0
        %v1687 = vpack.c.bf16 %v1544, %v1544
        %v1688 = vpack.c.bf16 %v1590, %v1590
        %v1689 = vpack.c.bf16 %v1636, %v1636
        %v1690 = vpack.c.bf16 %v1682, %v1682
        %v1691 = vld [vmem:[%s6] sm:$0xf]
        %v1692 = vld [vmem:[%s6 + $0x4] sm:$0xf]
        %v1693 = vld [vmem:[%s6 + $0x8] sm:$0xf]
        %v1694 = vld [vmem:[%s6 + $0xc] sm:$0xf]
        %v1696 = vsel %vm1265, %v1687, 0
        %v1699 = vsel %vm1505, %v1691, 0
        %1701 = vmatprep.subr.bf16.mxu0 0
        %1702 = vmatpush1.bf16.msra.mxu0 0
        %1703 = vmatprep.subr.bf16.mxu0 0
        %1704 = vmatpush1.bf16.msra.mxu0 0
        %1705 = vmatprep.subr.bf16.mxu0 0
        %1706 = vmatpush1.bf16.msra.mxu0 0
        %1707 = vmatprep.subr.bf16.mxu0 0
        %1708 = vmatpush1.bf16.msra.mxu0 0
        %1709 = vmatprep.subr.bf16.mxu0 0
        %1710 = vmatpush1.bf16.msra.mxu0 0
        %1711 = vmatprep.subr.bf16.mxu0 0
        %1712 = vmatpush1.bf16.msra.mxu0 0
        %1713 = vmatprep.subr.bf16.mxu0 0
        %1714 = vmatpush1.bf16.msra.mxu0 0
        %1715 = vmatprep.subr.bf16.mxu0 0
        %1716 = vmatpush1.bf16.msra.mxu0 %v1699
        %1717 = vmatprep.subr.bf16.mxu0 0
        %1718 = vmatpush2.bf16.msra.mxu0 0
        %1719 = vmatprep.subr.bf16.mxu0 0
        %1720 = vmatpush2.bf16.msra.mxu0 0
        %1721 = vmatprep.subr.bf16.mxu0 0
        %1722 = vmatpush2.bf16.msra.mxu0 0
        %1723 = vmatprep.subr.bf16.mxu0 0
        %1724 = vmatpush2.bf16.msra.mxu0 0
        %1725 = vmatprep.subr.bf16.mxu0 0
        %1726 = vmatpush2.bf16.msra.mxu0 0
        %1727 = vmatprep.subr.bf16.mxu0 0
        %1728 = vmatpush2.bf16.msra.mxu0 0
        %1729 = vmatprep.subr.bf16.mxu0 0
        %1730 = vmatpush2.bf16.msra.mxu0 0
        %1731 = vmatprep.subr.bf16.mxu0 0
        %1732 = vmatpush2.bf16.msra.mxu0 0
        %1733 = vmatprep.mubr.bf16.mxu0 0
        %1734 = vmatmul.mubr.bf16.gmra.mxu0 %v1696
        %v1735 = vpop.f32.mrf.mxu0
        %v1736 = vadd.f32 0.0, %v1735
        %v1737 = vpop.f32.mrf.mxu0
        %v1738 = vpop.f32.mrf.mxu0
        %v1739 = vpop.f32.mrf.mxu0
        %1740 = vdwg.mxu0
        %v1742 = vsel %vm1265, %v1688, 0
        %v1745 = vsel %vm1505, %v1692, 0
        %1747 = vmatprep.subr.bf16.mxu0 0
        %1748 = vmatpush1.bf16.msra.mxu0 0
        %1749 = vmatprep.subr.bf16.mxu0 0
        %1750 = vmatpush1.bf16.msra.mxu0 0
        %1751 = vmatprep.subr.bf16.mxu0 0
        %1752 = vmatpush1.bf16.msra.mxu0 0
        %1753 = vmatprep.subr.bf16.mxu0 0
        %1754 = vmatpush1.bf16.msra.mxu0 0
        %1755 = vmatprep.subr.bf16.mxu0 0
        %1756 = vmatpush1.bf16.msra.mxu0 0
        %1757 = vmatprep.subr.bf16.mxu0 0
        %1758 = vmatpush1.bf16.msra.mxu0 0
        %1759 = vmatprep.subr.bf16.mxu0 0
        %1760 = vmatpush1.bf16.msra.mxu0 0
        %1761 = vmatprep.subr.bf16.mxu0 0
        %1762 = vmatpush1.bf16.msra.mxu0 %v1745
        %1763 = vmatprep.subr.bf16.mxu0 0
        %1764 = vmatpush2.bf16.msra.mxu0 0
        %1765 = vmatprep.subr.bf16.mxu0 0
        %1766 = vmatpush2.bf16.msra.mxu0 0
        %1767 = vmatprep.subr.bf16.mxu0 0
        %1768 = vmatpush2.bf16.msra.mxu0 0
        %1769 = vmatprep.subr.bf16.mxu0 0
        %1770 = vmatpush2.bf16.msra.mxu0 0
        %1771 = vmatprep.subr.bf16.mxu0 0
        %1772 = vmatpush2.bf16.msra.mxu0 0
        %1773 = vmatprep.subr.bf16.mxu0 0
        %1774 = vmatpush2.bf16.msra.mxu0 0
        %1775 = vmatprep.subr.bf16.mxu0 0
        %1776 = vmatpush2.bf16.msra.mxu0 0
        %1777 = vmatprep.subr.bf16.mxu0 0
        %1778 = vmatpush2.bf16.msra.mxu0 0
        %1779 = vmatprep.mubr.bf16.mxu0 0
        %1780 = vmatmul.mubr.bf16.gmra.mxu0 %v1742
        %v1781 = vpop.f32.mrf.mxu0
        %v1782 = vadd.f32 0.0, %v1781
        %v1783 = vpop.f32.mrf.mxu0
        %v1784 = vpop.f32.mrf.mxu0
        %v1785 = vpop.f32.mrf.mxu0
        %1786 = vdwg.mxu0
        %v1788 = vsel %vm1265, %v1689, 0
        %v1791 = vsel %vm1505, %v1693, 0
        %1793 = vmatprep.subr.bf16.mxu0 0
        %1794 = vmatpush1.bf16.msra.mxu0 0
        %1795 = vmatprep.subr.bf16.mxu0 0
        %1796 = vmatpush1.bf16.msra.mxu0 0
        %1797 = vmatprep.subr.bf16.mxu0 0
        %1798 = vmatpush1.bf16.msra.mxu0 0
        %1799 = vmatprep.subr.bf16.mxu0 0
        %1800 = vmatpush1.bf16.msra.mxu0 0
        %1801 = vmatprep.subr.bf16.mxu0 0
        %1802 = vmatpush1.bf16.msra.mxu0 0
        %1803 = vmatprep.subr.bf16.mxu0 0
        %1804 = vmatpush1.bf16.msra.mxu0 0
        %1805 = vmatprep.subr.bf16.mxu0 0
        %1806 = vmatpush1.bf16.msra.mxu0 0
        %1807 = vmatprep.subr.bf16.mxu0 0
        %1808 = vmatpush1.bf16.msra.mxu0 %v1791
        %1809 = vmatprep.subr.bf16.mxu0 0
        %1810 = vmatpush2.bf16.msra.mxu0 0
        %1811 = vmatprep.subr.bf16.mxu0 0
        %1812 = vmatpush2.bf16.msra.mxu0 0
        %1813 = vmatprep.subr.bf16.mxu0 0
        %1814 = vmatpush2.bf16.msra.mxu0 0
        %1815 = vmatprep.subr.bf16.mxu0 0
        %1816 = vmatpush2.bf16.msra.mxu0 0
        %1817 = vmatprep.subr.bf16.mxu0 0
        %1818 = vmatpush2.bf16.msra.mxu0 0
        %1819 = vmatprep.subr.bf16.mxu0 0
        %1820 = vmatpush2.bf16.msra.mxu0 0
        %1821 = vmatprep.subr.bf16.mxu0 0
        %1822 = vmatpush2.bf16.msra.mxu0 0
        %1823 = vmatprep.subr.bf16.mxu0 0
        %1824 = vmatpush2.bf16.msra.mxu0 0
        %1825 = vmatprep.mubr.bf16.mxu0 0
        %1826 = vmatmul.mubr.bf16.gmra.mxu0 %v1788
        %v1827 = vpop.f32.mrf.mxu0
        %v1828 = vadd.f32 0.0, %v1827
        %v1829 = vpop.f32.mrf.mxu0
        %v1830 = vpop.f32.mrf.mxu0
        %v1831 = vpop.f32.mrf.mxu0
        %1832 = vdwg.mxu0
        %v1834 = vsel %vm1265, %v1690, 0
        %v1837 = vsel %vm1505, %v1694, 0
        %1839 = vmatprep.subr.bf16.mxu0 0
        %1840 = vmatpush1.bf16.msra.mxu0 0
        %1841 = vmatprep.subr.bf16.mxu0 0
        %1842 = vmatpush1.bf16.msra.mxu0 0
        %1843 = vmatprep.subr.bf16.mxu0 0
        %1844 = vmatpush1.bf16.msra.mxu0 0
        %1845 = vmatprep.subr.bf16.mxu0 0
        %1846 = vmatpush1.bf16.msra.mxu0 0
        %1847 = vmatprep.subr.bf16.mxu0 0
        %1848 = vmatpush1.bf16.msra.mxu0 0
        %1849 = vmatprep.subr.bf16.mxu0 0
        %1850 = vmatpush1.bf16.msra.mxu0 0
        %1851 = vmatprep.subr.bf16.mxu0 0
        %1852 = vmatpush1.bf16.msra.mxu0 0
        %1853 = vmatprep.subr.bf16.mxu0 0
        %1854 = vmatpush1.bf16.msra.mxu0 %v1837
        %1855 = vmatprep.subr.bf16.mxu0 0
        %1856 = vmatpush2.bf16.msra.mxu0 0
        %1857 = vmatprep.subr.bf16.mxu0 0
        %1858 = vmatpush2.bf16.msra.mxu0 0
        %1859 = vmatprep.subr.bf16.mxu0 0
        %1860 = vmatpush2.bf16.msra.mxu0 0
        %1861 = vmatprep.subr.bf16.mxu0 0
        %1862 = vmatpush2.bf16.msra.mxu0 0
        %1863 = vmatprep.subr.bf16.mxu0 0
        %1864 = vmatpush2.bf16.msra.mxu0 0
        %1865 = vmatprep.subr.bf16.mxu0 0
        %1866 = vmatpush2.bf16.msra.mxu0 0
        %1867 = vmatprep.subr.bf16.mxu0 0
        %1868 = vmatpush2.bf16.msra.mxu0 0
        %1869 = vmatprep.subr.bf16.mxu0 0
        %1870 = vmatpush2.bf16.msra.mxu0 0
        %1871 = vmatprep.mubr.bf16.mxu0 0
        %1872 = vmatmul.mubr.bf16.gmra.mxu0 %v1834
        %v1873 = vpop.f32.mrf.mxu0
        %v1874 = vadd.f32 0.0, %v1873
        %v1875 = vpop.f32.mrf.mxu0
        %v1876 = vpop.f32.mrf.mxu0
        %v1877 = vpop.f32.mrf.mxu0
        %1878 = vdwg.mxu0
        %v1879 = vsel %vm468, %v1736, 0.0
        %v1880 = vsel %vm468, %v1782, 0.0
        %v1881 = vadd.f32 %v1879, %v1880
        %v1882 = vsel %vm468, %v1828, 0.0
        %v1883 = vadd.f32 %v1881, %v1882
        %v1884 = vsel %vm468, %v1874, 0.0
        %v1885 = vadd.f32 %v1883, %v1884
        %v1886 = vadd.f32 %v464, %v1885
        %v1887 = vld [vmem:[%s7] sm:$0x1]
        %v1889 = vlaneseq
        %v1890 = vshrl.u32 %v1889, 7
        %v1891 = vsub.s32 0, %v1890
        %v1892 = vrot.slane %v1887, %v1891
        %v1894 = vadd.f32 %v1886, %v1892
        %v1895 = vld [vmem:[%s8] sm:$0x1]
        %v1896 = vld [vmem:[%s9] sm:$0x1]
        %v1897 = vsel %vm468, %v1894, 0.0
        %1898 = vadd.xlane.f32.xlu0 %v1897
        %v1899 = vpop.xlane.xlu0 %1898
        %v1900 = vmul.f32 %v1899, %v472
        %v1901 = vsub.f32 %v1894, %v1900
        %v1902 = vmul.f32 %v1901, %v1901
        %v1903 = vsel %vm468, %v1902, 0.0
        %1904 = vadd.xlane.f32.xlu0 %v1903
        %v1905 = vpop.xlane.xlu0 %1904
        %v1906 = vmul.f32 %v1905, %v472
        %v1907 = vadd.f32 %v1906, 1e-05
        %v1908 = vrsqrt.pop %v1907
        %v1909 = vmul.f32 %v1901, %v1908
        %v1911 = vlaneseq
        %v1912 = vshrl.u32 %v1911, 7
        %v1913 = vsub.s32 0, %v1912
        %v1914 = vrot.slane %v1895, %v1913
        %v1916 = vmul.f32 %v1909, %v1914
        %v1918 = vlaneseq
        %v1919 = vshrl.u32 %v1918, 7
        %v1920 = vsub.s32 0, %v1919
        %v1921 = vrot.slane %v1896, %v1920
        %v1923 = vadd.f32 %v1916, %v1921
        %v1924 = vpack.c.bf16 %v1923, %v1923
        %v1925 = vld [vmem:[%s10] sm:$0xf]
        %v1926 = vld [vmem:[%s10 + $0x4] sm:$0xf]
        %v1927 = vld [vmem:[%s10 + $0x8] sm:$0xf]
        %v1928 = vld [vmem:[%s10 + $0xc] sm:$0xf]
        %v1929 = vld [vmem:[%s11] sm:$0x1]
        %v1931 = vlaneseq
        %v1932 = vshrl.u32 %v1931, 7
        %v1933 = vsub.s32 0, %v1932
        %v1934 = vrot.slane %v1929, %v1933
        %v1940 = vunpack.c.l.b16 %v1925
        %v1941 = vunpack.c.l.b16 %v1926
        %v1942 = vunpack.c.l.b16 %v1927
        %v1943 = vunpack.c.l.b16 %v1928
        %v1944 = vpack.c.b16 %v1941, %v1940
        %v1945 = vpack.c.b16 %v1943, %v1942
        %v1949 = vsel %vm468, %v1924, 0
        %1951 = vmatprep.subr.bf16.mxu0 0
        %1952 = vmatpush1.bf16.msra.mxu0 0
        %1953 = vmatprep.subr.bf16.mxu0 0
        %1954 = vmatpush1.bf16.msra.mxu0 0
        %1955 = vmatprep.subr.bf16.mxu0 0
        %1956 = vmatpush1.bf16.msra.mxu0 0
        %1957 = vmatprep.subr.bf16.mxu0 0
        %1958 = vmatpush1.bf16.msra.mxu0 0
        %1959 = vmatprep.subr.bf16.mxu0 0
        %1960 = vmatpush1.bf16.msra.mxu0 0
        %1961 = vmatprep.subr.bf16.mxu0 0
        %1962 = vmatpush1.bf16.msra.mxu0 0
        %1963 = vmatprep.subr.bf16.mxu0 0
        %1964 = vmatpush1.bf16.msra.mxu0 %v1945
        %1965 = vmatprep.subr.bf16.mxu0 0
        %1966 = vmatpush1.bf16.msra.mxu0 %v1944
        %1967 = vmatprep.subr.bf16.mxu0 0
        %1968 = vmatpush2.bf16.msra.mxu0 0
        %1969 = vmatprep.subr.bf16.mxu0 0
        %1970 = vmatpush2.bf16.msra.mxu0 0
        %1971 = vmatprep.subr.bf16.mxu0 0
        %1972 = vmatpush2.bf16.msra.mxu0 0
        %1973 = vmatprep.subr.bf16.mxu0 0
        %1974 = vmatpush2.bf16.msra.mxu0 0
        %1975 = vmatprep.subr.bf16.mxu0 0
        %1976 = vmatpush2.bf16.msra.mxu0 0
        %1977 = vmatprep.subr.bf16.mxu0 0
        %1978 = vmatpush2.bf16.msra.mxu0 0
        %1979 = vmatprep.subr.bf16.mxu0 0
        %1980 = vmatpush2.bf16.msra.mxu0 0
        %1981 = vmatprep.subr.bf16.mxu0 0
        %1982 = vmatpush2.bf16.msra.mxu0 0
        %1983 = vmatprep.mubr.bf16.mxu0 0
        %1984 = vmatmul.mubr.bf16.gmra.mxu0 %v1949
        %v1985 = vpop.f32.mrf.mxu0
        %v1986 = vadd.f32 %v1934, %v1985
        %v1987 = vpop.f32.mrf.mxu0
        %v1988 = vpop.f32.mrf.mxu0
        %v1989 = vpop.f32.mrf.mxu0
        %1990 = vdwg.mxu0
        %v1991 = vmul.f32 %v1986, 0.5
        %v1992 = vmul.f32 %v1986, 0.044715
        %v1993 = vmul.f32 %v1992, %v1986
        %v1994 = vmul.f32 %v1993, %v1986
        %v1995 = vadd.f32 %v1986, %v1994
        %v1996 = vmul.f32 %v1995, 0.7978846
        %v1997 = vtanh.pop %v1996
        %v1998 = vadd.f32 %v1997, 1.0
        %v1999 = vmul.f32 %v1991, %v1998
        %v2000 = vpack.c.bf16 %v1999, %v1999
        %v2001 = vld [vmem:[%s12] sm:$0xf]
        %v2002 = vld [vmem:[%s12 + $0x4] sm:$0xf]
        %v2003 = vld [vmem:[%s12 + $0x8] sm:$0xf]
        %v2004 = vld [vmem:[%s12 + $0xc] sm:$0xf]
        %v2005 = vld [vmem:[%s12 + $0x10] sm:$0xf]
        %v2006 = vld [vmem:[%s12 + $0x14] sm:$0xf]
        %v2007 = vld [vmem:[%s12 + $0x18] sm:$0xf]
        %v2008 = vld [vmem:[%s12 + $0x1c] sm:$0xf]
        %v2009 = vld [vmem:[%s12 + $0x20] sm:$0xf]
        %v2010 = vld [vmem:[%s12 + $0x24] sm:$0xf]
        %v2011 = vld [vmem:[%s12 + $0x28] sm:$0xf]
        %v2012 = vld [vmem:[%s12 + $0x2c] sm:$0xf]
        %v2013 = vld [vmem:[%s12 + $0x30] sm:$0xf]
        %v2014 = vld [vmem:[%s12 + $0x34] sm:$0xf]
        %v2015 = vld [vmem:[%s12 + $0x38] sm:$0xf]
        %v2016 = vld [vmem:[%s12 + $0x3c] sm:$0xf]
        %v2033 = vunpack.c.l.b16 %v2001
        %v2034 = vunpack.c.l.b16 %v2002
        %v2035 = vunpack.c.l.b16 %v2003
        %v2036 = vunpack.c.l.b16 %v2004
        %v2037 = vunpack.c.l.b16 %v2005
        %v2038 = vunpack.c.l.b16 %v2006
        %v2039 = vunpack.c.l.b16 %v2007
        %v2040 = vunpack.c.l.b16 %v2008
        %v2041 = vunpack.c.l.b16 %v2009
        %v2042 = vunpack.c.l.b16 %v2010
        %v2043 = vunpack.c.l.b16 %v2011
        %v2044 = vunpack.c.l.b16 %v2012
        %v2045 = vunpack.c.l.b16 %v2013
        %v2046 = vunpack.c.l.b16 %v2014
        %v2047 = vunpack.c.l.b16 %v2015
        %v2048 = vunpack.c.l.b16 %v2016
        %v2049 = vpack.c.b16 %v2034, %v2033
        %v2050 = vpack.c.b16 %v2036, %v2035
        %v2051 = vpack.c.b16 %v2038, %v2037
        %v2052 = vpack.c.b16 %v2040, %v2039
        %v2053 = vpack.c.b16 %v2042, %v2041
        %v2054 = vpack.c.b16 %v2044, %v2043
        %v2055 = vpack.c.b16 %v2046, %v2045
        %v2056 = vpack.c.b16 %v2048, %v2047
        %2065 = vmatprep.subr.bf16.mxu0 0
        %2066 = vmatpush1.bf16.msra.mxu0 %v2056
        %2067 = vmatprep.subr.bf16.mxu0 0
        %2068 = vmatpush1.bf16.msra.mxu0 %v2055
        %2069 = vmatprep.subr.bf16.mxu0 0
        %2070 = vmatpush1.bf16.msra.mxu0 %v2054
        %2071 = vmatprep.subr.bf16.mxu0 0
        %2072 = vmatpush1.bf16.msra.mxu0 %v2053
        %2073 = vmatprep.subr.bf16.mxu0 0
        %2074 = vmatpush1.bf16.msra.mxu0 %v2052
        %2075 = vmatprep.subr.bf16.mxu0 0
        %2076 = vmatpush1.bf16.msra.mxu0 %v2051
        %2077 = vmatprep.subr.bf16.mxu0 0
        %2078 = vmatpush1.bf16.msra.mxu0 %v2050
        %2079 = vmatprep.subr.bf16.mxu0 0
        %2080 = vmatpush1.bf16.msra.mxu0 %v2049
        %2081 = vmatprep.subr.bf16.mxu0 0
        %2082 = vmatpush2.bf16.msra.mxu0 0
        %2083 = vmatprep.subr.bf16.mxu0 0
        %2084 = vmatpush2.bf16.msra.mxu0 0
        %2085 = vmatprep.subr.bf16.mxu0 0
        %2086 = vmatpush2.bf16.msra.mxu0 0
        %2087 = vmatprep.subr.bf16.mxu0 0
        %2088 = vmatpush2.bf16.msra.mxu0 0
        %2089 = vmatprep.subr.bf16.mxu0 0
        %2090 = vmatpush2.bf16.msra.mxu0 0
        %2091 = vmatprep.subr.bf16.mxu0 0
        %2092 = vmatpush2.bf16.msra.mxu0 0
        %2093 = vmatprep.subr.bf16.mxu0 0
        %2094 = vmatpush2.bf16.msra.mxu0 0
        %2095 = vmatprep.subr.bf16.mxu0 0
        %2096 = vmatpush2.bf16.msra.mxu0 0
        %2097 = vmatprep.mubr.bf16.mxu0 0
        %2098 = vmatmul.mubr.bf16.gmra.mxu0 %v2000
        %v2099 = vpop.f32.mrf.mxu0
        %v2100 = vadd.f32 0.0, %v2099
        %v2101 = vpop.f32.mrf.mxu0
        %v2102 = vpop.f32.mrf.mxu0
        %v2103 = vpop.f32.mrf.mxu0
        %2104 = vdwg.mxu0
        %v2105 = vadd.f32 %v1894, %v2100
        %v2106 = vld [vmem:[%s13] sm:$0x1]
        %v2108 = vlaneseq
        %v2109 = vshrl.u32 %v2108, 7
        %v2110 = vsub.s32 0, %v2109
        %v2111 = vrot.slane %v2106, %v2110
        %v2113 = vadd.f32 %v2105, %v2111
        %s2114 = scalar_lea.vmem %s2, 1
        %v2115 = vld [vmem:[%s2114] sm:$0x1]
        %s2116 = scalar_lea.vmem %s3, 1
        %v2117 = vld [vmem:[%s2116] sm:$0x1]
        %v2118 = vsel %vm468, %v2113, 0.0
        %2119 = vadd.xlane.f32.xlu0 %v2118
        %v2120 = vpop.xlane.xlu0 %2119
        %v2121 = vmul.f32 %v2120, %v472
        %v2122 = vsub.f32 %v2113, %v2121
        %v2123 = vmul.f32 %v2122, %v2122
        %v2124 = vsel %vm468, %v2123, 0.0
        %2125 = vadd.xlane.f32.xlu0 %v2124
        %v2126 = vpop.xlane.xlu0 %2125
        %v2127 = vmul.f32 %v2126, %v472
        %v2128 = vadd.f32 %v2127, 1e-05
        %v2129 = vrsqrt.pop %v2128
        %v2130 = vmul.f32 %v2122, %v2129
        %v2132 = vlaneseq
        %v2133 = vshrl.u32 %v2132, 7
        %v2134 = vsub.s32 0, %v2133
        %v2135 = vrot.slane %v2115, %v2134
        %v2137 = vmul.f32 %v2130, %v2135
        %v2139 = vlaneseq
        %v2140 = vshrl.u32 %v2139, 7
        %v2141 = vsub.s32 0, %v2140
        %v2142 = vrot.slane %v2117, %v2141
        %v2144 = vadd.f32 %v2137, %v2142
        %v2145 = vpack.c.bf16 %v2144, %v2144
        %s2146 = scalar_lea.vmem %s4, 192
        %v2147 = vld [vmem:[%s2146] sm:$0xf]
        %v2148 = vld [vmem:[%s2146 + $0x4] sm:$0xf]
        %v2149 = vld [vmem:[%s2146 + $0x8] sm:$0xf]
        %v2150 = vld [vmem:[%s2146 + $0xc] sm:$0xf]
        %v2151 = vld [vmem:[%s2146 + $0x10] sm:$0xf]
        %v2152 = vld [vmem:[%s2146 + $0x14] sm:$0xf]
        %v2153 = vld [vmem:[%s2146 + $0x18] sm:$0xf]
        %v2154 = vld [vmem:[%s2146 + $0x1c] sm:$0xf]
        %v2155 = vld [vmem:[%s2146 + $0x20] sm:$0xf]
        %v2156 = vld [vmem:[%s2146 + $0x24] sm:$0xf]
        %v2157 = vld [vmem:[%s2146 + $0x28] sm:$0xf]
        %v2158 = vld [vmem:[%s2146 + $0x2c] sm:$0xf]
        %v2159 = vld [vmem:[%s2146 + $0x30] sm:$0xf]
        %v2160 = vld [vmem:[%s2146 + $0x34] sm:$0xf]
        %v2161 = vld [vmem:[%s2146 + $0x38] sm:$0xf]
        %v2162 = vld [vmem:[%s2146 + $0x3c] sm:$0xf]
        %v2163 = vld [vmem:[%s2146 + $0x40] sm:$0xf]
        %v2164 = vld [vmem:[%s2146 + $0x44] sm:$0xf]
        %v2165 = vld [vmem:[%s2146 + $0x48] sm:$0xf]
        %v2166 = vld [vmem:[%s2146 + $0x4c] sm:$0xf]
        %v2167 = vld [vmem:[%s2146 + $0x50] sm:$0xf]
        %v2168 = vld [vmem:[%s2146 + $0x54] sm:$0xf]
        %v2169 = vld [vmem:[%s2146 + $0x58] sm:$0xf]
        %v2170 = vld [vmem:[%s2146 + $0x5c] sm:$0xf]
        %v2171 = vld [vmem:[%s2146 + $0x60] sm:$0xf]
        %v2172 = vld [vmem:[%s2146 + $0x64] sm:$0xf]
        %v2173 = vld [vmem:[%s2146 + $0x68] sm:$0xf]
        %v2174 = vld [vmem:[%s2146 + $0x6c] sm:$0xf]
        %v2175 = vld [vmem:[%s2146 + $0x70] sm:$0xf]
        %v2176 = vld [vmem:[%s2146 + $0x74] sm:$0xf]
        %v2177 = vld [vmem:[%s2146 + $0x78] sm:$0xf]
        %v2178 = vld [vmem:[%s2146 + $0x7c] sm:$0xf]
        %v2179 = vld [vmem:[%s2146 + $0x80] sm:$0xf]
        %v2180 = vld [vmem:[%s2146 + $0x84] sm:$0xf]
        %v2181 = vld [vmem:[%s2146 + $0x88] sm:$0xf]
        %v2182 = vld [vmem:[%s2146 + $0x8c] sm:$0xf]
        %v2183 = vld [vmem:[%s2146 + $0x90] sm:$0xf]
        %v2184 = vld [vmem:[%s2146 + $0x94] sm:$0xf]
        %v2185 = vld [vmem:[%s2146 + $0x98] sm:$0xf]
        %v2186 = vld [vmem:[%s2146 + $0x9c] sm:$0xf]
        %v2187 = vld [vmem:[%s2146 + $0xa0] sm:$0xf]
        %v2188 = vld [vmem:[%s2146 + $0xa4] sm:$0xf]
        %v2189 = vld [vmem:[%s2146 + $0xa8] sm:$0xf]
        %v2190 = vld [vmem:[%s2146 + $0xac] sm:$0xf]
        %v2191 = vld [vmem:[%s2146 + $0xb0] sm:$0xf]
        %v2192 = vld [vmem:[%s2146 + $0xb4] sm:$0xf]
        %v2193 = vld [vmem:[%s2146 + $0xb8] sm:$0xf]
        %v2194 = vld [vmem:[%s2146 + $0xbc] sm:$0xf]
        %s2195 = scalar_lea.vmem %s5, 12
        %v2196 = vld [vmem:[%s2195] sm:$0x1]
        %v2197 = vld [vmem:[%s2195 + $0x1] sm:$0x1]
        %v2198 = vld [vmem:[%s2195 + $0x2] sm:$0x1]
        %v2199 = vld [vmem:[%s2195 + $0x3] sm:$0x1]
        %v2200 = vld [vmem:[%s2195 + $0x4] sm:$0x1]
        %v2201 = vld [vmem:[%s2195 + $0x5] sm:$0x1]
        %v2202 = vld [vmem:[%s2195 + $0x6] sm:$0x1]
        %v2203 = vld [vmem:[%s2195 + $0x7] sm:$0x1]
        %v2204 = vld [vmem:[%s2195 + $0x8] sm:$0x1]
        %v2205 = vld [vmem:[%s2195 + $0x9] sm:$0x1]
        %v2206 = vld [vmem:[%s2195 + $0xa] sm:$0x1]
        %v2207 = vld [vmem:[%s2195 + $0xb] sm:$0x1]
        %v2220 = vlaneseq
        %v2221 = vshrl.u32 %v2220, 7
        %v2222 = vsub.s32 0, %v2221
        %v2223 = vrot.slane %v2196, %v2222
        %v2224 = vlaneseq
        %v2225 = vshrl.u32 %v2224, 7
        %v2226 = vsub.s32 0, %v2225
        %v2227 = vrot.slane %v2197, %v2226
        %v2228 = vlaneseq
        %v2229 = vshrl.u32 %v2228, 7
        %v2230 = vsub.s32 0, %v2229
        %v2231 = vrot.slane %v2198, %v2230
        %v2232 = vlaneseq
        %v2233 = vshrl.u32 %v2232, 7
        %v2234 = vsub.s32 0, %v2233
        %v2235 = vrot.slane %v2199, %v2234
        %v2236 = vlaneseq
        %v2237 = vshrl.u32 %v2236, 7
        %v2238 = vsub.s32 0, %v2237
        %v2239 = vrot.slane %v2200, %v2238
        %v2240 = vlaneseq
        %v2241 = vshrl.u32 %v2240, 7
        %v2242 = vsub.s32 0, %v2241
        %v2243 = vrot.slane %v2201, %v2242
        %v2244 = vlaneseq
        %v2245 = vshrl.u32 %v2244, 7
        %v2246 = vsub.s32 0, %v2245
        %v2247 = vrot.slane %v2202, %v2246
        %v2248 = vlaneseq
        %v2249 = vshrl.u32 %v2248, 7
        %v2250 = vsub.s32 0, %v2249
        %v2251 = vrot.slane %v2203, %v2250
        %v2252 = vlaneseq
        %v2253 = vshrl.u32 %v2252, 7
        %v2254 = vsub.s32 0, %v2253
        %v2255 = vrot.slane %v2204, %v2254
        %v2256 = vlaneseq
        %v2257 = vshrl.u32 %v2256, 7
        %v2258 = vsub.s32 0, %v2257
        %v2259 = vrot.slane %v2205, %v2258
        %v2260 = vlaneseq
        %v2261 = vshrl.u32 %v2260, 7
        %v2262 = vsub.s32 0, %v2261
        %v2263 = vrot.slane %v2206, %v2262
        %v2264 = vlaneseq
        %v2265 = vshrl.u32 %v2264, 7
        %v2266 = vsub.s32 0, %v2265
        %v2267 = vrot.slane %v2207, %v2266
        %v2284 = vunpack.c.l.b16 %v2147
        %v2285 = vunpack.c.l.b16 %v2148
        %v2286 = vunpack.c.l.b16 %v2149
        %v2287 = vunpack.c.l.b16 %v2150
        %v2288 = vpack.c.b16 %v2285, %v2284
        %v2289 = vpack.c.b16 %v2287, %v2286
        %v2293 = vsel %vm468, %v2145, 0
        %2295 = vmatprep.subr.bf16.mxu0 0
        %2296 = vmatpush1.bf16.msra.mxu0 0
        %2297 = vmatprep.subr.bf16.mxu0 0
        %2298 = vmatpush1.bf16.msra.mxu0 0
        %2299 = vmatprep.subr.bf16.mxu0 0
        %2300 = vmatpush1.bf16.msra.mxu0 0
        %2301 = vmatprep.subr.bf16.mxu0 0
        %2302 = vmatpush1.bf16.msra.mxu0 0
        %2303 = vmatprep.subr.bf16.mxu0 0
        %2304 = vmatpush1.bf16.msra.mxu0 0
        %2305 = vmatprep.subr.bf16.mxu0 0
        %2306 = vmatpush1.bf16.msra.mxu0 0
        %2307 = vmatprep.subr.bf16.mxu0 0
        %2308 = vmatpush1.bf16.msra.mxu0 %v2289
        %2309 = vmatprep.subr.bf16.mxu0 0
        %2310 = vmatpush1.bf16.msra.mxu0 %v2288
        %2311 = vmatprep.subr.bf16.mxu0 0
        %2312 = vmatpush2.bf16.msra.mxu0 0
        %2313 = vmatprep.subr.bf16.mxu0 0
        %2314 = vmatpush2.bf16.msra.mxu0 0
        %2315 = vmatprep.subr.bf16.mxu0 0
        %2316 = vmatpush2.bf16.msra.mxu0 0
        %2317 = vmatprep.subr.bf16.mxu0 0
        %2318 = vmatpush2.bf16.msra.mxu0 0
        %2319 = vmatprep.subr.bf16.mxu0 0
        %2320 = vmatpush2.bf16.msra.mxu0 0
        %2321 = vmatprep.subr.bf16.mxu0 0
        %2322 = vmatpush2.bf16.msra.mxu0 0
        %2323 = vmatprep.subr.bf16.mxu0 0
        %2324 = vmatpush2.bf16.msra.mxu0 0
        %2325 = vmatprep.subr.bf16.mxu0 0
        %2326 = vmatpush2.bf16.msra.mxu0 0
        %2327 = vmatprep.mubr.bf16.mxu0 0
        %2328 = vmatmul.mubr.bf16.gmra.mxu0 %v2293
        %v2329 = vpop.f32.mrf.mxu0
        %v2330 = vadd.f32 %v2223, %v2329
        %v2331 = vpop.f32.mrf.mxu0
        %v2332 = vpop.f32.mrf.mxu0
        %v2333 = vpop.f32.mrf.mxu0
        %2334 = vdwg.mxu0
        %v2339 = vunpack.c.l.b16 %v2151
        %v2340 = vunpack.c.l.b16 %v2152
        %v2341 = vunpack.c.l.b16 %v2153
        %v2342 = vunpack.c.l.b16 %v2154
        %v2343 = vpack.c.b16 %v2340, %v2339
        %v2344 = vpack.c.b16 %v2342, %v2341
        %2347 = vmatprep.subr.bf16.mxu0 0
        %2348 = vmatpush1.bf16.msra.mxu0 0
        %2349 = vmatprep.subr.bf16.mxu0 0
        %2350 = vmatpush1.bf16.msra.mxu0 0
        %2351 = vmatprep.subr.bf16.mxu0 0
        %2352 = vmatpush1.bf16.msra.mxu0 0
        %2353 = vmatprep.subr.bf16.mxu0 0
        %2354 = vmatpush1.bf16.msra.mxu0 0
        %2355 = vmatprep.subr.bf16.mxu0 0
        %2356 = vmatpush1.bf16.msra.mxu0 0
        %2357 = vmatprep.subr.bf16.mxu0 0
        %2358 = vmatpush1.bf16.msra.mxu0 0
        %2359 = vmatprep.subr.bf16.mxu0 0
        %2360 = vmatpush1.bf16.msra.mxu0 %v2344
        %2361 = vmatprep.subr.bf16.mxu0 0
        %2362 = vmatpush1.bf16.msra.mxu0 %v2343
        %2363 = vmatprep.subr.bf16.mxu0 0
        %2364 = vmatpush2.bf16.msra.mxu0 0
        %2365 = vmatprep.subr.bf16.mxu0 0
        %2366 = vmatpush2.bf16.msra.mxu0 0
        %2367 = vmatprep.subr.bf16.mxu0 0
        %2368 = vmatpush2.bf16.msra.mxu0 0
        %2369 = vmatprep.subr.bf16.mxu0 0
        %2370 = vmatpush2.bf16.msra.mxu0 0
        %2371 = vmatprep.subr.bf16.mxu0 0
        %2372 = vmatpush2.bf16.msra.mxu0 0
        %2373 = vmatprep.subr.bf16.mxu0 0
        %2374 = vmatpush2.bf16.msra.mxu0 0
        %2375 = vmatprep.subr.bf16.mxu0 0
        %2376 = vmatpush2.bf16.msra.mxu0 0
        %2377 = vmatprep.subr.bf16.mxu0 0
        %2378 = vmatpush2.bf16.msra.mxu0 0
        %2379 = vmatprep.mubr.bf16.mxu0 0
        %2380 = vmatmul.mubr.bf16.gmra.mxu0 %v2293
        %v2381 = vpop.f32.mrf.mxu0
        %v2382 = vadd.f32 %v2227, %v2381
        %v2383 = vpop.f32.mrf.mxu0
        %v2384 = vpop.f32.mrf.mxu0
        %v2385 = vpop.f32.mrf.mxu0
        %2386 = vdwg.mxu0
        %v2391 = vunpack.c.l.b16 %v2155
        %v2392 = vunpack.c.l.b16 %v2156
        %v2393 = vunpack.c.l.b16 %v2157
        %v2394 = vunpack.c.l.b16 %v2158
        %v2395 = vpack.c.b16 %v2392, %v2391
        %v2396 = vpack.c.b16 %v2394, %v2393
        %2399 = vmatprep.subr.bf16.mxu0 0
        %2400 = vmatpush1.bf16.msra.mxu0 0
        %2401 = vmatprep.subr.bf16.mxu0 0
        %2402 = vmatpush1.bf16.msra.mxu0 0
        %2403 = vmatprep.subr.bf16.mxu0 0
        %2404 = vmatpush1.bf16.msra.mxu0 0
        %2405 = vmatprep.subr.bf16.mxu0 0
        %2406 = vmatpush1.bf16.msra.mxu0 0
        %2407 = vmatprep.subr.bf16.mxu0 0
        %2408 = vmatpush1.bf16.msra.mxu0 0
        %2409 = vmatprep.subr.bf16.mxu0 0
        %2410 = vmatpush1.bf16.msra.mxu0 0
        %2411 = vmatprep.subr.bf16.mxu0 0
        %2412 = vmatpush1.bf16.msra.mxu0 %v2396
        %2413 = vmatprep.subr.bf16.mxu0 0
        %2414 = vmatpush1.bf16.msra.mxu0 %v2395
        %2415 = vmatprep.subr.bf16.mxu0 0
        %2416 = vmatpush2.bf16.msra.mxu0 0
        %2417 = vmatprep.subr.bf16.mxu0 0
        %2418 = vmatpush2.bf16.msra.mxu0 0
        %2419 = vmatprep.subr.bf16.mxu0 0
        %2420 = vmatpush2.bf16.msra.mxu0 0
        %2421 = vmatprep.subr.bf16.mxu0 0
        %2422 = vmatpush2.bf16.msra.mxu0 0
        %2423 = vmatprep.subr.bf16.mxu0 0
        %2424 = vmatpush2.bf16.msra.mxu0 0
        %2425 = vmatprep.subr.bf16.mxu0 0
        %2426 = vmatpush2.bf16.msra.mxu0 0
        %2427 = vmatprep.subr.bf16.mxu0 0
        %2428 = vmatpush2.bf16.msra.mxu0 0
        %2429 = vmatprep.subr.bf16.mxu0 0
        %2430 = vmatpush2.bf16.msra.mxu0 0
        %2431 = vmatprep.mubr.bf16.mxu0 0
        %2432 = vmatmul.mubr.bf16.gmra.mxu0 %v2293
        %v2433 = vpop.f32.mrf.mxu0
        %v2434 = vadd.f32 %v2231, %v2433
        %v2435 = vpop.f32.mrf.mxu0
        %v2436 = vpop.f32.mrf.mxu0
        %v2437 = vpop.f32.mrf.mxu0
        %2438 = vdwg.mxu0
        %v2443 = vunpack.c.l.b16 %v2159
        %v2444 = vunpack.c.l.b16 %v2160
        %v2445 = vunpack.c.l.b16 %v2161
        %v2446 = vunpack.c.l.b16 %v2162
        %v2447 = vpack.c.b16 %v2444, %v2443
        %v2448 = vpack.c.b16 %v2446, %v2445
        %2451 = vmatprep.subr.bf16.mxu0 0
        %2452 = vmatpush1.bf16.msra.mxu0 0
        %2453 = vmatprep.subr.bf16.mxu0 0
        %2454 = vmatpush1.bf16.msra.mxu0 0
        %2455 = vmatprep.subr.bf16.mxu0 0
        %2456 = vmatpush1.bf16.msra.mxu0 0
        %2457 = vmatprep.subr.bf16.mxu0 0
        %2458 = vmatpush1.bf16.msra.mxu0 0
        %2459 = vmatprep.subr.bf16.mxu0 0
        %2460 = vmatpush1.bf16.msra.mxu0 0
        %2461 = vmatprep.subr.bf16.mxu0 0
        %2462 = vmatpush1.bf16.msra.mxu0 0
        %2463 = vmatprep.subr.bf16.mxu0 0
        %2464 = vmatpush1.bf16.msra.mxu0 %v2448
        %2465 = vmatprep.subr.bf16.mxu0 0
        %2466 = vmatpush1.bf16.msra.mxu0 %v2447
        %2467 = vmatprep.subr.bf16.mxu0 0
        %2468 = vmatpush2.bf16.msra.mxu0 0
        %2469 = vmatprep.subr.bf16.mxu0 0
        %2470 = vmatpush2.bf16.msra.mxu0 0
        %2471 = vmatprep.subr.bf16.mxu0 0
        %2472 = vmatpush2.bf16.msra.mxu0 0
        %2473 = vmatprep.subr.bf16.mxu0 0
        %2474 = vmatpush2.bf16.msra.mxu0 0
        %2475 = vmatprep.subr.bf16.mxu0 0
        %2476 = vmatpush2.bf16.msra.mxu0 0
        %2477 = vmatprep.subr.bf16.mxu0 0
        %2478 = vmatpush2.bf16.msra.mxu0 0
        %2479 = vmatprep.subr.bf16.mxu0 0
        %2480 = vmatpush2.bf16.msra.mxu0 0
        %2481 = vmatprep.subr.bf16.mxu0 0
        %2482 = vmatpush2.bf16.msra.mxu0 0
        %2483 = vmatprep.mubr.bf16.mxu0 0
        %2484 = vmatmul.mubr.bf16.gmra.mxu0 %v2293
        %v2485 = vpop.f32.mrf.mxu0
        %v2486 = vadd.f32 %v2235, %v2485
        %v2487 = vpop.f32.mrf.mxu0
        %v2488 = vpop.f32.mrf.mxu0
        %v2489 = vpop.f32.mrf.mxu0
        %2490 = vdwg.mxu0
        %v2495 = vunpack.c.l.b16 %v2163
        %v2496 = vunpack.c.l.b16 %v2164
        %v2497 = vunpack.c.l.b16 %v2165
        %v2498 = vunpack.c.l.b16 %v2166
        %v2499 = vpack.c.b16 %v2496, %v2495
        %v2500 = vpack.c.b16 %v2498, %v2497
        %2503 = vmatprep.subr.bf16.mxu0 0
        %2504 = vmatpush1.bf16.msra.mxu0 0
        %2505 = vmatprep.subr.bf16.mxu0 0
        %2506 = vmatpush1.bf16.msra.mxu0 0
        %2507 = vmatprep.subr.bf16.mxu0 0
        %2508 = vmatpush1.bf16.msra.mxu0 0
        %2509 = vmatprep.subr.bf16.mxu0 0
        %2510 = vmatpush1.bf16.msra.mxu0 0
        %2511 = vmatprep.subr.bf16.mxu0 0
        %2512 = vmatpush1.bf16.msra.mxu0 0
        %2513 = vmatprep.subr.bf16.mxu0 0
        %2514 = vmatpush1.bf16.msra.mxu0 0
        %2515 = vmatprep.subr.bf16.mxu0 0
        %2516 = vmatpush1.bf16.msra.mxu0 %v2500
        %2517 = vmatprep.subr.bf16.mxu0 0
        %2518 = vmatpush1.bf16.msra.mxu0 %v2499
        %2519 = vmatprep.subr.bf16.mxu0 0
        %2520 = vmatpush2.bf16.msra.mxu0 0
        %2521 = vmatprep.subr.bf16.mxu0 0
        %2522 = vmatpush2.bf16.msra.mxu0 0
        %2523 = vmatprep.subr.bf16.mxu0 0
        %2524 = vmatpush2.bf16.msra.mxu0 0
        %2525 = vmatprep.subr.bf16.mxu0 0
        %2526 = vmatpush2.bf16.msra.mxu0 0
        %2527 = vmatprep.subr.bf16.mxu0 0
        %2528 = vmatpush2.bf16.msra.mxu0 0
        %2529 = vmatprep.subr.bf16.mxu0 0
        %2530 = vmatpush2.bf16.msra.mxu0 0
        %2531 = vmatprep.subr.bf16.mxu0 0
        %2532 = vmatpush2.bf16.msra.mxu0 0
        %2533 = vmatprep.subr.bf16.mxu0 0
        %2534 = vmatpush2.bf16.msra.mxu0 0
        %2535 = vmatprep.mubr.bf16.mxu0 0
        %2536 = vmatmul.mubr.bf16.gmra.mxu0 %v2293
        %v2537 = vpop.f32.mrf.mxu0
        %v2538 = vadd.f32 %v2239, %v2537
        %v2539 = vpop.f32.mrf.mxu0
        %v2540 = vpop.f32.mrf.mxu0
        %v2541 = vpop.f32.mrf.mxu0
        %2542 = vdwg.mxu0
        %v2547 = vunpack.c.l.b16 %v2167
        %v2548 = vunpack.c.l.b16 %v2168
        %v2549 = vunpack.c.l.b16 %v2169
        %v2550 = vunpack.c.l.b16 %v2170
        %v2551 = vpack.c.b16 %v2548, %v2547
        %v2552 = vpack.c.b16 %v2550, %v2549
        %2555 = vmatprep.subr.bf16.mxu0 0
        %2556 = vmatpush1.bf16.msra.mxu0 0
        %2557 = vmatprep.subr.bf16.mxu0 0
        %2558 = vmatpush1.bf16.msra.mxu0 0
        %2559 = vmatprep.subr.bf16.mxu0 0
        %2560 = vmatpush1.bf16.msra.mxu0 0
        %2561 = vmatprep.subr.bf16.mxu0 0
        %2562 = vmatpush1.bf16.msra.mxu0 0
        %2563 = vmatprep.subr.bf16.mxu0 0
        %2564 = vmatpush1.bf16.msra.mxu0 0
        %2565 = vmatprep.subr.bf16.mxu0 0
        %2566 = vmatpush1.bf16.msra.mxu0 0
        %2567 = vmatprep.subr.bf16.mxu0 0
        %2568 = vmatpush1.bf16.msra.mxu0 %v2552
        %2569 = vmatprep.subr.bf16.mxu0 0
        %2570 = vmatpush1.bf16.msra.mxu0 %v2551
        %2571 = vmatprep.subr.bf16.mxu0 0
        %2572 = vmatpush2.bf16.msra.mxu0 0
        %2573 = vmatprep.subr.bf16.mxu0 0
        %2574 = vmatpush2.bf16.msra.mxu0 0
        %2575 = vmatprep.subr.bf16.mxu0 0
        %2576 = vmatpush2.bf16.msra.mxu0 0
        %2577 = vmatprep.subr.bf16.mxu0 0
        %2578 = vmatpush2.bf16.msra.mxu0 0
        %2579 = vmatprep.subr.bf16.mxu0 0
        %2580 = vmatpush2.bf16.msra.mxu0 0
        %2581 = vmatprep.subr.bf16.mxu0 0
        %2582 = vmatpush2.bf16.msra.mxu0 0
        %2583 = vmatprep.subr.bf16.mxu0 0
        %2584 = vmatpush2.bf16.msra.mxu0 0
        %2585 = vmatprep.subr.bf16.mxu0 0
        %2586 = vmatpush2.bf16.msra.mxu0 0
        %2587 = vmatprep.mubr.bf16.mxu0 0
        %2588 = vmatmul.mubr.bf16.gmra.mxu0 %v2293
        %v2589 = vpop.f32.mrf.mxu0
        %v2590 = vadd.f32 %v2243, %v2589
        %v2591 = vpop.f32.mrf.mxu0
        %v2592 = vpop.f32.mrf.mxu0
        %v2593 = vpop.f32.mrf.mxu0
        %2594 = vdwg.mxu0
        %v2599 = vunpack.c.l.b16 %v2171
        %v2600 = vunpack.c.l.b16 %v2172
        %v2601 = vunpack.c.l.b16 %v2173
        %v2602 = vunpack.c.l.b16 %v2174
        %v2603 = vpack.c.b16 %v2600, %v2599
        %v2604 = vpack.c.b16 %v2602, %v2601
        %2607 = vmatprep.subr.bf16.mxu0 0
        %2608 = vmatpush1.bf16.msra.mxu0 0
        %2609 = vmatprep.subr.bf16.mxu0 0
        %2610 = vmatpush1.bf16.msra.mxu0 0
        %2611 = vmatprep.subr.bf16.mxu0 0
        %2612 = vmatpush1.bf16.msra.mxu0 0
        %2613 = vmatprep.subr.bf16.mxu0 0
        %2614 = vmatpush1.bf16.msra.mxu0 0
        %2615 = vmatprep.subr.bf16.mxu0 0
        %2616 = vmatpush1.bf16.msra.mxu0 0
        %2617 = vmatprep.subr.bf16.mxu0 0
        %2618 = vmatpush1.bf16.msra.mxu0 0
        %2619 = vmatprep.subr.bf16.mxu0 0
        %2620 = vmatpush1.bf16.msra.mxu0 %v2604
        %2621 = vmatprep.subr.bf16.mxu0 0
        %2622 = vmatpush1.bf16.msra.mxu0 %v2603
        %2623 = vmatprep.subr.bf16.mxu0 0
        %2624 = vmatpush2.bf16.msra.mxu0 0
        %2625 = vmatprep.subr.bf16.mxu0 0
        %2626 = vmatpush2.bf16.msra.mxu0 0
        %2627 = vmatprep.subr.bf16.mxu0 0
        %2628 = vmatpush2.bf16.msra.mxu0 0
        %2629 = vmatprep.subr.bf16.mxu0 0
        %2630 = vmatpush2.bf16.msra.mxu0 0
        %2631 = vmatprep.subr.bf16.mxu0 0
        %2632 = vmatpush2.bf16.msra.mxu0 0
        %2633 = vmatprep.subr.bf16.mxu0 0
        %2634 = vmatpush2.bf16.msra.mxu0 0
        %2635 = vmatprep.subr.bf16.mxu0 0
        %2636 = vmatpush2.bf16.msra.mxu0 0
        %2637 = vmatprep.subr.bf16.mxu0 0
        %2638 = vmatpush2.bf16.msra.mxu0 0
        %2639 = vmatprep.mubr.bf16.mxu0 0
        %2640 = vmatmul.mubr.bf16.gmra.mxu0 %v2293
        %v2641 = vpop.f32.mrf.mxu0
        %v2642 = vadd.f32 %v2247, %v2641
        %v2643 = vpop.f32.mrf.mxu0
        %v2644 = vpop.f32.mrf.mxu0
        %v2645 = vpop.f32.mrf.mxu0
        %2646 = vdwg.mxu0
        %v2651 = vunpack.c.l.b16 %v2175
        %v2652 = vunpack.c.l.b16 %v2176
        %v2653 = vunpack.c.l.b16 %v2177
        %v2654 = vunpack.c.l.b16 %v2178
        %v2655 = vpack.c.b16 %v2652, %v2651
        %v2656 = vpack.c.b16 %v2654, %v2653
        %2659 = vmatprep.subr.bf16.mxu0 0
        %2660 = vmatpush1.bf16.msra.mxu0 0
        %2661 = vmatprep.subr.bf16.mxu0 0
        %2662 = vmatpush1.bf16.msra.mxu0 0
        %2663 = vmatprep.subr.bf16.mxu0 0
        %2664 = vmatpush1.bf16.msra.mxu0 0
        %2665 = vmatprep.subr.bf16.mxu0 0
        %2666 = vmatpush1.bf16.msra.mxu0 0
        %2667 = vmatprep.subr.bf16.mxu0 0
        %2668 = vmatpush1.bf16.msra.mxu0 0
        %2669 = vmatprep.subr.bf16.mxu0 0
        %2670 = vmatpush1.bf16.msra.mxu0 0
        %2671 = vmatprep.subr.bf16.mxu0 0
        %2672 = vmatpush1.bf16.msra.mxu0 %v2656
        %2673 = vmatprep.subr.bf16.mxu0 0
        %2674 = vmatpush1.bf16.msra.mxu0 %v2655
        %2675 = vmatprep.subr.bf16.mxu0 0
        %2676 = vmatpush2.bf16.msra.mxu0 0
        %2677 = vmatprep.subr.bf16.mxu0 0
        %2678 = vmatpush2.bf16.msra.mxu0 0
        %2679 = vmatprep.subr.bf16.mxu0 0
        %2680 = vmatpush2.bf16.msra.mxu0 0
        %2681 = vmatprep.subr.bf16.mxu0 0
        %2682 = vmatpush2.bf16.msra.mxu0 0
        %2683 = vmatprep.subr.bf16.mxu0 0
        %2684 = vmatpush2.bf16.msra.mxu0 0
        %2685 = vmatprep.subr.bf16.mxu0 0
        %2686 = vmatpush2.bf16.msra.mxu0 0
        %2687 = vmatprep.subr.bf16.mxu0 0
        %2688 = vmatpush2.bf16.msra.mxu0 0
        %2689 = vmatprep.subr.bf16.mxu0 0
        %2690 = vmatpush2.bf16.msra.mxu0 0
        %2691 = vmatprep.mubr.bf16.mxu0 0
        %2692 = vmatmul.mubr.bf16.gmra.mxu0 %v2293
        %v2693 = vpop.f32.mrf.mxu0
        %v2694 = vadd.f32 %v2251, %v2693
        %v2695 = vpop.f32.mrf.mxu0
        %v2696 = vpop.f32.mrf.mxu0
        %v2697 = vpop.f32.mrf.mxu0
        %2698 = vdwg.mxu0
        %v2703 = vunpack.c.l.b16 %v2179
        %v2704 = vunpack.c.l.b16 %v2180
        %v2705 = vunpack.c.l.b16 %v2181
        %v2706 = vunpack.c.l.b16 %v2182
        %v2707 = vpack.c.b16 %v2704, %v2703
        %v2708 = vpack.c.b16 %v2706, %v2705
        %2711 = vmatprep.subr.bf16.mxu0 0
        %2712 = vmatpush1.bf16.msra.mxu0 0
        %2713 = vmatprep.subr.bf16.mxu0 0
        %2714 = vmatpush1.bf16.msra.mxu0 0
        %2715 = vmatprep.subr.bf16.mxu0 0
        %2716 = vmatpush1.bf16.msra.mxu0 0
        %2717 = vmatprep.subr.bf16.mxu0 0
        %2718 = vmatpush1.bf16.msra.mxu0 0
        %2719 = vmatprep.subr.bf16.mxu0 0
        %2720 = vmatpush1.bf16.msra.mxu0 0
        %2721 = vmatprep.subr.bf16.mxu0 0
        %2722 = vmatpush1.bf16.msra.mxu0 0
        %2723 = vmatprep.subr.bf16.mxu0 0
        %2724 = vmatpush1.bf16.msra.mxu0 %v2708
        %2725 = vmatprep.subr.bf16.mxu0 0
        %2726 = vmatpush1.bf16.msra.mxu0 %v2707
        %2727 = vmatprep.subr.bf16.mxu0 0
        %2728 = vmatpush2.bf16.msra.mxu0 0
        %2729 = vmatprep.subr.bf16.mxu0 0
        %2730 = vmatpush2.bf16.msra.mxu0 0
        %2731 = vmatprep.subr.bf16.mxu0 0
        %2732 = vmatpush2.bf16.msra.mxu0 0
        %2733 = vmatprep.subr.bf16.mxu0 0
        %2734 = vmatpush2.bf16.msra.mxu0 0
        %2735 = vmatprep.subr.bf16.mxu0 0
        %2736 = vmatpush2.bf16.msra.mxu0 0
        %2737 = vmatprep.subr.bf16.mxu0 0
        %2738 = vmatpush2.bf16.msra.mxu0 0
        %2739 = vmatprep.subr.bf16.mxu0 0
        %2740 = vmatpush2.bf16.msra.mxu0 0
        %2741 = vmatprep.subr.bf16.mxu0 0
        %2742 = vmatpush2.bf16.msra.mxu0 0
        %2743 = vmatprep.mubr.bf16.mxu0 0
        %2744 = vmatmul.mubr.bf16.gmra.mxu0 %v2293
        %v2745 = vpop.f32.mrf.mxu0
        %v2746 = vadd.f32 %v2255, %v2745
        %v2747 = vpop.f32.mrf.mxu0
        %v2748 = vpop.f32.mrf.mxu0
        %v2749 = vpop.f32.mrf.mxu0
        %2750 = vdwg.mxu0
        %v2755 = vunpack.c.l.b16 %v2183
        %v2756 = vunpack.c.l.b16 %v2184
        %v2757 = vunpack.c.l.b16 %v2185
        %v2758 = vunpack.c.l.b16 %v2186
        %v2759 = vpack.c.b16 %v2756, %v2755
        %v2760 = vpack.c.b16 %v2758, %v2757
        %2763 = vmatprep.subr.bf16.mxu0 0
        %2764 = vmatpush1.bf16.msra.mxu0 0
        %2765 = vmatprep.subr.bf16.mxu0 0
        %2766 = vmatpush1.bf16.msra.mxu0 0
        %2767 = vmatprep.subr.bf16.mxu0 0
        %2768 = vmatpush1.bf16.msra.mxu0 0
        %2769 = vmatprep.subr.bf16.mxu0 0
        %2770 = vmatpush1.bf16.msra.mxu0 0
        %2771 = vmatprep.subr.bf16.mxu0 0
        %2772 = vmatpush1.bf16.msra.mxu0 0
        %2773 = vmatprep.subr.bf16.mxu0 0
        %2774 = vmatpush1.bf16.msra.mxu0 0
        %2775 = vmatprep.subr.bf16.mxu0 0
        %2776 = vmatpush1.bf16.msra.mxu0 %v2760
        %2777 = vmatprep.subr.bf16.mxu0 0
        %2778 = vmatpush1.bf16.msra.mxu0 %v2759
        %2779 = vmatprep.subr.bf16.mxu0 0
        %2780 = vmatpush2.bf16.msra.mxu0 0
        %2781 = vmatprep.subr.bf16.mxu0 0
        %2782 = vmatpush2.bf16.msra.mxu0 0
        %2783 = vmatprep.subr.bf16.mxu0 0
        %2784 = vmatpush2.bf16.msra.mxu0 0
        %2785 = vmatprep.subr.bf16.mxu0 0
        %2786 = vmatpush2.bf16.msra.mxu0 0
        %2787 = vmatprep.subr.bf16.mxu0 0
        %2788 = vmatpush2.bf16.msra.mxu0 0
        %2789 = vmatprep.subr.bf16.mxu0 0
        %2790 = vmatpush2.bf16.msra.mxu0 0
        %2791 = vmatprep.subr.bf16.mxu0 0
        %2792 = vmatpush2.bf16.msra.mxu0 0
        %2793 = vmatprep.subr.bf16.mxu0 0
        %2794 = vmatpush2.bf16.msra.mxu0 0
        %2795 = vmatprep.mubr.bf16.mxu0 0
        %2796 = vmatmul.mubr.bf16.gmra.mxu0 %v2293
        %v2797 = vpop.f32.mrf.mxu0
        %v2798 = vadd.f32 %v2259, %v2797
        %v2799 = vpop.f32.mrf.mxu0
        %v2800 = vpop.f32.mrf.mxu0
        %v2801 = vpop.f32.mrf.mxu0
        %2802 = vdwg.mxu0
        %v2807 = vunpack.c.l.b16 %v2187
        %v2808 = vunpack.c.l.b16 %v2188
        %v2809 = vunpack.c.l.b16 %v2189
        %v2810 = vunpack.c.l.b16 %v2190
        %v2811 = vpack.c.b16 %v2808, %v2807
        %v2812 = vpack.c.b16 %v2810, %v2809
        %2815 = vmatprep.subr.bf16.mxu0 0
        %2816 = vmatpush1.bf16.msra.mxu0 0
        %2817 = vmatprep.subr.bf16.mxu0 0
        %2818 = vmatpush1.bf16.msra.mxu0 0
        %2819 = vmatprep.subr.bf16.mxu0 0
        %2820 = vmatpush1.bf16.msra.mxu0 0
        %2821 = vmatprep.subr.bf16.mxu0 0
        %2822 = vmatpush1.bf16.msra.mxu0 0
        %2823 = vmatprep.subr.bf16.mxu0 0
        %2824 = vmatpush1.bf16.msra.mxu0 0
        %2825 = vmatprep.subr.bf16.mxu0 0
        %2826 = vmatpush1.bf16.msra.mxu0 0
        %2827 = vmatprep.subr.bf16.mxu0 0
        %2828 = vmatpush1.bf16.msra.mxu0 %v2812
        %2829 = vmatprep.subr.bf16.mxu0 0
        %2830 = vmatpush1.bf16.msra.mxu0 %v2811
        %2831 = vmatprep.subr.bf16.mxu0 0
        %2832 = vmatpush2.bf16.msra.mxu0 0
        %2833 = vmatprep.subr.bf16.mxu0 0
        %2834 = vmatpush2.bf16.msra.mxu0 0
        %2835 = vmatprep.subr.bf16.mxu0 0
        %2836 = vmatpush2.bf16.msra.mxu0 0
        %2837 = vmatprep.subr.bf16.mxu0 0
        %2838 = vmatpush2.bf16.msra.mxu0 0
        %2839 = vmatprep.subr.bf16.mxu0 0
        %2840 = vmatpush2.bf16.msra.mxu0 0
        %2841 = vmatprep.subr.bf16.mxu0 0
        %2842 = vmatpush2.bf16.msra.mxu0 0
        %2843 = vmatprep.subr.bf16.mxu0 0
        %2844 = vmatpush2.bf16.msra.mxu0 0
        %2845 = vmatprep.subr.bf16.mxu0 0
        %2846 = vmatpush2.bf16.msra.mxu0 0
        %2847 = vmatprep.mubr.bf16.mxu0 0
        %2848 = vmatmul.mubr.bf16.gmra.mxu0 %v2293
        %v2849 = vpop.f32.mrf.mxu0
        %v2850 = vadd.f32 %v2263, %v2849
        %v2851 = vpop.f32.mrf.mxu0
        %v2852 = vpop.f32.mrf.mxu0
        %v2853 = vpop.f32.mrf.mxu0
        %2854 = vdwg.mxu0
        %v2859 = vunpack.c.l.b16 %v2191
        %v2860 = vunpack.c.l.b16 %v2192
        %v2861 = vunpack.c.l.b16 %v2193
        %v2862 = vunpack.c.l.b16 %v2194
        %v2863 = vpack.c.b16 %v2860, %v2859
        %v2864 = vpack.c.b16 %v2862, %v2861
        %2867 = vmatprep.subr.bf16.mxu0 0
        %2868 = vmatpush1.bf16.msra.mxu0 0
        %2869 = vmatprep.subr.bf16.mxu0 0
        %2870 = vmatpush1.bf16.msra.mxu0 0
        %2871 = vmatprep.subr.bf16.mxu0 0
        %2872 = vmatpush1.bf16.msra.mxu0 0
        %2873 = vmatprep.subr.bf16.mxu0 0
        %2874 = vmatpush1.bf16.msra.mxu0 0
        %2875 = vmatprep.subr.bf16.mxu0 0
        %2876 = vmatpush1.bf16.msra.mxu0 0
        %2877 = vmatprep.subr.bf16.mxu0 0
        %2878 = vmatpush1.bf16.msra.mxu0 0
        %2879 = vmatprep.subr.bf16.mxu0 0
        %2880 = vmatpush1.bf16.msra.mxu0 %v2864
        %2881 = vmatprep.subr.bf16.mxu0 0
        %2882 = vmatpush1.bf16.msra.mxu0 %v2863
        %2883 = vmatprep.subr.bf16.mxu0 0
        %2884 = vmatpush2.bf16.msra.mxu0 0
        %2885 = vmatprep.subr.bf16.mxu0 0
        %2886 = vmatpush2.bf16.msra.mxu0 0
        %2887 = vmatprep.subr.bf16.mxu0 0
        %2888 = vmatpush2.bf16.msra.mxu0 0
        %2889 = vmatprep.subr.bf16.mxu0 0
        %2890 = vmatpush2.bf16.msra.mxu0 0
        %2891 = vmatprep.subr.bf16.mxu0 0
        %2892 = vmatpush2.bf16.msra.mxu0 0
        %2893 = vmatprep.subr.bf16.mxu0 0
        %2894 = vmatpush2.bf16.msra.mxu0 0
        %2895 = vmatprep.subr.bf16.mxu0 0
        %2896 = vmatpush2.bf16.msra.mxu0 0
        %2897 = vmatprep.subr.bf16.mxu0 0
        %2898 = vmatpush2.bf16.msra.mxu0 0
        %2899 = vmatprep.mubr.bf16.mxu0 0
        %2900 = vmatmul.mubr.bf16.gmra.mxu0 %v2293
        %v2901 = vpop.f32.mrf.mxu0
        %v2902 = vadd.f32 %v2267, %v2901
        %v2903 = vpop.f32.mrf.mxu0
        %v2904 = vpop.f32.mrf.mxu0
        %v2905 = vpop.f32.mrf.mxu0
        %2906 = vdwg.mxu0
        %v2907 = vpack.c.bf16 %v2330, %v2330
        %v2908 = vpack.c.bf16 %v2382, %v2382
        %v2909 = vpack.c.bf16 %v2434, %v2434
        %v2910 = vpack.c.bf16 %v2486, %v2486
        %v2911 = vpack.c.bf16 %v2538, %v2538
        %v2912 = vpack.c.bf16 %v2590, %v2590
        %v2913 = vpack.c.bf16 %v2642, %v2642
        %v2914 = vpack.c.bf16 %v2694, %v2694
        %v2916 = vsel %vm1265, %v2907, 0
        %v2919 = vsel %vm1265, %v2911, 0
        %2921 = vmatprep.subr.bf16.mxu0 0
        %2922 = vmatpush1.bf16.xpose.msra.mxu0 0
        %2923 = vmatprep.subr.bf16.mxu0 0
        %2924 = vmatpush1.bf16.xpose.msra.mxu0 0
        %2925 = vmatprep.subr.bf16.mxu0 0
        %2926 = vmatpush1.bf16.xpose.msra.mxu0 0
        %2927 = vmatprep.subr.bf16.mxu0 0
        %2928 = vmatpush1.bf16.xpose.msra.mxu0 0
        %2929 = vmatprep.subr.bf16.mxu0 0
        %2930 = vmatpush1.bf16.xpose.msra.mxu0 0
        %2931 = vmatprep.subr.bf16.mxu0 0
        %2932 = vmatpush1.bf16.xpose.msra.mxu0 0
        %2933 = vmatprep.subr.bf16.mxu0 0
        %2934 = vmatpush1.bf16.xpose.msra.mxu0 0
        %2935 = vmatprep.subr.bf16.mxu0 0
        %2936 = vmatpush1.bf16.xpose.msra.mxu0 %v2919
        %2937 = vmatprep.subr.bf16.mxu0 0
        %2938 = vmatpush2.bf16.xpose.msra.mxu0 0
        %2939 = vmatprep.subr.bf16.mxu0 0
        %2940 = vmatpush2.bf16.xpose.msra.mxu0 0
        %2941 = vmatprep.subr.bf16.mxu0 0
        %2942 = vmatpush2.bf16.xpose.msra.mxu0 0
        %2943 = vmatprep.subr.bf16.mxu0 0
        %2944 = vmatpush2.bf16.xpose.msra.mxu0 0
        %2945 = vmatprep.subr.bf16.mxu0 0
        %2946 = vmatpush2.bf16.xpose.msra.mxu0 0
        %2947 = vmatprep.subr.bf16.mxu0 0
        %2948 = vmatpush2.bf16.xpose.msra.mxu0 0
        %2949 = vmatprep.subr.bf16.mxu0 0
        %2950 = vmatpush2.bf16.xpose.msra.mxu0 0
        %2951 = vmatprep.subr.bf16.mxu0 0
        %2952 = vmatpush2.bf16.xpose.msra.mxu0 0
        %2953 = vmatprep.mubr.bf16.mxu0 0
        %2954 = vmatmul.mubr.bf16.gmra.mxu0 %v2916
        %v2955 = vpop.f32.mrf.mxu0
        %v2956 = vadd.f32 %v465, %v2955
        %v2957 = vpop.f32.mrf.mxu0
        %v2958 = vpop.f32.mrf.mxu0
        %v2959 = vpop.f32.mrf.mxu0
        %2960 = vdwg.mxu0
        %v2962 = vsel %vm1265, %v2908, 0
        %v2965 = vsel %vm1265, %v2912, 0
        %2967 = vmatprep.subr.bf16.mxu0 0
        %2968 = vmatpush1.bf16.xpose.msra.mxu0 0
        %2969 = vmatprep.subr.bf16.mxu0 0
        %2970 = vmatpush1.bf16.xpose.msra.mxu0 0
        %2971 = vmatprep.subr.bf16.mxu0 0
        %2972 = vmatpush1.bf16.xpose.msra.mxu0 0
        %2973 = vmatprep.subr.bf16.mxu0 0
        %2974 = vmatpush1.bf16.xpose.msra.mxu0 0
        %2975 = vmatprep.subr.bf16.mxu0 0
        %2976 = vmatpush1.bf16.xpose.msra.mxu0 0
        %2977 = vmatprep.subr.bf16.mxu0 0
        %2978 = vmatpush1.bf16.xpose.msra.mxu0 0
        %2979 = vmatprep.subr.bf16.mxu0 0
        %2980 = vmatpush1.bf16.xpose.msra.mxu0 0
        %2981 = vmatprep.subr.bf16.mxu0 0
        %2982 = vmatpush1.bf16.xpose.msra.mxu0 %v2965
        %2983 = vmatprep.subr.bf16.mxu0 0
        %2984 = vmatpush2.bf16.xpose.msra.mxu0 0
        %2985 = vmatprep.subr.bf16.mxu0 0
        %2986 = vmatpush2.bf16.xpose.msra.mxu0 0
        %2987 = vmatprep.subr.bf16.mxu0 0
        %2988 = vmatpush2.bf16.xpose.msra.mxu0 0
        %2989 = vmatprep.subr.bf16.mxu0 0
        %2990 = vmatpush2.bf16.xpose.msra.mxu0 0
        %2991 = vmatprep.subr.bf16.mxu0 0
        %2992 = vmatpush2.bf16.xpose.msra.mxu0 0
        %2993 = vmatprep.subr.bf16.mxu0 0
        %2994 = vmatpush2.bf16.xpose.msra.mxu0 0
        %2995 = vmatprep.subr.bf16.mxu0 0
        %2996 = vmatpush2.bf16.xpose.msra.mxu0 0
        %2997 = vmatprep.subr.bf16.mxu0 0
        %2998 = vmatpush2.bf16.xpose.msra.mxu0 0
        %2999 = vmatprep.mubr.bf16.mxu0 0
        %3000 = vmatmul.mubr.bf16.gmra.mxu0 %v2962
        %v3001 = vpop.f32.mrf.mxu0
        %v3002 = vadd.f32 %v465, %v3001
        %v3003 = vpop.f32.mrf.mxu0
        %v3004 = vpop.f32.mrf.mxu0
        %v3005 = vpop.f32.mrf.mxu0
        %3006 = vdwg.mxu0
        %v3008 = vsel %vm1265, %v2909, 0
        %v3011 = vsel %vm1265, %v2913, 0
        %3013 = vmatprep.subr.bf16.mxu0 0
        %3014 = vmatpush1.bf16.xpose.msra.mxu0 0
        %3015 = vmatprep.subr.bf16.mxu0 0
        %3016 = vmatpush1.bf16.xpose.msra.mxu0 0
        %3017 = vmatprep.subr.bf16.mxu0 0
        %3018 = vmatpush1.bf16.xpose.msra.mxu0 0
        %3019 = vmatprep.subr.bf16.mxu0 0
        %3020 = vmatpush1.bf16.xpose.msra.mxu0 0
        %3021 = vmatprep.subr.bf16.mxu0 0
        %3022 = vmatpush1.bf16.xpose.msra.mxu0 0
        %3023 = vmatprep.subr.bf16.mxu0 0
        %3024 = vmatpush1.bf16.xpose.msra.mxu0 0
        %3025 = vmatprep.subr.bf16.mxu0 0
        %3026 = vmatpush1.bf16.xpose.msra.mxu0 0
        %3027 = vmatprep.subr.bf16.mxu0 0
        %3028 = vmatpush1.bf16.xpose.msra.mxu0 %v3011
        %3029 = vmatprep.subr.bf16.mxu0 0
        %3030 = vmatpush2.bf16.xpose.msra.mxu0 0
        %3031 = vmatprep.subr.bf16.mxu0 0
        %3032 = vmatpush2.bf16.xpose.msra.mxu0 0
        %3033 = vmatprep.subr.bf16.mxu0 0
        %3034 = vmatpush2.bf16.xpose.msra.mxu0 0
        %3035 = vmatprep.subr.bf16.mxu0 0
        %3036 = vmatpush2.bf16.xpose.msra.mxu0 0
        %3037 = vmatprep.subr.bf16.mxu0 0
        %3038 = vmatpush2.bf16.xpose.msra.mxu0 0
        %3039 = vmatprep.subr.bf16.mxu0 0
        %3040 = vmatpush2.bf16.xpose.msra.mxu0 0
        %3041 = vmatprep.subr.bf16.mxu0 0
        %3042 = vmatpush2.bf16.xpose.msra.mxu0 0
        %3043 = vmatprep.subr.bf16.mxu0 0
        %3044 = vmatpush2.bf16.xpose.msra.mxu0 0
        %3045 = vmatprep.mubr.bf16.mxu0 0
        %3046 = vmatmul.mubr.bf16.gmra.mxu0 %v3008
        %v3047 = vpop.f32.mrf.mxu0
        %v3048 = vadd.f32 %v465, %v3047
        %v3049 = vpop.f32.mrf.mxu0
        %v3050 = vpop.f32.mrf.mxu0
        %v3051 = vpop.f32.mrf.mxu0
        %3052 = vdwg.mxu0
        %v3054 = vsel %vm1265, %v2910, 0
        %v3057 = vsel %vm1265, %v2914, 0
        %3059 = vmatprep.subr.bf16.mxu0 0
        %3060 = vmatpush1.bf16.xpose.msra.mxu0 0
        %3061 = vmatprep.subr.bf16.mxu0 0
        %3062 = vmatpush1.bf16.xpose.msra.mxu0 0
        %3063 = vmatprep.subr.bf16.mxu0 0
        %3064 = vmatpush1.bf16.xpose.msra.mxu0 0
        %3065 = vmatprep.subr.bf16.mxu0 0
        %3066 = vmatpush1.bf16.xpose.msra.mxu0 0
        %3067 = vmatprep.subr.bf16.mxu0 0
        %3068 = vmatpush1.bf16.xpose.msra.mxu0 0
        %3069 = vmatprep.subr.bf16.mxu0 0
        %3070 = vmatpush1.bf16.xpose.msra.mxu0 0
        %3071 = vmatprep.subr.bf16.mxu0 0
        %3072 = vmatpush1.bf16.xpose.msra.mxu0 0
        %3073 = vmatprep.subr.bf16.mxu0 0
        %3074 = vmatpush1.bf16.xpose.msra.mxu0 %v3057
        %3075 = vmatprep.subr.bf16.mxu0 0
        %3076 = vmatpush2.bf16.xpose.msra.mxu0 0
        %3077 = vmatprep.subr.bf16.mxu0 0
        %3078 = vmatpush2.bf16.xpose.msra.mxu0 0
        %3079 = vmatprep.subr.bf16.mxu0 0
        %3080 = vmatpush2.bf16.xpose.msra.mxu0 0
        %3081 = vmatprep.subr.bf16.mxu0 0
        %3082 = vmatpush2.bf16.xpose.msra.mxu0 0
        %3083 = vmatprep.subr.bf16.mxu0 0
        %3084 = vmatpush2.bf16.xpose.msra.mxu0 0
        %3085 = vmatprep.subr.bf16.mxu0 0
        %3086 = vmatpush2.bf16.xpose.msra.mxu0 0
        %3087 = vmatprep.subr.bf16.mxu0 0
        %3088 = vmatpush2.bf16.xpose.msra.mxu0 0
        %3089 = vmatprep.subr.bf16.mxu0 0
        %3090 = vmatpush2.bf16.xpose.msra.mxu0 0
        %3091 = vmatprep.mubr.bf16.mxu0 0
        %3092 = vmatmul.mubr.bf16.gmra.mxu0 %v3054
        %v3093 = vpop.f32.mrf.mxu0
        %v3094 = vadd.f32 %v465, %v3093
        %v3095 = vpop.f32.mrf.mxu0
        %v3096 = vpop.f32.mrf.mxu0
        %v3097 = vpop.f32.mrf.mxu0
        %3098 = vdwg.mxu0
        %v3099 = vsel %vm1265, %v2956, -inf
        %3100 = vmax.xlane.f32.xlu0 %v3099
        %v3101 = vpop.xlane.xlu0 %3100
        %v3102 = vsel %vm1265, %v3002, -inf
        %3103 = vmax.xlane.f32.xlu0 %v3102
        %v3104 = vpop.xlane.xlu0 %3103
        %v3105 = vsel %vm1265, %v3048, -inf
        %3106 = vmax.xlane.f32.xlu0 %v3105
        %v3107 = vpop.xlane.xlu0 %3106
        %v3108 = vsel %vm1265, %v3094, -inf
        %3109 = vmax.xlane.f32.xlu0 %v3108
        %v3110 = vpop.xlane.xlu0 %3109
        %v3111 = vsub.f32 %v2956, %v3101
        %v3112 = vsub.f32 %v3002, %v3104
        %v3113 = vsub.f32 %v3048, %v3107
        %v3114 = vsub.f32 %v3094, %v3110
        %v3115 = vmul.f32 %v3111, 1.442695
        %v3116 = vpow.pop %v3115
        %v3117 = vmul.f32 %v3112, 1.442695
        %v3118 = vpow.pop %v3117
        %v3119 = vmul.f32 %v3113, 1.442695
        %v3120 = vpow.pop %v3119
        %v3121 = vmul.f32 %v3114, 1.442695
        %v3122 = vpow.pop %v3121
        %v3123 = vsel %vm1265, %v3116, 0.0
        %3124 = vadd.xlane.f32.xlu0 %v3123
        %v3125 = vpop.xlane.xlu0 %3124
        %v3126 = vsel %vm1265, %v3118, 0.0
        %3127 = vadd.xlane.f32.xlu0 %v3126
        %v3128 = vpop.xlane.xlu0 %3127
        %v3129 = vsel %vm1265, %v3120, 0.0
        %3130 = vadd.xlane.f32.xlu0 %v3129
        %v3131 = vpop.xlane.xlu0 %3130
        %v3132 = vsel %vm1265, %v3122, 0.0
        %3133 = vadd.xlane.f32.xlu0 %v3132
        %v3134 = vpop.xlane.xlu0 %3133
        %v3135 = vrcp.pop %v3125
        %v3136 = vrcp.pop %v3128
        %v3137 = vrcp.pop %v3131
        %v3138 = vrcp.pop %v3134
        %v3139 = vmul.f32 %v3116, %v3135
        %v3140 = vmul.f32 %v3118, %v3136
        %v3141 = vmul.f32 %v3120, %v3137
        %v3142 = vmul.f32 %v3122, %v3138
        %v3143 = vpack.c.bf16 %v3139, %v3139
        %v3144 = vpack.c.bf16 %v3140, %v3140
        %v3145 = vpack.c.bf16 %v3141, %v3141
        %v3146 = vpack.c.bf16 %v3142, %v3142
        %v3147 = vpack.c.bf16 %v2746, %v2746
        %v3148 = vpack.c.bf16 %v2798, %v2798
        %v3149 = vpack.c.bf16 %v2850, %v2850
        %v3150 = vpack.c.bf16 %v2902, %v2902
        %v3152 = vsel %vm1265, %v3143, 0
        %v3155 = vsel %vm1505, %v3147, 0
        %3157 = vmatprep.subr.bf16.mxu0 0
        %3158 = vmatpush1.bf16.msra.mxu0 0
        %3159 = vmatprep.subr.bf16.mxu0 0
        %3160 = vmatpush1.bf16.msra.mxu0 0
        %3161 = vmatprep.subr.bf16.mxu0 0
        %3162 = vmatpush1.bf16.msra.mxu0 0
        %3163 = vmatprep.subr.bf16.mxu0 0
        %3164 = vmatpush1.bf16.msra.mxu0 0
        %3165 = vmatprep.subr.bf16.mxu0 0
        %3166 = vmatpush1.bf16.msra.mxu0 0
        %3167 = vmatprep.subr.bf16.mxu0 0
        %3168 = vmatpush1.bf16.msra.mxu0 0
        %3169 = vmatprep.subr.bf16.mxu0 0
        %3170 = vmatpush1.bf16.msra.mxu0 0
        %3171 = vmatprep.subr.bf16.mxu0 0
        %3172 = vmatpush1.bf16.msra.mxu0 %v3155
        %3173 = vmatprep.subr.bf16.mxu0 0
        %3174 = vmatpush2.bf16.msra.mxu0 0
        %3175 = vmatprep.subr.bf16.mxu0 0
        %3176 = vmatpush2.bf16.msra.mxu0 0
        %3177 = vmatprep.subr.bf16.mxu0 0
        %3178 = vmatpush2.bf16.msra.mxu0 0
        %3179 = vmatprep.subr.bf16.mxu0 0
        %3180 = vmatpush2.bf16.msra.mxu0 0
        %3181 = vmatprep.subr.bf16.mxu0 0
        %3182 = vmatpush2.bf16.msra.mxu0 0
        %3183 = vmatprep.subr.bf16.mxu0 0
        %3184 = vmatpush2.bf16.msra.mxu0 0
        %3185 = vmatprep.subr.bf16.mxu0 0
        %3186 = vmatpush2.bf16.msra.mxu0 0
        %3187 = vmatprep.subr.bf16.mxu0 0
        %3188 = vmatpush2.bf16.msra.mxu0 0
        %3189 = vmatprep.mubr.bf16.mxu0 0
        %3190 = vmatmul.mubr.bf16.gmra.mxu0 %v3152
        %v3191 = vpop.f32.mrf.mxu0
        %v3192 = vadd.f32 0.0, %v3191
        %v3193 = vpop.f32.mrf.mxu0
        %v3194 = vpop.f32.mrf.mxu0
        %v3195 = vpop.f32.mrf.mxu0
        %3196 = vdwg.mxu0
        %v3198 = vsel %vm1265, %v3144, 0
        %v3201 = vsel %vm1505, %v3148, 0
        %3203 = vmatprep.subr.bf16.mxu0 0
        %3204 = vmatpush1.bf16.msra.mxu0 0
        %3205 = vmatprep.subr.bf16.mxu0 0
        %3206 = vmatpush1.bf16.msra.mxu0 0
        %3207 = vmatprep.subr.bf16.mxu0 0
        %3208 = vmatpush1.bf16.msra.mxu0 0
        %3209 = vmatprep.subr.bf16.mxu0 0
        %3210 = vmatpush1.bf16.msra.mxu0 0
        %3211 = vmatprep.subr.bf16.mxu0 0
        %3212 = vmatpush1.bf16.msra.mxu0 0
        %3213 = vmatprep.subr.bf16.mxu0 0
        %3214 = vmatpush1.bf16.msra.mxu0 0
        %3215 = vmatprep.subr.bf16.mxu0 0
        %3216 = vmatpush1.bf16.msra.mxu0 0
        %3217 = vmatprep.subr.bf16.mxu0 0
        %3218 = vmatpush1.bf16.msra.mxu0 %v3201
        %3219 = vmatprep.subr.bf16.mxu0 0
        %3220 = vmatpush2.bf16.msra.mxu0 0
        %3221 = vmatprep.subr.bf16.mxu0 0
        %3222 = vmatpush2.bf16.msra.mxu0 0
        %3223 = vmatprep.subr.bf16.mxu0 0
        %3224 = vmatpush2.bf16.msra.mxu0 0
        %3225 = vmatprep.subr.bf16.mxu0 0
        %3226 = vmatpush2.bf16.msra.mxu0 0
        %3227 = vmatprep.subr.bf16.mxu0 0
        %3228 = vmatpush2.bf16.msra.mxu0 0
        %3229 = vmatprep.subr.bf16.mxu0 0
        %3230 = vmatpush2.bf16.msra.mxu0 0
        %3231 = vmatprep.subr.bf16.mxu0 0
        %3232 = vmatpush2.bf16.msra.mxu0 0
        %3233 = vmatprep.subr.bf16.mxu0 0
        %3234 = vmatpush2.bf16.msra.mxu0 0
        %3235 = vmatprep.mubr.bf16.mxu0 0
        %3236 = vmatmul.mubr.bf16.gmra.mxu0 %v3198
        %v3237 = vpop.f32.mrf.mxu0
        %v3238 = vadd.f32 0.0, %v3237
        %v3239 = vpop.f32.mrf.mxu0
        %v3240 = vpop.f32.mrf.mxu0
        %v3241 = vpop.f32.mrf.mxu0
        %3242 = vdwg.mxu0
        %v3244 = vsel %vm1265, %v3145, 0
        %v3247 = vsel %vm1505, %v3149, 0
        %3249 = vmatprep.subr.bf16.mxu0 0
        %3250 = vmatpush1.bf16.msra.mxu0 0
        %3251 = vmatprep.subr.bf16.mxu0 0
        %3252 = vmatpush1.bf16.msra.mxu0 0
        %3253 = vmatprep.subr.bf16.mxu0 0
        %3254 = vmatpush1.bf16.msra.mxu0 0
        %3255 = vmatprep.subr.bf16.mxu0 0
        %3256 = vmatpush1.bf16.msra.mxu0 0
        %3257 = vmatprep.subr.bf16.mxu0 0
        %3258 = vmatpush1.bf16.msra.mxu0 0
        %3259 = vmatprep.subr.bf16.mxu0 0
        %3260 = vmatpush1.bf16.msra.mxu0 0
        %3261 = vmatprep.subr.bf16.mxu0 0
        %3262 = vmatpush1.bf16.msra.mxu0 0
        %3263 = vmatprep.subr.bf16.mxu0 0
        %3264 = vmatpush1.bf16.msra.mxu0 %v3247
        %3265 = vmatprep.subr.bf16.mxu0 0
        %3266 = vmatpush2.bf16.msra.mxu0 0
        %3267 = vmatprep.subr.bf16.mxu0 0
        %3268 = vmatpush2.bf16.msra.mxu0 0
        %3269 = vmatprep.subr.bf16.mxu0 0
        %3270 = vmatpush2.bf16.msra.mxu0 0
        %3271 = vmatprep.subr.bf16.mxu0 0
        %3272 = vmatpush2.bf16.msra.mxu0 0
        %3273 = vmatprep.subr.bf16.mxu0 0
        %3274 = vmatpush2.bf16.msra.mxu0 0
        %3275 = vmatprep.subr.bf16.mxu0 0
        %3276 = vmatpush2.bf16.msra.mxu0 0
        %3277 = vmatprep.subr.bf16.mxu0 0
        %3278 = vmatpush2.bf16.msra.mxu0 0
        %3279 = vmatprep.subr.bf16.mxu0 0
        %3280 = vmatpush2.bf16.msra.mxu0 0
        %3281 = vmatprep.mubr.bf16.mxu0 0
        %3282 = vmatmul.mubr.bf16.gmra.mxu0 %v3244
        %v3283 = vpop.f32.mrf.mxu0
        %v3284 = vadd.f32 0.0, %v3283
        %v3285 = vpop.f32.mrf.mxu0
        %v3286 = vpop.f32.mrf.mxu0
        %v3287 = vpop.f32.mrf.mxu0
        %3288 = vdwg.mxu0
        %v3290 = vsel %vm1265, %v3146, 0
        %v3293 = vsel %vm1505, %v3150, 0
        %3295 = vmatprep.subr.bf16.mxu0 0
        %3296 = vmatpush1.bf16.msra.mxu0 0
        %3297 = vmatprep.subr.bf16.mxu0 0
        %3298 = vmatpush1.bf16.msra.mxu0 0
        %3299 = vmatprep.subr.bf16.mxu0 0
        %3300 = vmatpush1.bf16.msra.mxu0 0
        %3301 = vmatprep.subr.bf16.mxu0 0
        %3302 = vmatpush1.bf16.msra.mxu0 0
        %3303 = vmatprep.subr.bf16.mxu0 0
        %3304 = vmatpush1.bf16.msra.mxu0 0
        %3305 = vmatprep.subr.bf16.mxu0 0
        %3306 = vmatpush1.bf16.msra.mxu0 0
        %3307 = vmatprep.subr.bf16.mxu0 0
        %3308 = vmatpush1.bf16.msra.mxu0 0
        %3309 = vmatprep.subr.bf16.mxu0 0
        %3310 = vmatpush1.bf16.msra.mxu0 %v3293
        %3311 = vmatprep.subr.bf16.mxu0 0
        %3312 = vmatpush2.bf16.msra.mxu0 0
        %3313 = vmatprep.subr.bf16.mxu0 0
        %3314 = vmatpush2.bf16.msra.mxu0 0
        %3315 = vmatprep.subr.bf16.mxu0 0
        %3316 = vmatpush2.bf16.msra.mxu0 0
        %3317 = vmatprep.subr.bf16.mxu0 0
        %3318 = vmatpush2.bf16.msra.mxu0 0
        %3319 = vmatprep.subr.bf16.mxu0 0
        %3320 = vmatpush2.bf16.msra.mxu0 0
        %3321 = vmatprep.subr.bf16.mxu0 0
        %3322 = vmatpush2.bf16.msra.mxu0 0
        %3323 = vmatprep.subr.bf16.mxu0 0
        %3324 = vmatpush2.bf16.msra.mxu0 0
        %3325 = vmatprep.subr.bf16.mxu0 0
        %3326 = vmatpush2.bf16.msra.mxu0 0
        %3327 = vmatprep.mubr.bf16.mxu0 0
        %3328 = vmatmul.mubr.bf16.gmra.mxu0 %v3290
        %v3329 = vpop.f32.mrf.mxu0
        %v3330 = vadd.f32 0.0, %v3329
        %v3331 = vpop.f32.mrf.mxu0
        %v3332 = vpop.f32.mrf.mxu0
        %v3333 = vpop.f32.mrf.mxu0
        %3334 = vdwg.mxu0
        %v3335 = vpack.c.bf16 %v3192, %v3192
        %v3336 = vpack.c.bf16 %v3238, %v3238
        %v3337 = vpack.c.bf16 %v3284, %v3284
        %v3338 = vpack.c.bf16 %v3330, %v3330
        %s3339 = scalar_lea.vmem %s6, 16
        %v3340 = vld [vmem:[%s3339] sm:$0xf]
        %v3341 = vld [vmem:[%s3339 + $0x4] sm:$0xf]
        %v3342 = vld [vmem:[%s3339 + $0x8] sm:$0xf]
        %v3343 = vld [vmem:[%s3339 + $0xc] sm:$0xf]
        %v3345 = vsel %vm1265, %v3335, 0
        %v3348 = vsel %vm1505, %v3340, 0
        %3350 = vmatprep.subr.bf16.mxu0 0
        %3351 = vmatpush1.bf16.msra.mxu0 0
        %3352 = vmatprep.subr.bf16.mxu0 0
        %3353 = vmatpush1.bf16.msra.mxu0 0
        %3354 = vmatprep.subr.bf16.mxu0 0
        %3355 = vmatpush1.bf16.msra.mxu0 0
        %3356 = vmatprep.subr.bf16.mxu0 0
        %3357 = vmatpush1.bf16.msra.mxu0 0
        %3358 = vmatprep.subr.bf16.mxu0 0
        %3359 = vmatpush1.bf16.msra.mxu0 0
        %3360 = vmatprep.subr.bf16.mxu0 0
        %3361 = vmatpush1.bf16.msra.mxu0 0
        %3362 = vmatprep.subr.bf16.mxu0 0
        %3363 = vmatpush1.bf16.msra.mxu0 0
        %3364 = vmatprep.subr.bf16.mxu0 0
        %3365 = vmatpush1.bf16.msra.mxu0 %v3348
        %3366 = vmatprep.subr.bf16.mxu0 0
        %3367 = vmatpush2.bf16.msra.mxu0 0
        %3368 = vmatprep.subr.bf16.mxu0 0
        %3369 = vmatpush2.bf16.msra.mxu0 0
        %3370 = vmatprep.subr.bf16.mxu0 0
        %3371 = vmatpush2.bf16.msra.mxu0 0
        %3372 = vmatprep.subr.bf16.mxu0 0
        %3373 = vmatpush2.bf16.msra.mxu0 0
        %3374 = vmatprep.subr.bf16.mxu0 0
        %3375 = vmatpush2.bf16.msra.mxu0 0
        %3376 = vmatprep.subr.bf16.mxu0 0
        %3377 = vmatpush2.bf16.msra.mxu0 0
        %3378 = vmatprep.subr.bf16.mxu0 0
        %3379 = vmatpush2.bf16.msra.mxu0 0
        %3380 = vmatprep.subr.bf16.mxu0 0
        %3381 = vmatpush2.bf16.msra.mxu0 0
        %3382 = vmatprep.mubr.bf16.mxu0 0
        %3383 = vmatmul.mubr.bf16.gmra.mxu0 %v3345
        %v3384 = vpop.f32.mrf.mxu0
        %v3385 = vadd.f32 0.0, %v3384
        %v3386 = vpop.f32.mrf.mxu0
        %v3387 = vpop.f32.mrf.mxu0
        %v3388 = vpop.f32.mrf.mxu0
        %3389 = vdwg.mxu0
        %v3391 = vsel %vm1265, %v3336, 0
        %v3394 = vsel %vm1505, %v3341, 0
        %3396 = vmatprep.subr.bf16.mxu0 0
        %3397 = vmatpush1.bf16.msra.mxu0 0
        %3398 = vmatprep.subr.bf16.mxu0 0
        %3399 = vmatpush1.bf16.msra.mxu0 0
        %3400 = vmatprep.subr.bf16.mxu0 0
        %3401 = vmatpush1.bf16.msra.mxu0 0
        %3402 = vmatprep.subr.bf16.mxu0 0
        %3403 = vmatpush1.bf16.msra.mxu0 0
        %3404 = vmatprep.subr.bf16.mxu0 0
        %3405 = vmatpush1.bf16.msra.mxu0 0
        %3406 = vmatprep.subr.bf16.mxu0 0
        %3407 = vmatpush1.bf16.msra.mxu0 0
        %3408 = vmatprep.subr.bf16.mxu0 0
        %3409 = vmatpush1.bf16.msra.mxu0 0
        %3410 = vmatprep.subr.bf16.mxu0 0
        %3411 = vmatpush1.bf16.msra.mxu0 %v3394
        %3412 = vmatprep.subr.bf16.mxu0 0
        %3413 = vmatpush2.bf16.msra.mxu0 0
        %3414 = vmatprep.subr.bf16.mxu0 0
        %3415 = vmatpush2.bf16.msra.mxu0 0
        %3416 = vmatprep.subr.bf16.mxu0 0
        %3417 = vmatpush2.bf16.msra.mxu0 0
        %3418 = vmatprep.subr.bf16.mxu0 0
        %3419 = vmatpush2.bf16.msra.mxu0 0
        %3420 = vmatprep.subr.bf16.mxu0 0
        %3421 = vmatpush2.bf16.msra.mxu0 0
        %3422 = vmatprep.subr.bf16.mxu0 0
        %3423 = vmatpush2.bf16.msra.mxu0 0
        %3424 = vmatprep.subr.bf16.mxu0 0
        %3425 = vmatpush2.bf16.msra.mxu0 0
        %3426 = vmatprep.subr.bf16.mxu0 0
        %3427 = vmatpush2.bf16.msra.mxu0 0
        %3428 = vmatprep.mubr.bf16.mxu0 0
        %3429 = vmatmul.mubr.bf16.gmra.mxu0 %v3391
        %v3430 = vpop.f32.mrf.mxu0
        %v3431 = vadd.f32 0.0, %v3430
        %v3432 = vpop.f32.mrf.mxu0
        %v3433 = vpop.f32.mrf.mxu0
        %v3434 = vpop.f32.mrf.mxu0
        %3435 = vdwg.mxu0
        %v3437 = vsel %vm1265, %v3337, 0
        %v3440 = vsel %vm1505, %v3342, 0
        %3442 = vmatprep.subr.bf16.mxu0 0
        %3443 = vmatpush1.bf16.msra.mxu0 0
        %3444 = vmatprep.subr.bf16.mxu0 0
        %3445 = vmatpush1.bf16.msra.mxu0 0
        %3446 = vmatprep.subr.bf16.mxu0 0
        %3447 = vmatpush1.bf16.msra.mxu0 0
        %3448 = vmatprep.subr.bf16.mxu0 0
        %3449 = vmatpush1.bf16.msra.mxu0 0
        %3450 = vmatprep.subr.bf16.mxu0 0
        %3451 = vmatpush1.bf16.msra.mxu0 0
        %3452 = vmatprep.subr.bf16.mxu0 0
        %3453 = vmatpush1.bf16.msra.mxu0 0
        %3454 = vmatprep.subr.bf16.mxu0 0
        %3455 = vmatpush1.bf16.msra.mxu0 0
        %3456 = vmatprep.subr.bf16.mxu0 0
        %3457 = vmatpush1.bf16.msra.mxu0 %v3440
        %3458 = vmatprep.subr.bf16.mxu0 0
        %3459 = vmatpush2.bf16.msra.mxu0 0
        %3460 = vmatprep.subr.bf16.mxu0 0
        %3461 = vmatpush2.bf16.msra.mxu0 0
        %3462 = vmatprep.subr.bf16.mxu0 0
        %3463 = vmatpush2.bf16.msra.mxu0 0
        %3464 = vmatprep.subr.bf16.mxu0 0
        %3465 = vmatpush2.bf16.msra.mxu0 0
        %3466 = vmatprep.subr.bf16.mxu0 0
        %3467 = vmatpush2.bf16.msra.mxu0 0
        %3468 = vmatprep.subr.bf16.mxu0 0
        %3469 = vmatpush2.bf16.msra.mxu0 0
        %3470 = vmatprep.subr.bf16.mxu0 0
        %3471 = vmatpush2.bf16.msra.mxu0 0
        %3472 = vmatprep.subr.bf16.mxu0 0
        %3473 = vmatpush2.bf16.msra.mxu0 0
        %3474 = vmatprep.mubr.bf16.mxu0 0
        %3475 = vmatmul.mubr.bf16.gmra.mxu0 %v3437
        %v3476 = vpop.f32.mrf.mxu0
        %v3477 = vadd.f32 0.0, %v3476
        %v3478 = vpop.f32.mrf.mxu0
        %v3479 = vpop.f32.mrf.mxu0
        %v3480 = vpop.f32.mrf.mxu0
        %3481 = vdwg.mxu0
        %v3483 = vsel %vm1265, %v3338, 0
        %v3486 = vsel %vm1505, %v3343, 0
        %3488 = vmatprep.subr.bf16.mxu0 0
        %3489 = vmatpush1.bf16.msra.mxu0 0
        %3490 = vmatprep.subr.bf16.mxu0 0
        %3491 = vmatpush1.bf16.msra.mxu0 0
        %3492 = vmatprep.subr.bf16.mxu0 0
        %3493 = vmatpush1.bf16.msra.mxu0 0
        %3494 = vmatprep.subr.bf16.mxu0 0
        %3495 = vmatpush1.bf16.msra.mxu0 0
        %3496 = vmatprep.subr.bf16.mxu0 0
        %3497 = vmatpush1.bf16.msra.mxu0 0
        %3498 = vmatprep.subr.bf16.mxu0 0
        %3499 = vmatpush1.bf16.msra.mxu0 0
        %3500 = vmatprep.subr.bf16.mxu0 0
        %3501 = vmatpush1.bf16.msra.mxu0 0
        %3502 = vmatprep.subr.bf16.mxu0 0
        %3503 = vmatpush1.bf16.msra.mxu0 %v3486
        %3504 = vmatprep.subr.bf16.mxu0 0
        %3505 = vmatpush2.bf16.msra.mxu0 0
        %3506 = vmatprep.subr.bf16.mxu0 0
        %3507 = vmatpush2.bf16.msra.mxu0 0
        %3508 = vmatprep.subr.bf16.mxu0 0
        %3509 = vmatpush2.bf16.msra.mxu0 0
        %3510 = vmatprep.subr.bf16.mxu0 0
        %3511 = vmatpush2.bf16.msra.mxu0 0
        %3512 = vmatprep.subr.bf16.mxu0 0
        %3513 = vmatpush2.bf16.msra.mxu0 0
        %3514 = vmatprep.subr.bf16.mxu0 0
        %3515 = vmatpush2.bf16.msra.mxu0 0
        %3516 = vmatprep.subr.bf16.mxu0 0
        %3517 = vmatpush2.bf16.msra.mxu0 0
        %3518 = vmatprep.subr.bf16.mxu0 0
        %3519 = vmatpush2.bf16.msra.mxu0 0
        %3520 = vmatprep.mubr.bf16.mxu0 0
        %3521 = vmatmul.mubr.bf16.gmra.mxu0 %v3483
        %v3522 = vpop.f32.mrf.mxu0
        %v3523 = vadd.f32 0.0, %v3522
        %v3524 = vpop.f32.mrf.mxu0
        %v3525 = vpop.f32.mrf.mxu0
        %v3526 = vpop.f32.mrf.mxu0
        %3527 = vdwg.mxu0
        %v3528 = vsel %vm468, %v3385, 0.0
        %v3529 = vsel %vm468, %v3431, 0.0
        %v3530 = vadd.f32 %v3528, %v3529
        %v3531 = vsel %vm468, %v3477, 0.0
        %v3532 = vadd.f32 %v3530, %v3531
        %v3533 = vsel %vm468, %v3523, 0.0
        %v3534 = vadd.f32 %v3532, %v3533
        %v3535 = vadd.f32 %v2113, %v3534
        %s3536 = scalar_lea.vmem %s7, 1
        %v3537 = vld [vmem:[%s3536] sm:$0x1]
        %v3539 = vlaneseq
        %v3540 = vshrl.u32 %v3539, 7
        %v3541 = vsub.s32 0, %v3540
        %v3542 = vrot.slane %v3537, %v3541
        %v3544 = vadd.f32 %v3535, %v3542
        %s3545 = scalar_lea.vmem %s8, 1
        %v3546 = vld [vmem:[%s3545] sm:$0x1]
        %s3547 = scalar_lea.vmem %s9, 1
        %v3548 = vld [vmem:[%s3547] sm:$0x1]
        %v3549 = vsel %vm468, %v3544, 0.0
        %3550 = vadd.xlane.f32.xlu0 %v3549
        %v3551 = vpop.xlane.xlu0 %3550
        %v3552 = vmul.f32 %v3551, %v472
        %v3553 = vsub.f32 %v3544, %v3552
        %v3554 = vmul.f32 %v3553, %v3553
        %v3555 = vsel %vm468, %v3554, 0.0
        %3556 = vadd.xlane.f32.xlu0 %v3555
        %v3557 = vpop.xlane.xlu0 %3556
        %v3558 = vmul.f32 %v3557, %v472
        %v3559 = vadd.f32 %v3558, 1e-05
        %v3560 = vrsqrt.pop %v3559
        %v3561 = vmul.f32 %v3553, %v3560
        %v3563 = vlaneseq
        %v3564 = vshrl.u32 %v3563, 7
        %v3565 = vsub.s32 0, %v3564
        %v3566 = vrot.slane %v3546, %v3565
        %v3568 = vmul.f32 %v3561, %v3566
        %v3570 = vlaneseq
        %v3571 = vshrl.u32 %v3570, 7
        %v3572 = vsub.s32 0, %v3571
        %v3573 = vrot.slane %v3548, %v3572
        %v3575 = vadd.f32 %v3568, %v3573
        %v3576 = vpack.c.bf16 %v3575, %v3575
        %s3577 = scalar_lea.vmem %s10, 16
        %v3578 = vld [vmem:[%s3577] sm:$0xf]
        %v3579 = vld [vmem:[%s3577 + $0x4] sm:$0xf]
        %v3580 = vld [vmem:[%s3577 + $0x8] sm:$0xf]
        %v3581 = vld [vmem:[%s3577 + $0xc] sm:$0xf]
        %s3582 = scalar_lea.vmem %s11, 1
        %v3583 = vld [vmem:[%s3582] sm:$0x1]
        %v3585 = vlaneseq
        %v3586 = vshrl.u32 %v3585, 7
        %v3587 = vsub.s32 0, %v3586
        %v3588 = vrot.slane %v3583, %v3587
        %v3594 = vunpack.c.l.b16 %v3578
        %v3595 = vunpack.c.l.b16 %v3579
        %v3596 = vunpack.c.l.b16 %v3580
        %v3597 = vunpack.c.l.b16 %v3581
        %v3598 = vpack.c.b16 %v3595, %v3594
        %v3599 = vpack.c.b16 %v3597, %v3596
        %v3603 = vsel %vm468, %v3576, 0
        %3605 = vmatprep.subr.bf16.mxu0 0
        %3606 = vmatpush1.bf16.msra.mxu0 0
        %3607 = vmatprep.subr.bf16.mxu0 0
        %3608 = vmatpush1.bf16.msra.mxu0 0
        %3609 = vmatprep.subr.bf16.mxu0 0
        %3610 = vmatpush1.bf16.msra.mxu0 0
        %3611 = vmatprep.subr.bf16.mxu0 0
        %3612 = vmatpush1.bf16.msra.mxu0 0
        %3613 = vmatprep.subr.bf16.mxu0 0
        %3614 = vmatpush1.bf16.msra.mxu0 0
        %3615 = vmatprep.subr.bf16.mxu0 0
        %3616 = vmatpush1.bf16.msra.mxu0 0
        %3617 = vmatprep.subr.bf16.mxu0 0
        %3618 = vmatpush1.bf16.msra.mxu0 %v3599
        %3619 = vmatprep.subr.bf16.mxu0 0
        %3620 = vmatpush1.bf16.msra.mxu0 %v3598
        %3621 = vmatprep.subr.bf16.mxu0 0
        %3622 = vmatpush2.bf16.msra.mxu0 0
        %3623 = vmatprep.subr.bf16.mxu0 0
        %3624 = vmatpush2.bf16.msra.mxu0 0
        %3625 = vmatprep.subr.bf16.mxu0 0
        %3626 = vmatpush2.bf16.msra.mxu0 0
        %3627 = vmatprep.subr.bf16.mxu0 0
        %3628 = vmatpush2.bf16.msra.mxu0 0
        %3629 = vmatprep.subr.bf16.mxu0 0
        %3630 = vmatpush2.bf16.msra.mxu0 0
        %3631 = vmatprep.subr.bf16.mxu0 0
        %3632 = vmatpush2.bf16.msra.mxu0 0
        %3633 = vmatprep.subr.bf16.mxu0 0
        %3634 = vmatpush2.bf16.msra.mxu0 0
        %3635 = vmatprep.subr.bf16.mxu0 0
        %3636 = vmatpush2.bf16.msra.mxu0 0
        %3637 = vmatprep.mubr.bf16.mxu0 0
        %3638 = vmatmul.mubr.bf16.gmra.mxu0 %v3603
        %v3639 = vpop.f32.mrf.mxu0
        %v3640 = vadd.f32 %v3588, %v3639
        %v3641 = vpop.f32.mrf.mxu0
        %v3642 = vpop.f32.mrf.mxu0
        %v3643 = vpop.f32.mrf.mxu0
        %3644 = vdwg.mxu0
        %v3645 = vmul.f32 %v3640, 0.5
        %v3646 = vmul.f32 %v3640, 0.044715
        %v3647 = vmul.f32 %v3646, %v3640
        %v3648 = vmul.f32 %v3647, %v3640
        %v3649 = vadd.f32 %v3640, %v3648
        %v3650 = vmul.f32 %v3649, 0.7978846
        %v3651 = vtanh.pop %v3650
        %v3652 = vadd.f32 %v3651, 1.0
        %v3653 = vmul.f32 %v3645, %v3652
        %v3654 = vpack.c.bf16 %v3653, %v3653
        %s3655 = scalar_lea.vmem %s12, 64
        %v3656 = vld [vmem:[%s3655] sm:$0xf]
        %v3657 = vld [vmem:[%s3655 + $0x4] sm:$0xf]
        %v3658 = vld [vmem:[%s3655 + $0x8] sm:$0xf]
        %v3659 = vld [vmem:[%s3655 + $0xc] sm:$0xf]
        %v3660 = vld [vmem:[%s3655 + $0x10] sm:$0xf]
        %v3661 = vld [vmem:[%s3655 + $0x14] sm:$0xf]
        %v3662 = vld [vmem:[%s3655 + $0x18] sm:$0xf]
        %v3663 = vld [vmem:[%s3655 + $0x1c] sm:$0xf]
        %v3664 = vld [vmem:[%s3655 + $0x20] sm:$0xf]
        %v3665 = vld [vmem:[%s3655 + $0x24] sm:$0xf]
        %v3666 = vld [vmem:[%s3655 + $0x28] sm:$0xf]
        %v3667 = vld [vmem:[%s3655 + $0x2c] sm:$0xf]
        %v3668 = vld [vmem:[%s3655 + $0x30] sm:$0xf]
        %v3669 = vld [vmem:[%s3655 + $0x34] sm:$0xf]
        %v3670 = vld [vmem:[%s3655 + $0x38] sm:$0xf]
        %v3671 = vld [vmem:[%s3655 + $0x3c] sm:$0xf]
        %v3688 = vunpack.c.l.b16 %v3656
        %v3689 = vunpack.c.l.b16 %v3657
        %v3690 = vunpack.c.l.b16 %v3658
        %v3691 = vunpack.c.l.b16 %v3659
        %v3692 = vunpack.c.l.b16 %v3660
        %v3693 = vunpack.c.l.b16 %v3661
        %v3694 = vunpack.c.l.b16 %v3662
        %v3695 = vunpack.c.l.b16 %v3663
        %v3696 = vunpack.c.l.b16 %v3664
        %v3697 = vunpack.c.l.b16 %v3665
        %v3698 = vunpack.c.l.b16 %v3666
        %v3699 = vunpack.c.l.b16 %v3667
        %v3700 = vunpack.c.l.b16 %v3668
        %v3701 = vunpack.c.l.b16 %v3669
        %v3702 = vunpack.c.l.b16 %v3670
        %v3703 = vunpack.c.l.b16 %v3671
        %v3704 = vpack.c.b16 %v3689, %v3688
        %v3705 = vpack.c.b16 %v3691, %v3690
        %v3706 = vpack.c.b16 %v3693, %v3692
        %v3707 = vpack.c.b16 %v3695, %v3694
        %v3708 = vpack.c.b16 %v3697, %v3696
        %v3709 = vpack.c.b16 %v3699, %v3698
        %v3710 = vpack.c.b16 %v3701, %v3700
        %v3711 = vpack.c.b16 %v3703, %v3702
        %3720 = vmatprep.subr.bf16.mxu0 0
        %3721 = vmatpush1.bf16.msra.mxu0 %v3711
        %3722 = vmatprep.subr.bf16.mxu0 0
        %3723 = vmatpush1.bf16.msra.mxu0 %v3710
        %3724 = vmatprep.subr.bf16.mxu0 0
        %3725 = vmatpush1.bf16.msra.mxu0 %v3709
        %3726 = vmatprep.subr.bf16.mxu0 0
        %3727 = vmatpush1.bf16.msra.mxu0 %v3708
        %3728 = vmatprep.subr.bf16.mxu0 0
        %3729 = vmatpush1.bf16.msra.mxu0 %v3707
        %3730 = vmatprep.subr.bf16.mxu0 0
        %3731 = vmatpush1.bf16.msra.mxu0 %v3706
        %3732 = vmatprep.subr.bf16.mxu0 0
        %3733 = vmatpush1.bf16.msra.mxu0 %v3705
        %3734 = vmatprep.subr.bf16.mxu0 0
        %3735 = vmatpush1.bf16.msra.mxu0 %v3704
        %3736 = vmatprep.subr.bf16.mxu0 0
        %3737 = vmatpush2.bf16.msra.mxu0 0
        %3738 = vmatprep.subr.bf16.mxu0 0
        %3739 = vmatpush2.bf16.msra.mxu0 0
        %3740 = vmatprep.subr.bf16.mxu0 0
        %3741 = vmatpush2.bf16.msra.mxu0 0
        %3742 = vmatprep.subr.bf16.mxu0 0
        %3743 = vmatpush2.bf16.msra.mxu0 0
        %3744 = vmatprep.subr.bf16.mxu0 0
        %3745 = vmatpush2.bf16.msra.mxu0 0
        %3746 = vmatprep.subr.bf16.mxu0 0
        %3747 = vmatpush2.bf16.msra.mxu0 0
        %3748 = vmatprep.subr.bf16.mxu0 0
        %3749 = vmatpush2.bf16.msra.mxu0 0
        %3750 = vmatprep.subr.bf16.mxu0 0
        %3751 = vmatpush2.bf16.msra.mxu0 0
        %3752 = vmatprep.mubr.bf16.mxu0 0
        %3753 = vmatmul.mubr.bf16.gmra.mxu0 %v3654
        %v3754 = vpop.f32.mrf.mxu0
        %v3755 = vadd.f32 0.0, %v3754
        %v3756 = vpop.f32.mrf.mxu0
        %v3757 = vpop.f32.mrf.mxu0
        %v3758 = vpop.f32.mrf.mxu0
        %3759 = vdwg.mxu0
        %v3760 = vadd.f32 %v3544, %v3755
        %s3761 = scalar_lea.vmem %s13, 1
        %v3762 = vld [vmem:[%s3761] sm:$0x1]
        %v3764 = vlaneseq
        %v3765 = vshrl.u32 %v3764, 7
        %v3766 = vsub.s32 0, %v3765
        %v3767 = vrot.slane %v3762, %v3766
        %v3769 = vadd.f32 %v3760, %v3767
        %3770 = vst.msk [vmem:[%s458] sm:$0xff] %vm468, %v3769
        %s3771 = sand.u32 %s335, 1
        %s3772 = scalar_lea.sflag [#allocation3], %s3771
        %s3773 = sand.u32 %s335, 1
        %s3774 = smul.addr %s3773, 8
        %s3775 = scalar_lea.vmem [#allocation2], %s3774
        // Predicated region
        $region77: #{tpu_custom_call.1} parent=75 // pred_check
          %p3776 = pneg %p345
        $region78: #{tpu_custom_call.1} parent=75 // pred_check_branch
          %3778 = sbr.rel (%p3776) target = $region80
        $region79: #{tpu_custom_call.1} parent=75 // pred_region
          %s3780 = ssub.s32 128, 128
          %3781 = vsyncadd %s3772, %s3780
          %s3782 = smul.addr %s28, 128
          %s3783 = scalar_lea.hbm %s14, %s3782
          %s3785 = sshll.u32 %s3775, 4
          %s3786 = int_to_ptr.vmem [resolvable:$true] %s3785
          %3788 = dma.vmem_to_hbm [thread:$0]  %s3786, 128, %s3783, %s3772
        $region80: #{tpu_custom_call.1} parent=75 // pred_fallthru
          _
      $region76: #{tpu_custom_call.1} parent=5 // pred_fallthru
        _
      %p3789 = scmp.le.s32.totalorder 2, %s23
      // Predicated region
      $region81: #{tpu_custom_call.1} parent=5 // pred_check
        %p3790 = pneg %p3789
      $region82: #{tpu_custom_call.1} parent=5 // pred_check_branch
        %3792 = sbr.rel (%p3790) target = $region84
      $region83: #{tpu_custom_call.1} parent=5 // pred_region
        %s3793 = ssub.s32 %s23, 2
        // Predicated region
        $region85: #{tpu_custom_call.1} parent=83 // pred_check
          %p3794 = pneg %p351
        $region86: #{tpu_custom_call.1} parent=83 // pred_check_branch
          %3796 = sbr.rel (%p3794) target = $region88
        $region87: #{tpu_custom_call.1} parent=83 // pred_region
          %s3797 = sand.u32 %s336, 1
          %s3798 = scalar_lea.sflag [#allocation3], %s3797
          %s3799 = sand.u32 %s336, 1
          %s3800 = smul.addr %s3799, 8
          %s3801 = scalar_lea.vmem [#allocation2], %s3800
          %3802 = dma.done %s3798, 128
        $region88: #{tpu_custom_call.1} parent=83 // pred_fallthru
          _
      $region84: #{tpu_custom_call.1} parent=5 // pred_fallthru
        _
    $region6: #{tpu_custom_call.1} parent=1 // loop_footer
      %s27 = sadd.s32 1, %s23
    $region7: #{tpu_custom_call.1} parent=1 // loop_footer_branch
      %22 = sbr.rel target = $region3
    $region8: #{tpu_custom_call.1} parent=1 // loop_exit
      _
    %3803 = vsyncpa [#allocation3], 1
    %s3804 = scalar_lea.sflag [#allocation3], 1
    %3805 = vsyncpa %s3804, 1

</llo_original>
